<compile_context>
chip_gen: v5e
topology: v5e:2x2
jax: 0.10.0
libtpu: 0.0.40
codegen_flags: <defaults>
</compile_context>

<pallas_src>
import functools

import jax
import jax.numpy as jnp
from jax.experimental import pallas as pl
from jax.experimental.pallas import tpu as pltpu

H_DIM = 400    # logical hidden dim (PyTorch h_dim)
H_PAD = 512    # lane-dense padded hidden dim (multiple of 128)
IN_DIM = 2
OUT_DIM = 2
OUT_PAD = 128  # lane-dense padded output dim (unmasked stores, clean MXU N)


def _round_up(x, m):
    return ((x + m - 1) // m) * m


def _cdiv(a, b):
    return -(-a // b)


def _tpu_generation():
    try:
        kind = jax.devices()[0].device_kind.lower()
    except Exception:
        return "unknown"
    if "v5 lite" in kind or "v5e" in kind or "v5lite" in kind:
        return "v5e"
    if "v6" in kind:
        return "v6e"
    if "v7" in kind or "tpu7" in kind:
        return "v7x"
    return "unknown"


def mlp_kernel(z_ref, w1_ref, w2_ref, w3_ref, w4_ref, b_ref, o_ref, *,
               bf16_epilogue):
    z = z_ref[...]      # [bt, 2]      f32
    w1 = w1_ref[...]    # [2, H_PAD]   f32
    b = b_ref[...]      # [4, H_PAD]   f32

    # Layer 1: Linear(2 -> H) + ReLU.  K=2 contraction done as two VPU
    # broadcast multiply-adds (a 2-deep MXU push would be badly utilized).
    h = z[:, 0:1] * w1[0:1, :] + z[:, 1:2] * w1[1:2, :] + b[0:1, :]
    h = jnp.maximum(h, 0.0).astype(jnp.bfloat16)

    # Layer 2: Linear(H -> H) + ReLU (bf16 MXU inputs, f32 accumulation).
    acc = jnp.dot(h, w2_ref[...], preferred_element_type=jnp.float32)
    if bf16_epilogue:   # v6e / v7x: bf16-capable VALUs -> bf16 bias/ReLU
        h = jnp.maximum(acc.astype(jnp.bfloat16)
                        + b[1:2, :].astype(jnp.bfloat16), 0.0)
    else:               # v5e: f32-only VPU
        h = jnp.maximum(acc + b[1:2, :], 0.0).astype(jnp.bfloat16)

    # Layer 3: Linear(H -> H) + ReLU.
    acc = jnp.dot(h, w3_ref[...], preferred_element_type=jnp.float32)
    if bf16_epilogue:
        h = jnp.maximum(acc.astype(jnp.bfloat16)
                        + b[2:3, :].astype(jnp.bfloat16), 0.0)
    else:
        h = jnp.maximum(acc + b[2:3, :], 0.0).astype(jnp.bfloat16)

    # Layer 4: Linear(H -> OUT_PAD); only the first OUT_DIM columns are real.
    out = jnp.dot(h, w4_ref[...], preferred_element_type=jnp.float32)
    o_ref[...] = out + b[3:4, 0:OUT_PAD]


def generator_forward(z, params, b_tile=None):
    w1, w2, w3, w4, b_packed = params
    B = z.shape[0]
    gen = _tpu_generation()
    bf16_epilogue = gen in ("v6e", "v7x")

    if b_tile is None:
        b_tile = {"v6e": 4096, "v7x": 2048, "v5e": 2048}.get(gen, 1024)

    bt = min(b_tile, _round_up(B, 8))
    if gen == "v7x" and B >= 16:
        # Guarantee >= 2 grid steps so the "parallel" batch axis really
        # splits across both TensorCores.
        bt = min(bt, _round_up(_cdiv(B, 2), 8))

    n_tiles = _cdiv(B, bt)
    Bp = n_tiles * bt
    if Bp != B:
        z = jnp.pad(z, ((0, Bp - B), (0, 0)))

    vmem_limit = {"v6e": 100 << 20, "v7x": 48 << 20, "v5e": 64 << 20}.get(gen)

    flops = 2 * Bp * (IN_DIM * H_PAD + 2 * H_PAD * H_PAD + H_PAD * OUT_PAD)
    bytes_accessed = int(
        Bp * IN_DIM * 4 + Bp * OUT_PAD * 4
        + w1.size * 4 + w2.size * 2 + w3.size * 2 + w4.size * 2
        + b_packed.size * 4)
    cost = pl.CostEstimate(flops=flops, transcendentals=0,
                           bytes_accessed=bytes_accessed)

    kernel = functools.partial(mlp_kernel, bf16_epilogue=bf16_epilogue)
    resident = lambda i: (0, 0)   # weights/biases stay resident across tiles

    def run(single_buffer_weights):
        if single_buffer_weights:
            # Constant index_map -> the 2nd pipeline buffer is never used;
            # request single-buffering to free ~1.1 MiB of dead VMEM.
            rspec = lambda shape: pl.BlockSpec(shape, resident,
                                               pipeline_mode=pl.Buffered(1))
        else:
            rspec = lambda shape: pl.BlockSpec(shape, resident)
        out = pl.pallas_call(
            kernel,
            out_shape=jax.ShapeDtypeStruct((Bp, OUT_PAD), jnp.float32),
            grid_spec=pltpu.PrefetchScalarGridSpec(
                num_scalar_prefetch=0,
                grid=(n_tiles,),
                in_specs=[
                    pl.BlockSpec((bt, IN_DIM), lambda i: (i, 0)),   # z tile
                    rspec((IN_DIM, H_PAD)),                         # w1 f32
                    rspec((H_PAD, H_PAD)),                          # w2 bf16
                    rspec((H_PAD, H_PAD)),                          # w3 bf16
                    rspec((H_PAD, OUT_PAD)),                        # w4 bf16
                    rspec((4, H_PAD)),                              # biases f32
                ],
                out_specs=pl.BlockSpec((bt, OUT_PAD), lambda i: (i, 0)),
            ),
            compiler_params=pltpu.CompilerParams(
                dimension_semantics=("parallel",),
                vmem_limit_bytes=vmem_limit),
            cost_estimate=cost,
        )(z, w1, w2, w3, w4, b_packed)
        return jax.block_until_ready(out)

    try:
        out = run(True)
    except Exception:
        # pipeline_mode=pl.Buffered(1) not accepted by this build -> default
        # double-buffered resident specs (slightly more VMEM, same math).
        out = run(False)

    return out[:B, :OUT_DIM]


def init_linear(key, fan_in, fan_out):
    # Mimics PyTorch nn.Linear default init: U(-1/sqrt(fan_in), +1/sqrt(fan_in)).
    kw, kb = jax.random.split(key)
    bound = 1.0 / jnp.sqrt(float(fan_in))
    w = jax.random.uniform(kw, (fan_in, fan_out), jnp.float32, -bound, bound)
    b = jax.random.uniform(kb, (fan_out,), jnp.float32, -bound, bound)
    return w, b


def make_params(key):
    k1, k2, k3, k4 = jax.random.split(key, 4)
    w1, b1 = init_linear(k1, IN_DIM, H_DIM)
    w2, b2 = init_linear(k2, H_DIM, H_DIM)
    w3, b3 = init_linear(k3, H_DIM, H_DIM)
    w4, b4 = init_linear(k4, H_DIM, OUT_DIM)

    pad = H_PAD - H_DIM
    # Zero-pad hidden dim to 512 and output dim to 128 (exact: zero weights /
    # biases, ReLU(0)=0, padded output columns are sliced away).
    w1p = jnp.pad(w1, ((0, 0), (0, pad)))                                  # [2,512] f32
    w2p = jnp.pad(w2, ((0, pad), (0, pad))).astype(jnp.bfloat16)           # [512,512]
    w3p = jnp.pad(w3, ((0, pad), (0, pad))).astype(jnp.bfloat16)           # [512,512]
    w4p = jnp.pad(w4, ((0, pad), (0, OUT_PAD - OUT_DIM))).astype(jnp.bfloat16)  # [512,128]
    b_packed = jnp.stack([
        jnp.pad(b1, (0, pad)),
        jnp.pad(b2, (0, pad)),
        jnp.pad(b3, (0, pad)),
        jnp.pad(b4, (0, H_PAD - OUT_DIM)),
    ]).astype(jnp.float32)                                                 # [4,512]
    return w1p, w2p, w3p, w4p, b_packed


def reference_forward(z, params, bf16_epilogue):
    # Pure-JAX reference mirroring the kernel's precision recipe exactly,
    # so the comparison isolates the Pallas lowering.
    # TODO(synk): results match the bf16-weight recipe, not a pure-f32
    # PyTorch checkpoint bit-for-bit; keep weights f32 if that matters.
    w1, w2, w3, w4, b = params
    h = z[:, 0:1] * w1[0:1, :] + z[:, 1:2] * w1[1:2, :] + b[0]
    h = jnp.maximum(h, 0.0).astype(jnp.bfloat16)

    acc = jnp.dot(h, w2, preferred_element_type=jnp.float32)
    if bf16_epilogue:
        h = jnp.maximum(acc.astype(jnp.bfloat16) + b[1].astype(jnp.bfloat16), 0.0)
    else:
        h = jnp.maximum(acc + b[1], 0.0).astype(jnp.bfloat16)

    acc = jnp.dot(h, w3, preferred_element_type=jnp.float32)
    if bf16_epilogue:
        h = jnp.maximum(acc.astype(jnp.bfloat16) + b[2].astype(jnp.bfloat16), 0.0)
    else:
        h = jnp.maximum(acc + b[2], 0.0).astype(jnp.bfloat16)

    out = jnp.dot(h, w4, preferred_element_type=jnp.float32) + b[3, :OUT_PAD]
    return out[:, :OUT_DIM]


if __name__ == "__main__":
    key = jax.random.PRNGKey(0)
    kp, kz = jax.random.split(key)
    params = make_params(kp)

    B = 8
    z = jax.random.normal(kz, (B, IN_DIM), dtype=jnp.float32)

    out = generator_forward(z, params)
    jax.block_until_ready(out)

    ref = reference_forward(z, params, _tpu_generation() in ("v6e", "v7x"))
    assert out.shape == (B, OUT_DIM)
    assert jnp.allclose(out, ref, atol=1e-2, rtol=1e-2), (
        "mismatch vs matched-precision reference")

    print("KERNEL_OK")
</pallas_src>

<mosaic_0001>
module attributes {stable_mosaic.version = 11 : i64} {
  func.func @mlp_kernel(%arg0: i32, %arg1: memref<8x2xf32, #tpu.memory_space<vmem>>, %arg2: memref<2x512xf32, #tpu.memory_space<vmem>>, %arg3: memref<512x512xbf16, #tpu.memory_space<vmem>>, %arg4: memref<512x512xbf16, #tpu.memory_space<vmem>>, %arg5: memref<512x128xbf16, #tpu.memory_space<vmem>>, %arg6: memref<4x512xf32, #tpu.memory_space<vmem>>, %arg7: memref<8x128xf32, #tpu.memory_space<vmem>>) attributes {dimension_semantics = [#tpu.dimension_semantics<parallel>], iteration_bounds = array<i64: 1>, scalar_prefetch = 0 : i64, scratch_operands = 0 : i64, tpu.core_type = #tpu.core_type<tc>, window_params = [{transform_indices = @transform_0, window_bounds = array<i64: 8, 2>}, {pipeline_mode = #tpu.pipeline_mode<synchronous>, transform_indices = @transform_1, window_bounds = array<i64: 2, 512>}, {pipeline_mode = #tpu.pipeline_mode<synchronous>, transform_indices = @transform_2, window_bounds = array<i64: 512, 512>}, {pipeline_mode = #tpu.pipeline_mode<synchronous>, transform_indices = @transform_3, window_bounds = array<i64: 512, 512>}, {pipeline_mode = #tpu.pipeline_mode<synchronous>, transform_indices = @transform_4, window_bounds = array<i64: 512, 128>}, {pipeline_mode = #tpu.pipeline_mode<synchronous>, transform_indices = @transform_5, window_bounds = array<i64: 4, 512>}, {transform_indices = @transform_6, window_bounds = array<i64: 8, 128>}]} {
    %c0 = arith.constant 0 : index
    %c0_0 = arith.constant 0 : index
    %0 = vector.load %arg1[%c0, %c0_0] : memref<8x2xf32, #tpu.memory_space<vmem>>, vector<8x2xf32>
    %c0_1 = arith.constant 0 : index
    %c0_2 = arith.constant 0 : index
    %1 = vector.load %arg2[%c0_1, %c0_2] : memref<2x512xf32, #tpu.memory_space<vmem>>, vector<2x512xf32>
    %c0_3 = arith.constant 0 : index
    %c0_4 = arith.constant 0 : index
    %2 = vector.load %arg6[%c0_3, %c0_4] : memref<4x512xf32, #tpu.memory_space<vmem>>, vector<4x512xf32>
    %3 = vector.extract_strided_slice %0 {offsets = [0, 0], sizes = [8, 1], strides = [1, 1]} : vector<8x2xf32> to vector<8x1xf32>
    %4 = vector.extract_strided_slice %1 {offsets = [0, 0], sizes = [1, 512], strides = [1, 1]} : vector<2x512xf32> to vector<1x512xf32>
    %5 = vector.broadcast %3 : vector<8x1xf32> to vector<8x512xf32>
    %6 = vector.broadcast %4 : vector<1x512xf32> to vector<8x512xf32>
    %7 = arith.mulf %5, %6 : vector<8x512xf32>
    %8 = vector.extract_strided_slice %0 {offsets = [0, 1], sizes = [8, 1], strides = [1, 1]} : vector<8x2xf32> to vector<8x1xf32>
    %9 = vector.extract_strided_slice %1 {offsets = [1, 0], sizes = [1, 512], strides = [1, 1]} : vector<2x512xf32> to vector<1x512xf32>
    %10 = vector.broadcast %8 : vector<8x1xf32> to vector<8x512xf32>
    %11 = vector.broadcast %9 : vector<1x512xf32> to vector<8x512xf32>
    %12 = arith.mulf %10, %11 : vector<8x512xf32>
    %13 = arith.addf %7, %12 : vector<8x512xf32>
    %14 = vector.extract_strided_slice %2 {offsets = [0, 0], sizes = [1, 512], strides = [1, 1]} : vector<4x512xf32> to vector<1x512xf32>
    %15 = vector.broadcast %14 : vector<1x512xf32> to vector<8x512xf32>
    %16 = arith.addf %13, %15 : vector<8x512xf32>
    %cst = arith.constant 0.000000e+00 : f32
    %17 = vector.broadcast %cst : f32 to vector<8x512xf32>
    %18 = arith.maximumf %16, %17 : vector<8x512xf32>
    %19 = arith.truncf %18 : vector<8x512xf32> to vector<8x512xbf16>
    %c0_5 = arith.constant 0 : index
    %c0_6 = arith.constant 0 : index
    %20 = vector.load %arg3[%c0_5, %c0_6] : memref<512x512xbf16, #tpu.memory_space<vmem>>, vector<512x512xbf16>
    %cst_7 = arith.constant dense<0.000000e+00> : vector<8x512xf32>
    %21 = tpu.matmul %19, %20, %cst_7 {dimension_numbers = #tpu.dot_dimension_numbers<[1], [0], [0], [1], [0, 0, 1, 1], [], []>} : vector<8x512xbf16>, vector<512x512xbf16>, vector<8x512xf32> -> vector<8x512xf32>
    %22 = vector.extract_strided_slice %2 {offsets = [1, 0], sizes = [1, 512], strides = [1, 1]} : vector<4x512xf32> to vector<1x512xf32>
    %23 = vector.broadcast %22 : vector<1x512xf32> to vector<8x512xf32>
    %24 = arith.addf %21, %23 : vector<8x512xf32>
    %cst_8 = arith.constant 0.000000e+00 : f32
    %25 = vector.broadcast %cst_8 : f32 to vector<8x512xf32>
    %26 = arith.maximumf %24, %25 : vector<8x512xf32>
    %27 = arith.truncf %26 : vector<8x512xf32> to vector<8x512xbf16>
    %c0_9 = arith.constant 0 : index
    %c0_10 = arith.constant 0 : index
    %28 = vector.load %arg4[%c0_9, %c0_10] : memref<512x512xbf16, #tpu.memory_space<vmem>>, vector<512x512xbf16>
    %cst_11 = arith.constant dense<0.000000e+00> : vector<8x512xf32>
    %29 = tpu.matmul %27, %28, %cst_11 {dimension_numbers = #tpu.dot_dimension_numbers<[1], [0], [0], [1], [0, 0, 1, 1], [], []>} : vector<8x512xbf16>, vector<512x512xbf16>, vector<8x512xf32> -> vector<8x512xf32>
    %30 = vector.extract_strided_slice %2 {offsets = [2, 0], sizes = [1, 512], strides = [1, 1]} : vector<4x512xf32> to vector<1x512xf32>
    %31 = vector.broadcast %30 : vector<1x512xf32> to vector<8x512xf32>
    %32 = arith.addf %29, %31 : vector<8x512xf32>
    %cst_12 = arith.constant 0.000000e+00 : f32
    %33 = vector.broadcast %cst_12 : f32 to vector<8x512xf32>
    %34 = arith.maximumf %32, %33 : vector<8x512xf32>
    %35 = arith.truncf %34 : vector<8x512xf32> to vector<8x512xbf16>
    %c0_13 = arith.constant 0 : index
    %c0_14 = arith.constant 0 : index
    %36 = vector.load %arg5[%c0_13, %c0_14] : memref<512x128xbf16, #tpu.memory_space<vmem>>, vector<512x128xbf16>
    %cst_15 = arith.constant dense<0.000000e+00> : vector<8x128xf32>
    %37 = tpu.matmul %35, %36, %cst_15 {dimension_numbers = #tpu.dot_dimension_numbers<[1], [0], [0], [1], [0, 0, 1, 1], [], []>} : vector<8x512xbf16>, vector<512x128xbf16>, vector<8x128xf32> -> vector<8x128xf32>
    %38 = vector.extract_strided_slice %2 {offsets = [3, 0], sizes = [1, 128], strides = [1, 1]} : vector<4x512xf32> to vector<1x128xf32>
    %39 = vector.broadcast %38 : vector<1x128xf32> to vector<8x128xf32>
    %40 = arith.addf %37, %39 : vector<8x128xf32>
    %c0_16 = arith.constant 0 : index
    %c0_17 = arith.constant 0 : index
    %41 = vector.load %arg7[%c0_16, %c0_17] : memref<8x128xf32, #tpu.memory_space<vmem>>, vector<8x128xf32>
    tpu.vector_store %arg7[%c0_16, %c0_17], %40 {strides = array<i32>} : memref<8x128xf32, #tpu.memory_space<vmem>>, vector<8x128xf32>,
    return
  }
  func.func @transform_0(%arg0: i32) -> (i32, i32) {
    %c0_i32 = arith.constant 0 : i32
    %c0_i32_0 = arith.constant 0 : i32
    return %arg0, %c0_i32 : i32, i32
  }
  func.func @transform_1(%arg0: i32) -> (i32, i32) {
    %c0_i32 = arith.constant 0 : i32
    %c0_i32_0 = arith.constant 0 : i32
    %c0_i32_1 = arith.constant 0 : i32
    return %c0_i32, %c0_i32_0 : i32, i32
  }
  func.func @transform_2(%arg0: i32) -> (i32, i32) {
    %c0_i32 = arith.constant 0 : i32
    %c0_i32_0 = arith.constant 0 : i32
    %c0_i32_1 = arith.constant 0 : i32
    return %c0_i32, %c0_i32_0 : i32, i32
  }
  func.func @transform_3(%arg0: i32) -> (i32, i32) {
    %c0_i32 = arith.constant 0 : i32
    %c0_i32_0 = arith.constant 0 : i32
    %c0_i32_1 = arith.constant 0 : i32
    return %c0_i32, %c0_i32_0 : i32, i32
  }
  func.func @transform_4(%arg0: i32) -> (i32, i32) {
    %c0_i32 = arith.constant 0 : i32
    %c0_i32_0 = arith.constant 0 : i32
    %c0_i32_1 = arith.constant 0 : i32
    return %c0_i32, %c0_i32_0 : i32, i32
  }
  func.func @transform_5(%arg0: i32) -> (i32, i32) {
    %c0_i32 = arith.constant 0 : i32
    %c0_i32_0 = arith.constant 0 : i32
    %c0_i32_1 = arith.constant 0 : i32
    return %c0_i32, %c0_i32_0 : i32, i32
  }
  func.func @transform_6(%arg0: i32) -> (i32, i32) {
    %c0_i32 = arith.constant 0 : i32
    %c0_i32_0 = arith.constant 0 : i32
    return %arg0, %c0_i32 : i32, i32
  }
}

module attributes {stable_mosaic.version = 11 : i64} {
  func.func @mlp_kernel(%arg0: i32, %arg1: memref<8x2xf32, #tpu.memory_space<vmem>>, %arg2: memref<2x512xf32, #tpu.memory_space<vmem>>, %arg3: memref<512x512xbf16, #tpu.memory_space<vmem>>, %arg4: memref<512x512xbf16, #tpu.memory_space<vmem>>, %arg5: memref<512x128xbf16, #tpu.memory_space<vmem>>, %arg6: memref<4x512xf32, #tpu.memory_space<vmem>>, %arg7: memref<8x128xf32, #tpu.memory_space<vmem>>) attributes {dimension_semantics = [#tpu.dimension_semantics<parallel>], iteration_bounds = array<i64: 1>, scalar_prefetch = 0 : i64, scratch_operands = 0 : i64, tpu.core_type = #tpu.core_type<tc>, window_params = [{transform_indices = @transform_0, window_bounds = array<i64: 8, 2>}, {pipeline_mode = #tpu.pipeline_mode<synchronous>, transform_indices = @transform_1, window_bounds = array<i64: 2, 512>}, {pipeline_mode = #tpu.pipeline_mode<synchronous>, transform_indices = @transform_2, window_bounds = array<i64: 512, 512>}, {pipeline_mode = #tpu.pipeline_mode<synchronous>, transform_indices = @transform_3, window_bounds = array<i64: 512, 512>}, {pipeline_mode = #tpu.pipeline_mode<synchronous>, transform_indices = @transform_4, window_bounds = array<i64: 512, 128>}, {pipeline_mode = #tpu.pipeline_mode<synchronous>, transform_indices = @transform_5, window_bounds = array<i64: 4, 512>}, {transform_indices = @transform_6, window_bounds = array<i64: 8, 128>}]} {
    %c0 = arith.constant 0 : index
    %c0_0 = arith.constant 0 : index
    %0 = vector.load %arg1[%c0, %c0_0] : memref<8x2xf32, #tpu.memory_space<vmem>>, vector<8x2xf32>
    %c0_1 = arith.constant 0 : index
    %c0_2 = arith.constant 0 : index
    %1 = vector.load %arg2[%c0_1, %c0_2] : memref<2x512xf32, #tpu.memory_space<vmem>>, vector<2x512xf32>
    %c0_3 = arith.constant 0 : index
    %c0_4 = arith.constant 0 : index
    %2 = vector.load %arg6[%c0_3, %c0_4] : memref<4x512xf32, #tpu.memory_space<vmem>>, vector<4x512xf32>
    %3 = vector.extract_strided_slice %0 {offsets = [0, 0], sizes = [8, 1], strides = [1, 1]} : vector<8x2xf32> to vector<8x1xf32>
    %4 = vector.extract_strided_slice %1 {offsets = [0, 0], sizes = [1, 512], strides = [1, 1]} : vector<2x512xf32> to vector<1x512xf32>
    %5 = vector.broadcast %3 : vector<8x1xf32> to vector<8x512xf32>
    %6 = vector.broadcast %4 : vector<1x512xf32> to vector<8x512xf32>
    %7 = arith.mulf %5, %6 : vector<8x512xf32>
    %8 = vector.extract_strided_slice %0 {offsets = [0, 1], sizes = [8, 1], strides = [1, 1]} : vector<8x2xf32> to vector<8x1xf32>
    %9 = vector.extract_strided_slice %1 {offsets = [1, 0], sizes = [1, 512], strides = [1, 1]} : vector<2x512xf32> to vector<1x512xf32>
    %10 = vector.broadcast %8 : vector<8x1xf32> to vector<8x512xf32>
    %11 = vector.broadcast %9 : vector<1x512xf32> to vector<8x512xf32>
    %12 = arith.mulf %10, %11 : vector<8x512xf32>
    %13 = arith.addf %7, %12 : vector<8x512xf32>
    %14 = vector.extract_strided_slice %2 {offsets = [0, 0], sizes = [1, 512], strides = [1, 1]} : vector<4x512xf32> to vector<1x512xf32>
    %15 = vector.broadcast %14 : vector<1x512xf32> to vector<8x512xf32>
    %16 = arith.addf %13, %15 : vector<8x512xf32>
    %cst = arith.constant 0.000000e+00 : f32
    %17 = vector.broadcast %cst : f32 to vector<8x512xf32>
    %18 = arith.maximumf %16, %17 : vector<8x512xf32>
    %19 = arith.truncf %18 : vector<8x512xf32> to vector<8x512xbf16>
    %c0_5 = arith.constant 0 : index
    %c0_6 = arith.constant 0 : index
    %20 = vector.load %arg3[%c0_5, %c0_6] : memref<512x512xbf16, #tpu.memory_space<vmem>>, vector<512x512xbf16>
    %cst_7 = arith.constant dense<0.000000e+00> : vector<8x512xf32>
    %21 = tpu.matmul %19, %20, %cst_7 {dimension_numbers = #tpu.dot_dimension_numbers<[1], [0], [0], [1], [0, 0, 1, 1], [], []>} : vector<8x512xbf16>, vector<512x512xbf16>, vector<8x512xf32> -> vector<8x512xf32>
    %22 = vector.extract_strided_slice %2 {offsets = [1, 0], sizes = [1, 512], strides = [1, 1]} : vector<4x512xf32> to vector<1x512xf32>
    %23 = vector.broadcast %22 : vector<1x512xf32> to vector<8x512xf32>
    %24 = arith.addf %21, %23 : vector<8x512xf32>
    %cst_8 = arith.constant 0.000000e+00 : f32
    %25 = vector.broadcast %cst_8 : f32 to vector<8x512xf32>
    %26 = arith.maximumf %24, %25 : vector<8x512xf32>
    %27 = arith.truncf %26 : vector<8x512xf32> to vector<8x512xbf16>
    %c0_9 = arith.constant 0 : index
    %c0_10 = arith.constant 0 : index
    %28 = vector.load %arg4[%c0_9, %c0_10] : memref<512x512xbf16, #tpu.memory_space<vmem>>, vector<512x512xbf16>
    %cst_11 = arith.constant dense<0.000000e+00> : vector<8x512xf32>
    %29 = tpu.matmul %27, %28, %cst_11 {dimension_numbers = #tpu.dot_dimension_numbers<[1], [0], [0], [1], [0, 0, 1, 1], [], []>} : vector<8x512xbf16>, vector<512x512xbf16>, vector<8x512xf32> -> vector<8x512xf32>
    %30 = vector.extract_strided_slice %2 {offsets = [2, 0], sizes = [1, 512], strides = [1, 1]} : vector<4x512xf32> to vector<1x512xf32>
    %31 = vector.broadcast %30 : vector<1x512xf32> to vector<8x512xf32>
    %32 = arith.addf %29, %31 : vector<8x512xf32>
    %cst_12 = arith.constant 0.000000e+00 : f32
    %33 = vector.broadcast %cst_12 : f32 to vector<8x512xf32>
    %34 = arith.maximumf %32, %33 : vector<8x512xf32>
    %35 = arith.truncf %34 : vector<8x512xf32> to vector<8x512xbf16>
    %c0_13 = arith.constant 0 : index
    %c0_14 = arith.constant 0 : index
    %36 = vector.load %arg5[%c0_13, %c0_14] : memref<512x128xbf16, #tpu.memory_space<vmem>>, vector<512x128xbf16>
    %cst_15 = arith.constant dense<0.000000e+00> : vector<8x128xf32>
    %37 = tpu.matmul %35, %36, %cst_15 {dimension_numbers = #tpu.dot_dimension_numbers<[1], [0], [0], [1], [0, 0, 1, 1], [], []>} : vector<8x512xbf16>, vector<512x128xbf16>, vector<8x128xf32> -> vector<8x128xf32>
    %38 = vector.extract_strided_slice %2 {offsets = [3, 0], sizes = [1, 128], strides = [1, 1]} : vector<4x512xf32> to vector<1x128xf32>
    %39 = vector.broadcast %38 : vector<1x128xf32> to vector<8x128xf32>
    %40 = arith.addf %37, %39 : vector<8x128xf32>
    %c0_16 = arith.constant 0 : index
    %c0_17 = arith.constant 0 : index
    %41 = vector.load %arg7[%c0_16, %c0_17] : memref<8x128xf32, #tpu.memory_space<vmem>>, vector<8x128xf32>
    tpu.vector_store %arg7[%c0_16, %c0_17], %40 {strides = array<i32>} : memref<8x128xf32, #tpu.memory_space<vmem>>, vector<8x128xf32>,
    return
  }
  func.func @transform_0(%arg0: i32) -> (i32, i32) {
    %c0_i32 = arith.constant 0 : i32
    %c0_i32_0 = arith.constant 0 : i32
    return %arg0, %c0_i32 : i32, i32
  }
  func.func @transform_1(%arg0: i32) -> (i32, i32) {
    %c0_i32 = arith.constant 0 : i32
    %c0_i32_0 = arith.constant 0 : i32
    %c0_i32_1 = arith.constant 0 : i32
    return %c0_i32, %c0_i32_0 : i32, i32
  }
  func.func @transform_2(%arg0: i32) -> (i32, i32) {
    %c0_i32 = arith.constant 0 : i32
    %c0_i32_0 = arith.constant 0 : i32
    %c0_i32_1 = arith.constant 0 : i32
    return %c0_i32, %c0_i32_0 : i32, i32
  }
  func.func @transform_3(%arg0: i32) -> (i32, i32) {
    %c0_i32 = arith.constant 0 : i32
    %c0_i32_0 = arith.constant 0 : i32
    %c0_i32_1 = arith.constant 0 : i32
    return %c0_i32, %c0_i32_0 : i32, i32
  }
  func.func @transform_4(%arg0: i32) -> (i32, i32) {
    %c0_i32 = arith.constant 0 : i32
    %c0_i32_0 = arith.constant 0 : i32
    %c0_i32_1 = arith.constant 0 : i32
    return %c0_i32, %c0_i32_0 : i32, i32
  }
  func.func @transform_5(%arg0: i32) -> (i32, i32) {
    %c0_i32 = arith.constant 0 : i32
    %c0_i32_0 = arith.constant 0 : i32
    %c0_i32_1 = arith.constant 0 : i32
    return %c0_i32, %c0_i32_0 : i32, i32
  }
  func.func @transform_6(%arg0: i32) -> (i32, i32) {
    %c0_i32 = arith.constant 0 : i32
    %c0_i32_0 = arith.constant 0 : i32
    return %arg0, %c0_i32 : i32, i32
  }
}

</mosaic_0001>

<llo_original>
// kernel: tpu_custom_call.1
$region0: #{tpu_custom_call.1}
  #allocation0 [shape = 'u32[]', space=smem, size = 0x4, offset = 0x4, fixed_abs, tag = 'smem constant byte address 0x4 - core index']
  #allocation1 [shape = 'u32[72,128]{1,0:T(1,128)}', space=vmem, size = 0x9000, scoped, tag = 'internal scratch']
  %s0 = inlined_call_operand.vmem [shape: f32[8,2], index: 0, kind: input, shape index: {}]
  %s1 = inlined_call_operand.vmem [shape: f32[2,512], index: 1, kind: input, shape index: {}]
  %s2 = inlined_call_operand.hbm [shape: bf16[512,512], index: 2, kind: input, shape index: {}]
  %s3 = inlined_call_operand.hbm [shape: bf16[512,512], index: 3, kind: input, shape index: {}]
  %s4 = inlined_call_operand.hbm [shape: bf16[512,128], index: 4, kind: input, shape index: {}]
  %s5 = inlined_call_operand.hbm [shape: f32[4,512], index: 5, kind: input, shape index: {}]
  %s6 = inlined_call_operand.hbm [shape: f32[8,128], index: 6, kind: output, shape index: {}]
  %s7 = sld [smem:[#allocation0]]
  $region50: #{tpu_custom_call.1} parent=0
    _
  %s9 = ssub.s32 1, %s7
  %s10 = scalar_select 0, %s9, %s7
  $region1: #{tpu_custom_call.1} parent=0
    #allocation2 [shape = 'u8[524288]{0}', space=vmem, size = 0x80000, scoped, tag = 'input window, operand 2, single buffered']
    #allocation3 [shape = 's32[1]{0}', space=sflag, size = 0x4, scoped, tag = 'scoped memory for tpu_custom_call.1']
    #allocation4 [shape = 's32[1]{0}', space=sflag, size = 0x4, scoped, tag = 'scoped memory for tpu_custom_call.1']
    #allocation5 [shape = 'u8[524288]{0}', space=vmem, size = 0x80000, scoped, tag = 'input window, operand 3, single buffered']
    #allocation6 [shape = 's32[1]{0}', space=sflag, size = 0x4, scoped, tag = 'scoped memory for tpu_custom_call.1']
    #allocation7 [shape = 'u8[131072]{0}', space=vmem, size = 0x20000, scoped, tag = 'input window, operand 4, single buffered']
    #allocation8 [shape = 'u8[8192]{0}', space=vmem, size = 0x2000, scoped, tag = 'input window, operand 5, single buffered']
    #allocation9 [shape = 's32[1]{0}', space=sflag, size = 0x4, scoped, tag = 'scoped memory for tpu_custom_call.1']
    #allocation10 [shape = 'u8[4096]{0}', space=vmem, size = 0x1000, scoped, tag = 'output window, operand 0, single buffered']
    %11 = vsyncpa [#allocation3], 0
    %12 = vsyncpa [#allocation6], 0
    %13 = vsyncpa [#allocation9], 0
    %14 = vsyncpa [#allocation4], 0
    // Predicated region
    $region2: #{tpu_custom_call.1} parent=1 // pred_check
      _
    $region3: #{tpu_custom_call.1} parent=1 // pred_check_branch
      %16 = sbr.rel (0) target = $region5
    $region4: #{tpu_custom_call.1} parent=1 // pred_region
      _
    $region5: #{tpu_custom_call.1} parent=1 // pred_fallthru
      _
    // Predicated region
    $region6: #{tpu_custom_call.1} parent=1 // pred_check
      _
    $region7: #{tpu_custom_call.1} parent=1 // pred_check_branch
      %18 = sbr.rel (0) target = $region9
    $region8: #{tpu_custom_call.1} parent=1 // pred_region
      _
    $region9: #{tpu_custom_call.1} parent=1 // pred_fallthru
      _
    // Predicated region
    $region10: #{tpu_custom_call.1} parent=1 // pred_check
      _
    $region11: #{tpu_custom_call.1} parent=1 // pred_check_branch
      %20 = sbr.rel (0) target = $region13
    $region12: #{tpu_custom_call.1} parent=1 // pred_region
      %22 = vsyncadd [#allocation3], 0
      %s23 = sshll.u32 %s2, 4
      %s24 = int_to_ptr.hbm [resolvable:$true] %s23
      %s25 = sshll.u32 [#allocation2], 4
      %s26 = int_to_ptr.vmem [resolvable:$true] %s25
      %31 = dma.hbm_to_vmem [thread:$0]  %s24, 16384, %s26, [#allocation3], 256, 256, 16
    $region13: #{tpu_custom_call.1} parent=1 // pred_fallthru
      _
    // Predicated region
    $region14: #{tpu_custom_call.1} parent=1 // pred_check
      _
    $region15: #{tpu_custom_call.1} parent=1 // pred_check_branch
      %33 = sbr.rel (0) target = $region17
    $region16: #{tpu_custom_call.1} parent=1 // pred_region
      %35 = vsyncadd [#allocation6], 0
      %s36 = sshll.u32 %s3, 4
      %s37 = int_to_ptr.hbm [resolvable:$true] %s36
      %s38 = sshll.u32 [#allocation5], 4
      %s39 = int_to_ptr.vmem [resolvable:$true] %s38
      %44 = dma.hbm_to_vmem [thread:$0]  %s37, 16384, %s39, [#allocation6], 256, 256, 16
    $region17: #{tpu_custom_call.1} parent=1 // pred_fallthru
      _
    // Predicated region
    $region18: #{tpu_custom_call.1} parent=1 // pred_check
      _
    $region19: #{tpu_custom_call.1} parent=1 // pred_check_branch
      %46 = sbr.rel (0) target = $region21
    $region20: #{tpu_custom_call.1} parent=1 // pred_region
      %48 = vsyncadd [#allocation6], 0
      %s49 = sshll.u32 %s4, 4
      %s50 = int_to_ptr.hbm [resolvable:$true] %s49
      %s51 = sshll.u32 [#allocation7], 4
      %s52 = int_to_ptr.vmem [resolvable:$true] %s51
      %57 = dma.hbm_to_vmem [thread:$0]  %s50, 4096, %s52, [#allocation6], 64, 64, 4
    $region21: #{tpu_custom_call.1} parent=1 // pred_fallthru
      _
    // Predicated region
    $region22: #{tpu_custom_call.1} parent=1 // pred_check
      _
    $region23: #{tpu_custom_call.1} parent=1 // pred_check_branch
      %59 = sbr.rel (0) target = $region25
    $region24: #{tpu_custom_call.1} parent=1 // pred_region
      %61 = vsyncadd [#allocation9], 0
      %s63 = sshll.u32 %s5, 4
      %s64 = int_to_ptr.hbm [resolvable:$true] %s63
      %s65 = sshll.u32 [#allocation8], 4
      %s66 = int_to_ptr.vmem [resolvable:$true] %s65
      %68 = dma.hbm_to_vmem [thread:$0]  %s64, 256, %s66, [#allocation9]
    $region25: #{tpu_custom_call.1} parent=1 // pred_fallthru
      _
    // Predicated region
    $region26: #{tpu_custom_call.1} parent=1 // pred_check
      _
    $region27: #{tpu_custom_call.1} parent=1 // pred_check_branch
      %70 = sbr.rel (0) target = $region29
    $region28: #{tpu_custom_call.1} parent=1 // pred_region
      %72 = dma.done [#allocation3], 16384
    $region29: #{tpu_custom_call.1} parent=1 // pred_fallthru
      _
    // Predicated region
    $region30: #{tpu_custom_call.1} parent=1 // pred_check
      _
    $region31: #{tpu_custom_call.1} parent=1 // pred_check_branch
      %74 = sbr.rel (0) target = $region33
    $region32: #{tpu_custom_call.1} parent=1 // pred_region
      %76 = dma.done [#allocation6], 16384
    $region33: #{tpu_custom_call.1} parent=1 // pred_fallthru
      _
    // Predicated region
    $region34: #{tpu_custom_call.1} parent=1 // pred_check
      _
    $region35: #{tpu_custom_call.1} parent=1 // pred_check_branch
      %78 = sbr.rel (0) target = $region37
    $region36: #{tpu_custom_call.1} parent=1 // pred_region
      %80 = dma.done [#allocation6], 4096
    $region37: #{tpu_custom_call.1} parent=1 // pred_fallthru
      _
    // Predicated region
    $region38: #{tpu_custom_call.1} parent=1 // pred_check
      _
    $region39: #{tpu_custom_call.1} parent=1 // pred_check_branch
      %82 = sbr.rel (0) target = $region41
    $region40: #{tpu_custom_call.1} parent=1 // pred_region
      %84 = dma.done [#allocation9], 256
    $region41: #{tpu_custom_call.1} parent=1 // pred_fallthru
      _
    %v85 = vld [vmem:[%s0] sm:$0xff]
    %v86 = vld [vmem:[%s1] sm:$0xff]
    %v87 = vld [vmem:[#allocation8] sm:$0xff]
    %v88 = vld [vmem:[#allocation8 + $0x8] sm:$0xff]
    %90 = vset.pattern.permute.xlu0 0
    %91 = vperm.xlu0 %90, %v85
    %v92 = vpop.permute.xlu0 %91
    %v95 = vperm.slane %v86, 0
    %v96 = vperm.slane %v86, 2
    %v97 = vperm.slane %v86, 4
    %v98 = vperm.slane %v86, 6
    %v103 = vperm.slane %v95, 0
    %v104 = vperm.slane %v96, 0
    %v105 = vperm.slane %v97, 0
    %v106 = vperm.slane %v98, 0
    %v107 = vmul.f32 %v92, %v103
    %v108 = vmul.f32 %v92, %v104
    %v109 = vmul.f32 %v92, %v105
    %v110 = vmul.f32 %v92, %v106
    %111 = vset.pattern.permute.xlu0 1
    %112 = vperm.xlu0 %111, %v85
    %v113 = vpop.permute.xlu0 %112
    %v115 = vperm.slane %v86, 1
    %v116 = vperm.slane %v86, 3
    %v117 = vperm.slane %v86, 5
    %v118 = vperm.slane %v86, 7
    %v123 = vperm.slane %v115, 1
    %v124 = vperm.slane %v116, 1
    %v125 = vperm.slane %v117, 1
    %v126 = vperm.slane %v118, 1
    %v127 = vmul.f32 %v113, %v123
    %v128 = vmul.f32 %v113, %v124
    %v129 = vmul.f32 %v113, %v125
    %v130 = vmul.f32 %v113, %v126
    %v131 = vadd.f32 %v107, %v127
    %v132 = vadd.f32 %v108, %v128
    %v133 = vadd.f32 %v109, %v129
    %v134 = vadd.f32 %v110, %v130
    %v137 = vperm.slane %v87, 0
    %v138 = vperm.slane %v87, 4
    %v139 = vperm.slane %v88, 0
    %v140 = vperm.slane %v88, 4
    %v145 = vperm.slane %v137, 0
    %v146 = vperm.slane %v138, 0
    %v147 = vperm.slane %v139, 0
    %v148 = vperm.slane %v140, 0
    %v149 = vadd.f32 %v131, %v145
    %v150 = vadd.f32 %v132, %v146
    %v151 = vadd.f32 %v133, %v147
    %v152 = vadd.f32 %v134, %v148
    %v153 = vmax.f32 %v149, 0.0
    %v154 = vmax.f32 %v150, 0.0
    %v155 = vmax.f32 %v151, 0.0
    %v156 = vmax.f32 %v152, 0.0
    %v157 = vpack.c.bf16 %v153, %v153
    %v158 = vpack.c.bf16 %v154, %v154
    %v159 = vpack.c.bf16 %v155, %v155
    %v160 = vpack.c.bf16 %v156, %v156
    %v161 = vld [vmem:[#allocation2] sm:$0xff]
    %v162 = vld [vmem:[#allocation2 + $0x8] sm:$0xff]
    %v163 = vld [vmem:[#allocation2 + $0x10] sm:$0xff]
    %v164 = vld [vmem:[#allocation2 + $0x18] sm:$0xff]
    %v165 = vld [vmem:[#allocation2 + $0x20] sm:$0xff]
    %v166 = vld [vmem:[#allocation2 + $0x28] sm:$0xff]
    %v167 = vld [vmem:[#allocation2 + $0x30] sm:$0xff]
    %v168 = vld [vmem:[#allocation2 + $0x38] sm:$0xff]
    %v169 = vld [vmem:[#allocation2 + $0x40] sm:$0xff]
    %v170 = vld [vmem:[#allocation2 + $0x48] sm:$0xff]
    %v171 = vld [vmem:[#allocation2 + $0x50] sm:$0xff]
    %v172 = vld [vmem:[#allocation2 + $0x58] sm:$0xff]
    %v173 = vld [vmem:[#allocation2 + $0x60] sm:$0xff]
    %v174 = vld [vmem:[#allocation2 + $0x68] sm:$0xff]
    %v175 = vld [vmem:[#allocation2 + $0x70] sm:$0xff]
    %v176 = vld [vmem:[#allocation2 + $0x78] sm:$0xff]
    %v177 = vld [vmem:[#allocation2 + $0x80] sm:$0xff]
    %v178 = vld [vmem:[#allocation2 + $0x88] sm:$0xff]
    %v179 = vld [vmem:[#allocation2 + $0x90] sm:$0xff]
    %v180 = vld [vmem:[#allocation2 + $0x98] sm:$0xff]
    %v181 = vld [vmem:[#allocation2 + $0xa0] sm:$0xff]
    %v182 = vld [vmem:[#allocation2 + $0xa8] sm:$0xff]
    %v183 = vld [vmem:[#allocation2 + $0xb0] sm:$0xff]
    %v184 = vld [vmem:[#allocation2 + $0xb8] sm:$0xff]
    %v185 = vld [vmem:[#allocation2 + $0xc0] sm:$0xff]
    %v186 = vld [vmem:[#allocation2 + $0xc8] sm:$0xff]
    %v187 = vld [vmem:[#allocation2 + $0xd0] sm:$0xff]
    %v188 = vld [vmem:[#allocation2 + $0xd8] sm:$0xff]
    %v189 = vld [vmem:[#allocation2 + $0xe0] sm:$0xff]
    %v190 = vld [vmem:[#allocation2 + $0xe8] sm:$0xff]
    %v191 = vld [vmem:[#allocation2 + $0xf0] sm:$0xff]
    %v192 = vld [vmem:[#allocation2 + $0xf8] sm:$0xff]
    %v193 = vld [vmem:[#allocation2 + $0x100] sm:$0xff]
    %v194 = vld [vmem:[#allocation2 + $0x108] sm:$0xff]
    %v195 = vld [vmem:[#allocation2 + $0x110] sm:$0xff]
    %v196 = vld [vmem:[#allocation2 + $0x118] sm:$0xff]
    %v197 = vld [vmem:[#allocation2 + $0x120] sm:$0xff]
    %v198 = vld [vmem:[#allocation2 + $0x128] sm:$0xff]
    %v199 = vld [vmem:[#allocation2 + $0x130] sm:$0xff]
    %v200 = vld [vmem:[#allocation2 + $0x138] sm:$0xff]
    %v201 = vld [vmem:[#allocation2 + $0x140] sm:$0xff]
    %v202 = vld [vmem:[#allocation2 + $0x148] sm:$0xff]
    %v203 = vld [vmem:[#allocation2 + $0x150] sm:$0xff]
    %v204 = vld [vmem:[#allocation2 + $0x158] sm:$0xff]
    %v205 = vld [vmem:[#allocation2 + $0x160] sm:$0xff]
    %v206 = vld [vmem:[#allocation2 + $0x168] sm:$0xff]
    %v207 = vld [vmem:[#allocation2 + $0x170] sm:$0xff]
    %v208 = vld [vmem:[#allocation2 + $0x178] sm:$0xff]
    %v209 = vld [vmem:[#allocation2 + $0x180] sm:$0xff]
    %v210 = vld [vmem:[#allocation2 + $0x188] sm:$0xff]
    %v211 = vld [vmem:[#allocation2 + $0x190] sm:$0xff]
    %v212 = vld [vmem:[#allocation2 + $0x198] sm:$0xff]
    %v213 = vld [vmem:[#allocation2 + $0x1a0] sm:$0xff]
    %v214 = vld [vmem:[#allocation2 + $0x1a8] sm:$0xff]
    %v215 = vld [vmem:[#allocation2 + $0x1b0] sm:$0xff]
    %v216 = vld [vmem:[#allocation2 + $0x1b8] sm:$0xff]
    %v217 = vld [vmem:[#allocation2 + $0x1c0] sm:$0xff]
    %v218 = vld [vmem:[#allocation2 + $0x1c8] sm:$0xff]
    %v219 = vld [vmem:[#allocation2 + $0x1d0] sm:$0xff]
    %v220 = vld [vmem:[#allocation2 + $0x1d8] sm:$0xff]
    %v221 = vld [vmem:[#allocation2 + $0x1e0] sm:$0xff]
    %v222 = vld [vmem:[#allocation2 + $0x1e8] sm:$0xff]
    %v223 = vld [vmem:[#allocation2 + $0x1f0] sm:$0xff]
    %v224 = vld [vmem:[#allocation2 + $0x1f8] sm:$0xff]
    %v225 = vld [vmem:[#allocation2 + $0x200] sm:$0xff]
    %v226 = vld [vmem:[#allocation2 + $0x208] sm:$0xff]
    %v227 = vld [vmem:[#allocation2 + $0x210] sm:$0xff]
    %v228 = vld [vmem:[#allocation2 + $0x218] sm:$0xff]
    %v229 = vld [vmem:[#allocation2 + $0x220] sm:$0xff]
    %v230 = vld [vmem:[#allocation2 + $0x228] sm:$0xff]
    %v231 = vld [vmem:[#allocation2 + $0x230] sm:$0xff]
    %v232 = vld [vmem:[#allocation2 + $0x238] sm:$0xff]
    %v233 = vld [vmem:[#allocation2 + $0x240] sm:$0xff]
    %v234 = vld [vmem:[#allocation2 + $0x248] sm:$0xff]
    %v235 = vld [vmem:[#allocation2 + $0x250] sm:$0xff]
    %v236 = vld [vmem:[#allocation2 + $0x258] sm:$0xff]
    %v237 = vld [vmem:[#allocation2 + $0x260] sm:$0xff]
    %v238 = vld [vmem:[#allocation2 + $0x268] sm:$0xff]
    %v239 = vld [vmem:[#allocation2 + $0x270] sm:$0xff]
    %v240 = vld [vmem:[#allocation2 + $0x278] sm:$0xff]
    %v241 = vld [vmem:[#allocation2 + $0x280] sm:$0xff]
    %v242 = vld [vmem:[#allocation2 + $0x288] sm:$0xff]
    %v243 = vld [vmem:[#allocation2 + $0x290] sm:$0xff]
    %v244 = vld [vmem:[#allocation2 + $0x298] sm:$0xff]
    %v245 = vld [vmem:[#allocation2 + $0x2a0] sm:$0xff]
    %v246 = vld [vmem:[#allocation2 + $0x2a8] sm:$0xff]
    %v247 = vld [vmem:[#allocation2 + $0x2b0] sm:$0xff]
    %v248 = vld [vmem:[#allocation2 + $0x2b8] sm:$0xff]
    %v249 = vld [vmem:[#allocation2 + $0x2c0] sm:$0xff]
    %v250 = vld [vmem:[#allocation2 + $0x2c8] sm:$0xff]
    %v251 = vld [vmem:[#allocation2 + $0x2d0] sm:$0xff]
    %v252 = vld [vmem:[#allocation2 + $0x2d8] sm:$0xff]
    %v253 = vld [vmem:[#allocation2 + $0x2e0] sm:$0xff]
    %v254 = vld [vmem:[#allocation2 + $0x2e8] sm:$0xff]
    %v255 = vld [vmem:[#allocation2 + $0x2f0] sm:$0xff]
    %v256 = vld [vmem:[#allocation2 + $0x2f8] sm:$0xff]
    %v257 = vld [vmem:[#allocation2 + $0x300] sm:$0xff]
    %v258 = vld [vmem:[#allocation2 + $0x308] sm:$0xff]
    %v259 = vld [vmem:[#allocation2 + $0x310] sm:$0xff]
    %v260 = vld [vmem:[#allocation2 + $0x318] sm:$0xff]
    %v261 = vld [vmem:[#allocation2 + $0x320] sm:$0xff]
    %v262 = vld [vmem:[#allocation2 + $0x328] sm:$0xff]
    %v263 = vld [vmem:[#allocation2 + $0x330] sm:$0xff]
    %v264 = vld [vmem:[#allocation2 + $0x338] sm:$0xff]
    %v265 = vld [vmem:[#allocation2 + $0x340] sm:$0xff]
    %v266 = vld [vmem:[#allocation2 + $0x348] sm:$0xff]
    %v267 = vld [vmem:[#allocation2 + $0x350] sm:$0xff]
    %v268 = vld [vmem:[#allocation2 + $0x358] sm:$0xff]
    %v269 = vld [vmem:[#allocation2 + $0x360] sm:$0xff]
    %v270 = vld [vmem:[#allocation2 + $0x368] sm:$0xff]
    %v271 = vld [vmem:[#allocation2 + $0x370] sm:$0xff]
    %v272 = vld [vmem:[#allocation2 + $0x378] sm:$0xff]
    %v273 = vld [vmem:[#allocation2 + $0x380] sm:$0xff]
    %v274 = vld [vmem:[#allocation2 + $0x388] sm:$0xff]
    %v275 = vld [vmem:[#allocation2 + $0x390] sm:$0xff]
    %v276 = vld [vmem:[#allocation2 + $0x398] sm:$0xff]
    %v277 = vld [vmem:[#allocation2 + $0x3a0] sm:$0xff]
    %v278 = vld [vmem:[#allocation2 + $0x3a8] sm:$0xff]
    %v279 = vld [vmem:[#allocation2 + $0x3b0] sm:$0xff]
    %v280 = vld [vmem:[#allocation2 + $0x3b8] sm:$0xff]
    %v281 = vld [vmem:[#allocation2 + $0x3c0] sm:$0xff]
    %v282 = vld [vmem:[#allocation2 + $0x3c8] sm:$0xff]
    %v283 = vld [vmem:[#allocation2 + $0x3d0] sm:$0xff]
    %v284 = vld [vmem:[#allocation2 + $0x3d8] sm:$0xff]
    %v285 = vld [vmem:[#allocation2 + $0x3e0] sm:$0xff]
    %v286 = vld [vmem:[#allocation2 + $0x3e8] sm:$0xff]
    %v287 = vld [vmem:[#allocation2 + $0x3f0] sm:$0xff]
    %v288 = vld [vmem:[#allocation2 + $0x3f8] sm:$0xff]
    %v289 = vperm.slane %v87, 1
    %v290 = vperm.slane %v87, 5
    %v291 = vperm.slane %v88, 1
    %v292 = vperm.slane %v88, 5
    %v297 = vperm.slane %v289, 1
    %v298 = vperm.slane %v290, 1
    %v299 = vperm.slane %v291, 1
    %v300 = vperm.slane %v292, 1
    %v429 = vunpack.c.l.b16 %v161
    %v430 = vunpack.c.h.b16 %v161
    %v431 = vunpack.c.l.b16 %v162
    %v432 = vunpack.c.h.b16 %v162
    %v433 = vunpack.c.l.b16 %v163
    %v434 = vunpack.c.h.b16 %v163
    %v435 = vunpack.c.l.b16 %v164
    %v436 = vunpack.c.h.b16 %v164
    %v437 = vunpack.c.l.b16 %v165
    %v438 = vunpack.c.h.b16 %v165
    %v439 = vunpack.c.l.b16 %v166
    %v440 = vunpack.c.h.b16 %v166
    %v441 = vunpack.c.l.b16 %v167
    %v442 = vunpack.c.h.b16 %v167
    %v443 = vunpack.c.l.b16 %v168
    %v444 = vunpack.c.h.b16 %v168
    %v445 = vunpack.c.l.b16 %v169
    %v446 = vunpack.c.h.b16 %v169
    %v447 = vunpack.c.l.b16 %v170
    %v448 = vunpack.c.h.b16 %v170
    %v449 = vunpack.c.l.b16 %v171
    %v450 = vunpack.c.h.b16 %v171
    %v451 = vunpack.c.l.b16 %v172
    %v452 = vunpack.c.h.b16 %v172
    %v453 = vunpack.c.l.b16 %v173
    %v454 = vunpack.c.h.b16 %v173
    %v455 = vunpack.c.l.b16 %v174
    %v456 = vunpack.c.h.b16 %v174
    %v457 = vunpack.c.l.b16 %v175
    %v458 = vunpack.c.h.b16 %v175
    %v459 = vunpack.c.l.b16 %v176
    %v460 = vunpack.c.h.b16 %v176
    %v461 = vunpack.c.l.b16 %v177
    %v462 = vunpack.c.h.b16 %v177
    %v463 = vunpack.c.l.b16 %v178
    %v464 = vunpack.c.h.b16 %v178
    %v465 = vunpack.c.l.b16 %v179
    %v466 = vunpack.c.h.b16 %v179
    %v467 = vunpack.c.l.b16 %v180
    %v468 = vunpack.c.h.b16 %v180
    %v469 = vunpack.c.l.b16 %v181
    %v470 = vunpack.c.h.b16 %v181
    %v471 = vunpack.c.l.b16 %v182
    %v472 = vunpack.c.h.b16 %v182
    %v473 = vunpack.c.l.b16 %v183
    %v474 = vunpack.c.h.b16 %v183
    %v475 = vunpack.c.l.b16 %v184
    %v476 = vunpack.c.h.b16 %v184
    %v477 = vunpack.c.l.b16 %v185
    %v478 = vunpack.c.h.b16 %v185
    %v479 = vunpack.c.l.b16 %v186
    %v480 = vunpack.c.h.b16 %v186
    %v481 = vunpack.c.l.b16 %v187
    %v482 = vunpack.c.h.b16 %v187
    %v483 = vunpack.c.l.b16 %v188
    %v484 = vunpack.c.h.b16 %v188
    %v485 = vunpack.c.l.b16 %v189
    %v486 = vunpack.c.h.b16 %v189
    %v487 = vunpack.c.l.b16 %v190
    %v488 = vunpack.c.h.b16 %v190
    %v489 = vunpack.c.l.b16 %v191
    %v490 = vunpack.c.h.b16 %v191
    %v491 = vunpack.c.l.b16 %v192
    %v492 = vunpack.c.h.b16 %v192
    %v493 = vunpack.c.l.b16 %v193
    %v494 = vunpack.c.h.b16 %v193
    %v495 = vunpack.c.l.b16 %v194
    %v496 = vunpack.c.h.b16 %v194
    %v497 = vunpack.c.l.b16 %v195
    %v498 = vunpack.c.h.b16 %v195
    %v499 = vunpack.c.l.b16 %v196
    %v500 = vunpack.c.h.b16 %v196
    %v501 = vunpack.c.l.b16 %v197
    %v502 = vunpack.c.h.b16 %v197
    %v503 = vunpack.c.l.b16 %v198
    %v504 = vunpack.c.h.b16 %v198
    %v505 = vunpack.c.l.b16 %v199
    %v506 = vunpack.c.h.b16 %v199
    %v507 = vunpack.c.l.b16 %v200
    %v508 = vunpack.c.h.b16 %v200
    %v509 = vunpack.c.l.b16 %v201
    %v510 = vunpack.c.h.b16 %v201
    %v511 = vunpack.c.l.b16 %v202
    %v512 = vunpack.c.h.b16 %v202
    %v513 = vunpack.c.l.b16 %v203
    %v514 = vunpack.c.h.b16 %v203
    %v515 = vunpack.c.l.b16 %v204
    %v516 = vunpack.c.h.b16 %v204
    %v517 = vunpack.c.l.b16 %v205
    %v518 = vunpack.c.h.b16 %v205
    %v519 = vunpack.c.l.b16 %v206
    %v520 = vunpack.c.h.b16 %v206
    %v521 = vunpack.c.l.b16 %v207
    %v522 = vunpack.c.h.b16 %v207
    %v523 = vunpack.c.l.b16 %v208
    %v524 = vunpack.c.h.b16 %v208
    %v525 = vunpack.c.l.b16 %v209
    %v526 = vunpack.c.h.b16 %v209
    %v527 = vunpack.c.l.b16 %v210
    %v528 = vunpack.c.h.b16 %v210
    %v529 = vunpack.c.l.b16 %v211
    %v530 = vunpack.c.h.b16 %v211
    %v531 = vunpack.c.l.b16 %v212
    %v532 = vunpack.c.h.b16 %v212
    %v533 = vunpack.c.l.b16 %v213
    %v534 = vunpack.c.h.b16 %v213
    %v535 = vunpack.c.l.b16 %v214
    %v536 = vunpack.c.h.b16 %v214
    %v537 = vunpack.c.l.b16 %v215
    %v538 = vunpack.c.h.b16 %v215
    %v539 = vunpack.c.l.b16 %v216
    %v540 = vunpack.c.h.b16 %v216
    %v541 = vunpack.c.l.b16 %v217
    %v542 = vunpack.c.h.b16 %v217
    %v543 = vunpack.c.l.b16 %v218
    %v544 = vunpack.c.h.b16 %v218
    %v545 = vunpack.c.l.b16 %v219
    %v546 = vunpack.c.h.b16 %v219
    %v547 = vunpack.c.l.b16 %v220
    %v548 = vunpack.c.h.b16 %v220
    %v549 = vunpack.c.l.b16 %v221
    %v550 = vunpack.c.h.b16 %v221
    %v551 = vunpack.c.l.b16 %v222
    %v552 = vunpack.c.h.b16 %v222
    %v553 = vunpack.c.l.b16 %v223
    %v554 = vunpack.c.h.b16 %v223
    %v555 = vunpack.c.l.b16 %v224
    %v556 = vunpack.c.h.b16 %v224
    %v557 = vunpack.c.l.b16 %v225
    %v558 = vunpack.c.h.b16 %v225
    %v559 = vunpack.c.l.b16 %v226
    %v560 = vunpack.c.h.b16 %v226
    %v561 = vunpack.c.l.b16 %v227
    %v562 = vunpack.c.h.b16 %v227
    %v563 = vunpack.c.l.b16 %v228
    %v564 = vunpack.c.h.b16 %v228
    %v565 = vunpack.c.l.b16 %v229
    %v566 = vunpack.c.h.b16 %v229
    %v567 = vunpack.c.l.b16 %v230
    %v568 = vunpack.c.h.b16 %v230
    %v569 = vunpack.c.l.b16 %v231
    %v570 = vunpack.c.h.b16 %v231
    %v571 = vunpack.c.l.b16 %v232
    %v572 = vunpack.c.h.b16 %v232
    %v573 = vunpack.c.l.b16 %v233
    %v574 = vunpack.c.h.b16 %v233
    %v575 = vunpack.c.l.b16 %v234
    %v576 = vunpack.c.h.b16 %v234
    %v577 = vunpack.c.l.b16 %v235
    %v578 = vunpack.c.h.b16 %v235
    %v579 = vunpack.c.l.b16 %v236
    %v580 = vunpack.c.h.b16 %v236
    %v581 = vunpack.c.l.b16 %v237
    %v582 = vunpack.c.h.b16 %v237
    %v583 = vunpack.c.l.b16 %v238
    %v584 = vunpack.c.h.b16 %v238
    %v585 = vunpack.c.l.b16 %v239
    %v586 = vunpack.c.h.b16 %v239
    %v587 = vunpack.c.l.b16 %v240
    %v588 = vunpack.c.h.b16 %v240
    %v589 = vunpack.c.l.b16 %v241
    %v590 = vunpack.c.h.b16 %v241
    %v591 = vunpack.c.l.b16 %v242
    %v592 = vunpack.c.h.b16 %v242
    %v593 = vunpack.c.l.b16 %v243
    %v594 = vunpack.c.h.b16 %v243
    %v595 = vunpack.c.l.b16 %v244
    %v596 = vunpack.c.h.b16 %v244
    %v597 = vunpack.c.l.b16 %v245
    %v598 = vunpack.c.h.b16 %v245
    %v599 = vunpack.c.l.b16 %v246
    %v600 = vunpack.c.h.b16 %v246
    %v601 = vunpack.c.l.b16 %v247
    %v602 = vunpack.c.h.b16 %v247
    %v603 = vunpack.c.l.b16 %v248
    %v604 = vunpack.c.h.b16 %v248
    %v605 = vunpack.c.l.b16 %v249
    %v606 = vunpack.c.h.b16 %v249
    %v607 = vunpack.c.l.b16 %v250
    %v608 = vunpack.c.h.b16 %v250
    %v609 = vunpack.c.l.b16 %v251
    %v610 = vunpack.c.h.b16 %v251
    %v611 = vunpack.c.l.b16 %v252
    %v612 = vunpack.c.h.b16 %v252
    %v613 = vunpack.c.l.b16 %v253
    %v614 = vunpack.c.h.b16 %v253
    %v615 = vunpack.c.l.b16 %v254
    %v616 = vunpack.c.h.b16 %v254
    %v617 = vunpack.c.l.b16 %v255
    %v618 = vunpack.c.h.b16 %v255
    %v619 = vunpack.c.l.b16 %v256
    %v620 = vunpack.c.h.b16 %v256
    %v621 = vunpack.c.l.b16 %v257
    %v622 = vunpack.c.h.b16 %v257
    %v623 = vunpack.c.l.b16 %v258
    %v624 = vunpack.c.h.b16 %v258
    %v625 = vunpack.c.l.b16 %v259
    %v626 = vunpack.c.h.b16 %v259
    %v627 = vunpack.c.l.b16 %v260
    %v628 = vunpack.c.h.b16 %v260
    %v629 = vunpack.c.l.b16 %v261
    %v630 = vunpack.c.h.b16 %v261
    %v631 = vunpack.c.l.b16 %v262
    %v632 = vunpack.c.h.b16 %v262
    %v633 = vunpack.c.l.b16 %v263
    %v634 = vunpack.c.h.b16 %v263
    %v635 = vunpack.c.l.b16 %v264
    %v636 = vunpack.c.h.b16 %v264
    %v637 = vunpack.c.l.b16 %v265
    %v638 = vunpack.c.h.b16 %v265
    %v639 = vunpack.c.l.b16 %v266
    %v640 = vunpack.c.h.b16 %v266
    %v641 = vunpack.c.l.b16 %v267
    %v642 = vunpack.c.h.b16 %v267
    %v643 = vunpack.c.l.b16 %v268
    %v644 = vunpack.c.h.b16 %v268
    %v645 = vunpack.c.l.b16 %v269
    %v646 = vunpack.c.h.b16 %v269
    %v647 = vunpack.c.l.b16 %v270
    %v648 = vunpack.c.h.b16 %v270
    %v649 = vunpack.c.l.b16 %v271
    %v650 = vunpack.c.h.b16 %v271
    %v651 = vunpack.c.l.b16 %v272
    %v652 = vunpack.c.h.b16 %v272
    %v653 = vunpack.c.l.b16 %v273
    %v654 = vunpack.c.h.b16 %v273
    %v655 = vunpack.c.l.b16 %v274
    %v656 = vunpack.c.h.b16 %v274
    %v657 = vunpack.c.l.b16 %v275
    %v658 = vunpack.c.h.b16 %v275
    %v659 = vunpack.c.l.b16 %v276
    %v660 = vunpack.c.h.b16 %v276
    %v661 = vunpack.c.l.b16 %v277
    %v662 = vunpack.c.h.b16 %v277
    %v663 = vunpack.c.l.b16 %v278
    %v664 = vunpack.c.h.b16 %v278
    %v665 = vunpack.c.l.b16 %v279
    %v666 = vunpack.c.h.b16 %v279
    %v667 = vunpack.c.l.b16 %v280
    %v668 = vunpack.c.h.b16 %v280
    %v669 = vunpack.c.l.b16 %v281
    %v670 = vunpack.c.h.b16 %v281
    %v671 = vunpack.c.l.b16 %v282
    %v672 = vunpack.c.h.b16 %v282
    %v673 = vunpack.c.l.b16 %v283
    %v674 = vunpack.c.h.b16 %v283
    %v675 = vunpack.c.l.b16 %v284
    %v676 = vunpack.c.h.b16 %v284
    %v677 = vunpack.c.l.b16 %v285
    %v678 = vunpack.c.h.b16 %v285
    %v679 = vunpack.c.l.b16 %v286
    %v680 = vunpack.c.h.b16 %v286
    %v681 = vunpack.c.l.b16 %v287
    %v682 = vunpack.c.h.b16 %v287
    %v683 = vunpack.c.l.b16 %v288
    %v684 = vunpack.c.h.b16 %v288
    %v685 = vpack.c.b16 %v433, %v429
    %v686 = vpack.c.b16 %v434, %v430
    %v687 = vpack.c.b16 %v435, %v431
    %v688 = vpack.c.b16 %v436, %v432
    %v689 = vpack.c.b16 %v441, %v437
    %v690 = vpack.c.b16 %v442, %v438
    %v691 = vpack.c.b16 %v443, %v439
    %v692 = vpack.c.b16 %v444, %v440
    %v693 = vpack.c.b16 %v449, %v445
    %v694 = vpack.c.b16 %v450, %v446
    %v695 = vpack.c.b16 %v451, %v447
    %v696 = vpack.c.b16 %v452, %v448
    %v697 = vpack.c.b16 %v457, %v453
    %v698 = vpack.c.b16 %v458, %v454
    %v699 = vpack.c.b16 %v459, %v455
    %v700 = vpack.c.b16 %v460, %v456
    %v701 = vpack.c.b16 %v465, %v461
    %v702 = vpack.c.b16 %v466, %v462
    %v703 = vpack.c.b16 %v467, %v463
    %v704 = vpack.c.b16 %v468, %v464
    %v705 = vpack.c.b16 %v473, %v469
    %v706 = vpack.c.b16 %v474, %v470
    %v707 = vpack.c.b16 %v475, %v471
    %v708 = vpack.c.b16 %v476, %v472
    %v709 = vpack.c.b16 %v481, %v477
    %v710 = vpack.c.b16 %v482, %v478
    %v711 = vpack.c.b16 %v483, %v479
    %v712 = vpack.c.b16 %v484, %v480
    %v713 = vpack.c.b16 %v489, %v485
    %v714 = vpack.c.b16 %v490, %v486
    %v715 = vpack.c.b16 %v491, %v487
    %v716 = vpack.c.b16 %v492, %v488
    %v717 = vpack.c.b16 %v497, %v493
    %v718 = vpack.c.b16 %v498, %v494
    %v719 = vpack.c.b16 %v499, %v495
    %v720 = vpack.c.b16 %v500, %v496
    %v721 = vpack.c.b16 %v505, %v501
    %v722 = vpack.c.b16 %v506, %v502
    %v723 = vpack.c.b16 %v507, %v503
    %v724 = vpack.c.b16 %v508, %v504
    %v725 = vpack.c.b16 %v513, %v509
    %v726 = vpack.c.b16 %v514, %v510
    %v727 = vpack.c.b16 %v515, %v511
    %v728 = vpack.c.b16 %v516, %v512
    %v729 = vpack.c.b16 %v521, %v517
    %v730 = vpack.c.b16 %v522, %v518
    %v731 = vpack.c.b16 %v523, %v519
    %v732 = vpack.c.b16 %v524, %v520
    %v733 = vpack.c.b16 %v529, %v525
    %v734 = vpack.c.b16 %v530, %v526
    %v735 = vpack.c.b16 %v531, %v527
    %v736 = vpack.c.b16 %v532, %v528
    %v737 = vpack.c.b16 %v537, %v533
    %v738 = vpack.c.b16 %v538, %v534
    %v739 = vpack.c.b16 %v539, %v535
    %v740 = vpack.c.b16 %v540, %v536
    %v741 = vpack.c.b16 %v545, %v541
    %v742 = vpack.c.b16 %v546, %v542
    %v743 = vpack.c.b16 %v547, %v543
    %v744 = vpack.c.b16 %v548, %v544
    %v745 = vpack.c.b16 %v553, %v549
    %v746 = vpack.c.b16 %v554, %v550
    %v747 = vpack.c.b16 %v555, %v551
    %v748 = vpack.c.b16 %v556, %v552
    %v749 = vpack.c.b16 %v561, %v557
    %v750 = vpack.c.b16 %v562, %v558
    %v751 = vpack.c.b16 %v563, %v559
    %v752 = vpack.c.b16 %v564, %v560
    %v753 = vpack.c.b16 %v569, %v565
    %v754 = vpack.c.b16 %v570, %v566
    %v755 = vpack.c.b16 %v571, %v567
    %v756 = vpack.c.b16 %v572, %v568
    %v757 = vpack.c.b16 %v577, %v573
    %v758 = vpack.c.b16 %v578, %v574
    %v759 = vpack.c.b16 %v579, %v575
    %v760 = vpack.c.b16 %v580, %v576
    %v761 = vpack.c.b16 %v585, %v581
    %v762 = vpack.c.b16 %v586, %v582
    %v763 = vpack.c.b16 %v587, %v583
    %v764 = vpack.c.b16 %v588, %v584
    %v765 = vpack.c.b16 %v593, %v589
    %v766 = vpack.c.b16 %v594, %v590
    %v767 = vpack.c.b16 %v595, %v591
    %v768 = vpack.c.b16 %v596, %v592
    %v769 = vpack.c.b16 %v601, %v597
    %v770 = vpack.c.b16 %v602, %v598
    %v771 = vpack.c.b16 %v603, %v599
    %v772 = vpack.c.b16 %v604, %v600
    %v773 = vpack.c.b16 %v609, %v605
    %v774 = vpack.c.b16 %v610, %v606
    %v775 = vpack.c.b16 %v611, %v607
    %v776 = vpack.c.b16 %v612, %v608
    %v777 = vpack.c.b16 %v617, %v613
    %v778 = vpack.c.b16 %v618, %v614
    %v779 = vpack.c.b16 %v619, %v615
    %v780 = vpack.c.b16 %v620, %v616
    %v781 = vpack.c.b16 %v625, %v621
    %v782 = vpack.c.b16 %v626, %v622
    %v783 = vpack.c.b16 %v627, %v623
    %v784 = vpack.c.b16 %v628, %v624
    %v785 = vpack.c.b16 %v633, %v629
    %v786 = vpack.c.b16 %v634, %v630
    %v787 = vpack.c.b16 %v635, %v631
    %v788 = vpack.c.b16 %v636, %v632
    %v789 = vpack.c.b16 %v641, %v637
    %v790 = vpack.c.b16 %v642, %v638
    %v791 = vpack.c.b16 %v643, %v639
    %v792 = vpack.c.b16 %v644, %v640
    %v793 = vpack.c.b16 %v649, %v645
    %v794 = vpack.c.b16 %v650, %v646
    %v795 = vpack.c.b16 %v651, %v647
    %v796 = vpack.c.b16 %v652, %v648
    %v797 = vpack.c.b16 %v657, %v653
    %v798 = vpack.c.b16 %v658, %v654
    %v799 = vpack.c.b16 %v659, %v655
    %v800 = vpack.c.b16 %v660, %v656
    %v801 = vpack.c.b16 %v665, %v661
    %v802 = vpack.c.b16 %v666, %v662
    %v803 = vpack.c.b16 %v667, %v663
    %v804 = vpack.c.b16 %v668, %v664
    %v805 = vpack.c.b16 %v673, %v669
    %v806 = vpack.c.b16 %v674, %v670
    %v807 = vpack.c.b16 %v675, %v671
    %v808 = vpack.c.b16 %v676, %v672
    %v809 = vpack.c.b16 %v681, %v677
    %v810 = vpack.c.b16 %v682, %v678
    %v811 = vpack.c.b16 %v683, %v679
    %v812 = vpack.c.b16 %v684, %v680
    %941 = vmatpush.bf16.msra.mxu0 %v713
    %942 = vmatpush.bf16.msra.mxu0 %v709
    %943 = vmatpush.bf16.msra.mxu0 %v705
    %944 = vmatpush.bf16.msra.mxu0 %v701
    %945 = vmatpush.bf16.msra.mxu0 %v697
    %946 = vmatpush.bf16.msra.mxu0 %v693
    %947 = vmatpush.bf16.msra.mxu0 %v689
    %948 = vmatpush.bf16.msra.mxu0 %v685
    %949 = vmatmul.bf16.gmra.mxu0 %v157
    %v950 = vpop.f32.mrf.mxu0
    %v951 = vadd.f32 %v297, %v950
    %v952 = vpop.f32.mrf.mxu0
    %953 = vdwg.mxu0
    %954 = vmatpush.bf16.msra.mxu0 %v745
    %955 = vmatpush.bf16.msra.mxu0 %v741
    %956 = vmatpush.bf16.msra.mxu0 %v737
    %957 = vmatpush.bf16.msra.mxu0 %v733
    %958 = vmatpush.bf16.msra.mxu0 %v729
    %959 = vmatpush.bf16.msra.mxu0 %v725
    %960 = vmatpush.bf16.msra.mxu0 %v721
    %961 = vmatpush.bf16.msra.mxu0 %v717
    %962 = vmatmul.bf16.gmra.mxu0 %v158
    %v963 = vpop.f32.mrf.mxu0
    %v964 = vadd.f32 %v951, %v963
    %v965 = vpop.f32.mrf.mxu0
    %966 = vdwg.mxu0
    %967 = vmatpush.bf16.msra.mxu0 %v777
    %968 = vmatpush.bf16.msra.mxu0 %v773
    %969 = vmatpush.bf16.msra.mxu0 %v769
    %970 = vmatpush.bf16.msra.mxu0 %v765
    %971 = vmatpush.bf16.msra.mxu0 %v761
    %972 = vmatpush.bf16.msra.mxu0 %v757
    %973 = vmatpush.bf16.msra.mxu0 %v753
    %974 = vmatpush.bf16.msra.mxu0 %v749
    %975 = vmatmul.bf16.gmra.mxu0 %v159
    %v976 = vpop.f32.mrf.mxu0
    %v977 = vadd.f32 %v964, %v976
    %v978 = vpop.f32.mrf.mxu0
    %979 = vdwg.mxu0
    %980 = vmatpush.bf16.msra.mxu0 %v809
    %981 = vmatpush.bf16.msra.mxu0 %v805
    %982 = vmatpush.bf16.msra.mxu0 %v801
    %983 = vmatpush.bf16.msra.mxu0 %v797
    %984 = vmatpush.bf16.msra.mxu0 %v793
    %985 = vmatpush.bf16.msra.mxu0 %v789
    %986 = vmatpush.bf16.msra.mxu0 %v785
    %987 = vmatpush.bf16.msra.mxu0 %v781
    %988 = vmatmul.bf16.gmra.mxu0 %v160
    %v989 = vpop.f32.mrf.mxu0
    %v990 = vadd.f32 %v977, %v989
    %v991 = vpop.f32.mrf.mxu0
    %992 = vdwg.mxu0
    %993 = vmatpush.bf16.msra.mxu0 %v714
    %994 = vmatpush.bf16.msra.mxu0 %v710
    %995 = vmatpush.bf16.msra.mxu0 %v706
    %996 = vmatpush.bf16.msra.mxu0 %v702
    %997 = vmatpush.bf16.msra.mxu0 %v698
    %998 = vmatpush.bf16.msra.mxu0 %v694
    %999 = vmatpush.bf16.msra.mxu0 %v690
    %1000 = vmatpush.bf16.msra.mxu0 %v686
    %1001 = vmatmul.bf16.gmra.mxu0 %v157
    %v1002 = vpop.f32.mrf.mxu0
    %v1003 = vadd.f32 %v298, %v1002
    %v1004 = vpop.f32.mrf.mxu0
    %1005 = vdwg.mxu0
    %1006 = vmatpush.bf16.msra.mxu0 %v746
    %1007 = vmatpush.bf16.msra.mxu0 %v742
    %1008 = vmatpush.bf16.msra.mxu0 %v738
    %1009 = vmatpush.bf16.msra.mxu0 %v734
    %1010 = vmatpush.bf16.msra.mxu0 %v730
    %1011 = vmatpush.bf16.msra.mxu0 %v726
    %1012 = vmatpush.bf16.msra.mxu0 %v722
    %1013 = vmatpush.bf16.msra.mxu0 %v718
    %1014 = vmatmul.bf16.gmra.mxu0 %v158
    %v1015 = vpop.f32.mrf.mxu0
    %v1016 = vadd.f32 %v1003, %v1015
    %v1017 = vpop.f32.mrf.mxu0
    %1018 = vdwg.mxu0
    %1019 = vmatpush.bf16.msra.mxu0 %v778
    %1020 = vmatpush.bf16.msra.mxu0 %v774
    %1021 = vmatpush.bf16.msra.mxu0 %v770
    %1022 = vmatpush.bf16.msra.mxu0 %v766
    %1023 = vmatpush.bf16.msra.mxu0 %v762
    %1024 = vmatpush.bf16.msra.mxu0 %v758
    %1025 = vmatpush.bf16.msra.mxu0 %v754
    %1026 = vmatpush.bf16.msra.mxu0 %v750
    %1027 = vmatmul.bf16.gmra.mxu0 %v159
    %v1028 = vpop.f32.mrf.mxu0
    %v1029 = vadd.f32 %v1016, %v1028
    %v1030 = vpop.f32.mrf.mxu0
    %1031 = vdwg.mxu0
    %1032 = vmatpush.bf16.msra.mxu0 %v810
    %1033 = vmatpush.bf16.msra.mxu0 %v806
    %1034 = vmatpush.bf16.msra.mxu0 %v802
    %1035 = vmatpush.bf16.msra.mxu0 %v798
    %1036 = vmatpush.bf16.msra.mxu0 %v794
    %1037 = vmatpush.bf16.msra.mxu0 %v790
    %1038 = vmatpush.bf16.msra.mxu0 %v786
    %1039 = vmatpush.bf16.msra.mxu0 %v782
    %1040 = vmatmul.bf16.gmra.mxu0 %v160
    %v1041 = vpop.f32.mrf.mxu0
    %v1042 = vadd.f32 %v1029, %v1041
    %v1043 = vpop.f32.mrf.mxu0
    %1044 = vdwg.mxu0
    %1045 = vmatpush.bf16.msra.mxu0 %v715
    %1046 = vmatpush.bf16.msra.mxu0 %v711
    %1047 = vmatpush.bf16.msra.mxu0 %v707
    %1048 = vmatpush.bf16.msra.mxu0 %v703
    %1049 = vmatpush.bf16.msra.mxu0 %v699
    %1050 = vmatpush.bf16.msra.mxu0 %v695
    %1051 = vmatpush.bf16.msra.mxu0 %v691
    %1052 = vmatpush.bf16.msra.mxu0 %v687
    %1053 = vmatmul.bf16.gmra.mxu0 %v157
    %v1054 = vpop.f32.mrf.mxu0
    %v1055 = vadd.f32 %v299, %v1054
    %v1056 = vpop.f32.mrf.mxu0
    %1057 = vdwg.mxu0
    %1058 = vmatpush.bf16.msra.mxu0 %v747
    %1059 = vmatpush.bf16.msra.mxu0 %v743
    %1060 = vmatpush.bf16.msra.mxu0 %v739
    %1061 = vmatpush.bf16.msra.mxu0 %v735
    %1062 = vmatpush.bf16.msra.mxu0 %v731
    %1063 = vmatpush.bf16.msra.mxu0 %v727
    %1064 = vmatpush.bf16.msra.mxu0 %v723
    %1065 = vmatpush.bf16.msra.mxu0 %v719
    %1066 = vmatmul.bf16.gmra.mxu0 %v158
    %v1067 = vpop.f32.mrf.mxu0
    %v1068 = vadd.f32 %v1055, %v1067
    %v1069 = vpop.f32.mrf.mxu0
    %1070 = vdwg.mxu0
    %1071 = vmatpush.bf16.msra.mxu0 %v779
    %1072 = vmatpush.bf16.msra.mxu0 %v775
    %1073 = vmatpush.bf16.msra.mxu0 %v771
    %1074 = vmatpush.bf16.msra.mxu0 %v767
    %1075 = vmatpush.bf16.msra.mxu0 %v763
    %1076 = vmatpush.bf16.msra.mxu0 %v759
    %1077 = vmatpush.bf16.msra.mxu0 %v755
    %1078 = vmatpush.bf16.msra.mxu0 %v751
    %1079 = vmatmul.bf16.gmra.mxu0 %v159
    %v1080 = vpop.f32.mrf.mxu0
    %v1081 = vadd.f32 %v1068, %v1080
    %v1082 = vpop.f32.mrf.mxu0
    %1083 = vdwg.mxu0
    %1084 = vmatpush.bf16.msra.mxu0 %v811
    %1085 = vmatpush.bf16.msra.mxu0 %v807
    %1086 = vmatpush.bf16.msra.mxu0 %v803
    %1087 = vmatpush.bf16.msra.mxu0 %v799
    %1088 = vmatpush.bf16.msra.mxu0 %v795
    %1089 = vmatpush.bf16.msra.mxu0 %v791
    %1090 = vmatpush.bf16.msra.mxu0 %v787
    %1091 = vmatpush.bf16.msra.mxu0 %v783
    %1092 = vmatmul.bf16.gmra.mxu0 %v160
    %v1093 = vpop.f32.mrf.mxu0
    %v1094 = vadd.f32 %v1081, %v1093
    %v1095 = vpop.f32.mrf.mxu0
    %1096 = vdwg.mxu0
    %1097 = vmatpush.bf16.msra.mxu0 %v716
    %1098 = vmatpush.bf16.msra.mxu0 %v712
    %1099 = vmatpush.bf16.msra.mxu0 %v708
    %1100 = vmatpush.bf16.msra.mxu0 %v704
    %1101 = vmatpush.bf16.msra.mxu0 %v700
    %1102 = vmatpush.bf16.msra.mxu0 %v696
    %1103 = vmatpush.bf16.msra.mxu0 %v692
    %1104 = vmatpush.bf16.msra.mxu0 %v688
    %1105 = vmatmul.bf16.gmra.mxu0 %v157
    %v1106 = vpop.f32.mrf.mxu0
    %v1107 = vadd.f32 %v300, %v1106
    %v1108 = vpop.f32.mrf.mxu0
    %1109 = vdwg.mxu0
    %1110 = vmatpush.bf16.msra.mxu0 %v748
    %1111 = vmatpush.bf16.msra.mxu0 %v744
    %1112 = vmatpush.bf16.msra.mxu0 %v740
    %1113 = vmatpush.bf16.msra.mxu0 %v736
    %1114 = vmatpush.bf16.msra.mxu0 %v732
    %1115 = vmatpush.bf16.msra.mxu0 %v728
    %1116 = vmatpush.bf16.msra.mxu0 %v724
    %1117 = vmatpush.bf16.msra.mxu0 %v720
    %1118 = vmatmul.bf16.gmra.mxu0 %v158
    %v1119 = vpop.f32.mrf.mxu0
    %v1120 = vadd.f32 %v1107, %v1119
    %v1121 = vpop.f32.mrf.mxu0
    %1122 = vdwg.mxu0
    %1123 = vmatpush.bf16.msra.mxu0 %v780
    %1124 = vmatpush.bf16.msra.mxu0 %v776
    %1125 = vmatpush.bf16.msra.mxu0 %v772
    %1126 = vmatpush.bf16.msra.mxu0 %v768
    %1127 = vmatpush.bf16.msra.mxu0 %v764
    %1128 = vmatpush.bf16.msra.mxu0 %v760
    %1129 = vmatpush.bf16.msra.mxu0 %v756
    %1130 = vmatpush.bf16.msra.mxu0 %v752
    %1131 = vmatmul.bf16.gmra.mxu0 %v159
    %v1132 = vpop.f32.mrf.mxu0
    %v1133 = vadd.f32 %v1120, %v1132
    %v1134 = vpop.f32.mrf.mxu0
    %1135 = vdwg.mxu0
    %1136 = vmatpush.bf16.msra.mxu0 %v812
    %1137 = vmatpush.bf16.msra.mxu0 %v808
    %1138 = vmatpush.bf16.msra.mxu0 %v804
    %1139 = vmatpush.bf16.msra.mxu0 %v800
    %1140 = vmatpush.bf16.msra.mxu0 %v796
    %1141 = vmatpush.bf16.msra.mxu0 %v792
    %1142 = vmatpush.bf16.msra.mxu0 %v788
    %1143 = vmatpush.bf16.msra.mxu0 %v784
    %1144 = vmatmul.bf16.gmra.mxu0 %v160
    %v1145 = vpop.f32.mrf.mxu0
    %v1146 = vadd.f32 %v1133, %v1145
    %v1147 = vpop.f32.mrf.mxu0
    %1148 = vdwg.mxu0
    %v1149 = vmax.f32 %v990, 0.0
    %v1150 = vmax.f32 %v1042, 0.0
    %v1151 = vmax.f32 %v1094, 0.0
    %v1152 = vmax.f32 %v1146, 0.0
    %v1153 = vpack.c.bf16 %v1149, %v1149
    %v1154 = vpack.c.bf16 %v1150, %v1150
    %v1155 = vpack.c.bf16 %v1151, %v1151
    %v1156 = vpack.c.bf16 %v1152, %v1152
    %v1157 = vld [vmem:[#allocation5] sm:$0xff]
    %v1158 = vld [vmem:[#allocation5 + $0x8] sm:$0xff]
    %v1159 = vld [vmem:[#allocation5 + $0x10] sm:$0xff]
    %v1160 = vld [vmem:[#allocation5 + $0x18] sm:$0xff]
    %v1161 = vld [vmem:[#allocation5 + $0x20] sm:$0xff]
    %v1162 = vld [vmem:[#allocation5 + $0x28] sm:$0xff]
    %v1163 = vld [vmem:[#allocation5 + $0x30] sm:$0xff]
    %v1164 = vld [vmem:[#allocation5 + $0x38] sm:$0xff]
    %v1165 = vld [vmem:[#allocation5 + $0x40] sm:$0xff]
    %v1166 = vld [vmem:[#allocation5 + $0x48] sm:$0xff]
    %v1167 = vld [vmem:[#allocation5 + $0x50] sm:$0xff]
    %v1168 = vld [vmem:[#allocation5 + $0x58] sm:$0xff]
    %v1169 = vld [vmem:[#allocation5 + $0x60] sm:$0xff]
    %v1170 = vld [vmem:[#allocation5 + $0x68] sm:$0xff]
    %v1171 = vld [vmem:[#allocation5 + $0x70] sm:$0xff]
    %v1172 = vld [vmem:[#allocation5 + $0x78] sm:$0xff]
    %v1173 = vld [vmem:[#allocation5 + $0x80] sm:$0xff]
    %v1174 = vld [vmem:[#allocation5 + $0x88] sm:$0xff]
    %v1175 = vld [vmem:[#allocation5 + $0x90] sm:$0xff]
    %v1176 = vld [vmem:[#allocation5 + $0x98] sm:$0xff]
    %v1177 = vld [vmem:[#allocation5 + $0xa0] sm:$0xff]
    %v1178 = vld [vmem:[#allocation5 + $0xa8] sm:$0xff]
    %v1179 = vld [vmem:[#allocation5 + $0xb0] sm:$0xff]
    %v1180 = vld [vmem:[#allocation5 + $0xb8] sm:$0xff]
    %v1181 = vld [vmem:[#allocation5 + $0xc0] sm:$0xff]
    %v1182 = vld [vmem:[#allocation5 + $0xc8] sm:$0xff]
    %v1183 = vld [vmem:[#allocation5 + $0xd0] sm:$0xff]
    %v1184 = vld [vmem:[#allocation5 + $0xd8] sm:$0xff]
    %v1185 = vld [vmem:[#allocation5 + $0xe0] sm:$0xff]
    %v1186 = vld [vmem:[#allocation5 + $0xe8] sm:$0xff]
    %v1187 = vld [vmem:[#allocation5 + $0xf0] sm:$0xff]
    %v1188 = vld [vmem:[#allocation5 + $0xf8] sm:$0xff]
    %v1189 = vld [vmem:[#allocation5 + $0x100] sm:$0xff]
    %v1190 = vld [vmem:[#allocation5 + $0x108] sm:$0xff]
    %v1191 = vld [vmem:[#allocation5 + $0x110] sm:$0xff]
    %v1192 = vld [vmem:[#allocation5 + $0x118] sm:$0xff]
    %v1193 = vld [vmem:[#allocation5 + $0x120] sm:$0xff]
    %v1194 = vld [vmem:[#allocation5 + $0x128] sm:$0xff]
    %v1195 = vld [vmem:[#allocation5 + $0x130] sm:$0xff]
    %v1196 = vld [vmem:[#allocation5 + $0x138] sm:$0xff]
    %v1197 = vld [vmem:[#allocation5 + $0x140] sm:$0xff]
    %v1198 = vld [vmem:[#allocation5 + $0x148] sm:$0xff]
    %v1199 = vld [vmem:[#allocation5 + $0x150] sm:$0xff]
    %v1200 = vld [vmem:[#allocation5 + $0x158] sm:$0xff]
    %v1201 = vld [vmem:[#allocation5 + $0x160] sm:$0xff]
    %v1202 = vld [vmem:[#allocation5 + $0x168] sm:$0xff]
    %v1203 = vld [vmem:[#allocation5 + $0x170] sm:$0xff]
    %v1204 = vld [vmem:[#allocation5 + $0x178] sm:$0xff]
    %v1205 = vld [vmem:[#allocation5 + $0x180] sm:$0xff]
    %v1206 = vld [vmem:[#allocation5 + $0x188] sm:$0xff]
    %v1207 = vld [vmem:[#allocation5 + $0x190] sm:$0xff]
    %v1208 = vld [vmem:[#allocation5 + $0x198] sm:$0xff]
    %v1209 = vld [vmem:[#allocation5 + $0x1a0] sm:$0xff]
    %v1210 = vld [vmem:[#allocation5 + $0x1a8] sm:$0xff]
    %v1211 = vld [vmem:[#allocation5 + $0x1b0] sm:$0xff]
    %v1212 = vld [vmem:[#allocation5 + $0x1b8] sm:$0xff]
    %v1213 = vld [vmem:[#allocation5 + $0x1c0] sm:$0xff]
    %v1214 = vld [vmem:[#allocation5 + $0x1c8] sm:$0xff]
    %v1215 = vld [vmem:[#allocation5 + $0x1d0] sm:$0xff]
    %v1216 = vld [vmem:[#allocation5 + $0x1d8] sm:$0xff]
    %v1217 = vld [vmem:[#allocation5 + $0x1e0] sm:$0xff]
    %v1218 = vld [vmem:[#allocation5 + $0x1e8] sm:$0xff]
    %v1219 = vld [vmem:[#allocation5 + $0x1f0] sm:$0xff]
    %v1220 = vld [vmem:[#allocation5 + $0x1f8] sm:$0xff]
    %v1221 = vld [vmem:[#allocation5 + $0x200] sm:$0xff]
    %v1222 = vld [vmem:[#allocation5 + $0x208] sm:$0xff]
    %v1223 = vld [vmem:[#allocation5 + $0x210] sm:$0xff]
    %v1224 = vld [vmem:[#allocation5 + $0x218] sm:$0xff]
    %v1225 = vld [vmem:[#allocation5 + $0x220] sm:$0xff]
    %v1226 = vld [vmem:[#allocation5 + $0x228] sm:$0xff]
    %v1227 = vld [vmem:[#allocation5 + $0x230] sm:$0xff]
    %v1228 = vld [vmem:[#allocation5 + $0x238] sm:$0xff]
    %v1229 = vld [vmem:[#allocation5 + $0x240] sm:$0xff]
    %v1230 = vld [vmem:[#allocation5 + $0x248] sm:$0xff]
    %v1231 = vld [vmem:[#allocation5 + $0x250] sm:$0xff]
    %v1232 = vld [vmem:[#allocation5 + $0x258] sm:$0xff]
    %v1233 = vld [vmem:[#allocation5 + $0x260] sm:$0xff]
    %v1234 = vld [vmem:[#allocation5 + $0x268] sm:$0xff]
    %v1235 = vld [vmem:[#allocation5 + $0x270] sm:$0xff]
    %v1236 = vld [vmem:[#allocation5 + $0x278] sm:$0xff]
    %v1237 = vld [vmem:[#allocation5 + $0x280] sm:$0xff]
    %v1238 = vld [vmem:[#allocation5 + $0x288] sm:$0xff]
    %v1239 = vld [vmem:[#allocation5 + $0x290] sm:$0xff]
    %v1240 = vld [vmem:[#allocation5 + $0x298] sm:$0xff]
    %v1241 = vld [vmem:[#allocation5 + $0x2a0] sm:$0xff]
    %v1242 = vld [vmem:[#allocation5 + $0x2a8] sm:$0xff]
    %v1243 = vld [vmem:[#allocation5 + $0x2b0] sm:$0xff]
    %v1244 = vld [vmem:[#allocation5 + $0x2b8] sm:$0xff]
    %v1245 = vld [vmem:[#allocation5 + $0x2c0] sm:$0xff]
    %v1246 = vld [vmem:[#allocation5 + $0x2c8] sm:$0xff]
    %v1247 = vld [vmem:[#allocation5 + $0x2d0] sm:$0xff]
    %v1248 = vld [vmem:[#allocation5 + $0x2d8] sm:$0xff]
    %v1249 = vld [vmem:[#allocation5 + $0x2e0] sm:$0xff]
    %v1250 = vld [vmem:[#allocation5 + $0x2e8] sm:$0xff]
    %v1251 = vld [vmem:[#allocation5 + $0x2f0] sm:$0xff]
    %v1252 = vld [vmem:[#allocation5 + $0x2f8] sm:$0xff]
    %v1253 = vld [vmem:[#allocation5 + $0x300] sm:$0xff]
    %v1254 = vld [vmem:[#allocation5 + $0x308] sm:$0xff]
    %v1255 = vld [vmem:[#allocation5 + $0x310] sm:$0xff]
    %v1256 = vld [vmem:[#allocation5 + $0x318] sm:$0xff]
    %v1257 = vld [vmem:[#allocation5 + $0x320] sm:$0xff]
    %v1258 = vld [vmem:[#allocation5 + $0x328] sm:$0xff]
    %v1259 = vld [vmem:[#allocation5 + $0x330] sm:$0xff]
    %v1260 = vld [vmem:[#allocation5 + $0x338] sm:$0xff]
    %v1261 = vld [vmem:[#allocation5 + $0x340] sm:$0xff]
    %v1262 = vld [vmem:[#allocation5 + $0x348] sm:$0xff]
    %v1263 = vld [vmem:[#allocation5 + $0x350] sm:$0xff]
    %v1264 = vld [vmem:[#allocation5 + $0x358] sm:$0xff]
    %v1265 = vld [vmem:[#allocation5 + $0x360] sm:$0xff]
    %v1266 = vld [vmem:[#allocation5 + $0x368] sm:$0xff]
    %v1267 = vld [vmem:[#allocation5 + $0x370] sm:$0xff]
    %v1268 = vld [vmem:[#allocation5 + $0x378] sm:$0xff]
    %v1269 = vld [vmem:[#allocation5 + $0x380] sm:$0xff]
    %v1270 = vld [vmem:[#allocation5 + $0x388] sm:$0xff]
    %v1271 = vld [vmem:[#allocation5 + $0x390] sm:$0xff]
    %v1272 = vld [vmem:[#allocation5 + $0x398] sm:$0xff]
    %v1273 = vld [vmem:[#allocation5 + $0x3a0] sm:$0xff]
    %v1274 = vld [vmem:[#allocation5 + $0x3a8] sm:$0xff]
    %v1275 = vld [vmem:[#allocation5 + $0x3b0] sm:$0xff]
    %v1276 = vld [vmem:[#allocation5 + $0x3b8] sm:$0xff]
    %v1277 = vld [vmem:[#allocation5 + $0x3c0] sm:$0xff]
    %v1278 = vld [vmem:[#allocation5 + $0x3c8] sm:$0xff]
    %v1279 = vld [vmem:[#allocation5 + $0x3d0] sm:$0xff]
    %v1280 = vld [vmem:[#allocation5 + $0x3d8] sm:$0xff]
    %v1281 = vld [vmem:[#allocation5 + $0x3e0] sm:$0xff]
    %v1282 = vld [vmem:[#allocation5 + $0x3e8] sm:$0xff]
    %v1283 = vld [vmem:[#allocation5 + $0x3f0] sm:$0xff]
    %v1284 = vld [vmem:[#allocation5 + $0x3f8] sm:$0xff]
    %v1285 = vperm.slane %v87, 2
    %v1286 = vperm.slane %v87, 6
    %v1287 = vperm.slane %v88, 2
    %v1288 = vperm.slane %v88, 6
    %v1293 = vperm.slane %v1285, 2
    %v1294 = vperm.slane %v1286, 2
    %v1295 = vperm.slane %v1287, 2
    %v1296 = vperm.slane %v1288, 2
    %v1425 = vunpack.c.l.b16 %v1157
    %v1426 = vunpack.c.h.b16 %v1157
    %v1427 = vunpack.c.l.b16 %v1158
    %v1428 = vunpack.c.h.b16 %v1158
    %v1429 = vunpack.c.l.b16 %v1159
    %v1430 = vunpack.c.h.b16 %v1159
    %v1431 = vunpack.c.l.b16 %v1160
    %v1432 = vunpack.c.h.b16 %v1160
    %v1433 = vunpack.c.l.b16 %v1161
    %v1434 = vunpack.c.h.b16 %v1161
    %v1435 = vunpack.c.l.b16 %v1162
    %v1436 = vunpack.c.h.b16 %v1162
    %v1437 = vunpack.c.l.b16 %v1163
    %v1438 = vunpack.c.h.b16 %v1163
    %v1439 = vunpack.c.l.b16 %v1164
    %v1440 = vunpack.c.h.b16 %v1164
    %v1441 = vunpack.c.l.b16 %v1165
    %v1442 = vunpack.c.h.b16 %v1165
    %v1443 = vunpack.c.l.b16 %v1166
    %v1444 = vunpack.c.h.b16 %v1166
    %v1445 = vunpack.c.l.b16 %v1167
    %v1446 = vunpack.c.h.b16 %v1167
    %v1447 = vunpack.c.l.b16 %v1168
    %v1448 = vunpack.c.h.b16 %v1168
    %v1449 = vunpack.c.l.b16 %v1169
    %v1450 = vunpack.c.h.b16 %v1169
    %v1451 = vunpack.c.l.b16 %v1170
    %v1452 = vunpack.c.h.b16 %v1170
    %v1453 = vunpack.c.l.b16 %v1171
    %v1454 = vunpack.c.h.b16 %v1171
    %v1455 = vunpack.c.l.b16 %v1172
    %v1456 = vunpack.c.h.b16 %v1172
    %v1457 = vunpack.c.l.b16 %v1173
    %v1458 = vunpack.c.h.b16 %v1173
    %v1459 = vunpack.c.l.b16 %v1174
    %v1460 = vunpack.c.h.b16 %v1174
    %v1461 = vunpack.c.l.b16 %v1175
    %v1462 = vunpack.c.h.b16 %v1175
    %v1463 = vunpack.c.l.b16 %v1176
    %v1464 = vunpack.c.h.b16 %v1176
    %v1465 = vunpack.c.l.b16 %v1177
    %v1466 = vunpack.c.h.b16 %v1177
    %v1467 = vunpack.c.l.b16 %v1178
    %v1468 = vunpack.c.h.b16 %v1178
    %v1469 = vunpack.c.l.b16 %v1179
    %v1470 = vunpack.c.h.b16 %v1179
    %v1471 = vunpack.c.l.b16 %v1180
    %v1472 = vunpack.c.h.b16 %v1180
    %v1473 = vunpack.c.l.b16 %v1181
    %v1474 = vunpack.c.h.b16 %v1181
    %v1475 = vunpack.c.l.b16 %v1182
    %v1476 = vunpack.c.h.b16 %v1182
    %v1477 = vunpack.c.l.b16 %v1183
    %v1478 = vunpack.c.h.b16 %v1183
    %v1479 = vunpack.c.l.b16 %v1184
    %v1480 = vunpack.c.h.b16 %v1184
    %v1481 = vunpack.c.l.b16 %v1185
    %v1482 = vunpack.c.h.b16 %v1185
    %v1483 = vunpack.c.l.b16 %v1186
    %v1484 = vunpack.c.h.b16 %v1186
    %v1485 = vunpack.c.l.b16 %v1187
    %v1486 = vunpack.c.h.b16 %v1187
    %v1487 = vunpack.c.l.b16 %v1188
    %v1488 = vunpack.c.h.b16 %v1188
    %v1489 = vunpack.c.l.b16 %v1189
    %v1490 = vunpack.c.h.b16 %v1189
    %v1491 = vunpack.c.l.b16 %v1190
    %v1492 = vunpack.c.h.b16 %v1190
    %v1493 = vunpack.c.l.b16 %v1191
    %v1494 = vunpack.c.h.b16 %v1191
    %v1495 = vunpack.c.l.b16 %v1192
    %v1496 = vunpack.c.h.b16 %v1192
    %v1497 = vunpack.c.l.b16 %v1193
    %v1498 = vunpack.c.h.b16 %v1193
    %v1499 = vunpack.c.l.b16 %v1194
    %v1500 = vunpack.c.h.b16 %v1194
    %v1501 = vunpack.c.l.b16 %v1195
    %v1502 = vunpack.c.h.b16 %v1195
    %v1503 = vunpack.c.l.b16 %v1196
    %v1504 = vunpack.c.h.b16 %v1196
    %v1505 = vunpack.c.l.b16 %v1197
    %v1506 = vunpack.c.h.b16 %v1197
    %v1507 = vunpack.c.l.b16 %v1198
    %v1508 = vunpack.c.h.b16 %v1198
    %v1509 = vunpack.c.l.b16 %v1199
    %v1510 = vunpack.c.h.b16 %v1199
    %v1511 = vunpack.c.l.b16 %v1200
    %v1512 = vunpack.c.h.b16 %v1200
    %v1513 = vunpack.c.l.b16 %v1201
    %v1514 = vunpack.c.h.b16 %v1201
    %v1515 = vunpack.c.l.b16 %v1202
    %v1516 = vunpack.c.h.b16 %v1202
    %v1517 = vunpack.c.l.b16 %v1203
    %v1518 = vunpack.c.h.b16 %v1203
    %v1519 = vunpack.c.l.b16 %v1204
    %v1520 = vunpack.c.h.b16 %v1204
    %v1521 = vunpack.c.l.b16 %v1205
    %v1522 = vunpack.c.h.b16 %v1205
    %v1523 = vunpack.c.l.b16 %v1206
    %v1524 = vunpack.c.h.b16 %v1206
    %v1525 = vunpack.c.l.b16 %v1207
    %v1526 = vunpack.c.h.b16 %v1207
    %v1527 = vunpack.c.l.b16 %v1208
    %v1528 = vunpack.c.h.b16 %v1208
    %v1529 = vunpack.c.l.b16 %v1209
    %v1530 = vunpack.c.h.b16 %v1209
    %v1531 = vunpack.c.l.b16 %v1210
    %v1532 = vunpack.c.h.b16 %v1210
    %v1533 = vunpack.c.l.b16 %v1211
    %v1534 = vunpack.c.h.b16 %v1211
    %v1535 = vunpack.c.l.b16 %v1212
    %v1536 = vunpack.c.h.b16 %v1212
    %v1537 = vunpack.c.l.b16 %v1213
    %v1538 = vunpack.c.h.b16 %v1213
    %v1539 = vunpack.c.l.b16 %v1214
    %v1540 = vunpack.c.h.b16 %v1214
    %v1541 = vunpack.c.l.b16 %v1215
    %v1542 = vunpack.c.h.b16 %v1215
    %v1543 = vunpack.c.l.b16 %v1216
    %v1544 = vunpack.c.h.b16 %v1216
    %v1545 = vunpack.c.l.b16 %v1217
    %v1546 = vunpack.c.h.b16 %v1217
    %v1547 = vunpack.c.l.b16 %v1218
    %v1548 = vunpack.c.h.b16 %v1218
    %v1549 = vunpack.c.l.b16 %v1219
    %v1550 = vunpack.c.h.b16 %v1219
    %v1551 = vunpack.c.l.b16 %v1220
    %v1552 = vunpack.c.h.b16 %v1220
    %v1553 = vunpack.c.l.b16 %v1221
    %v1554 = vunpack.c.h.b16 %v1221
    %v1555 = vunpack.c.l.b16 %v1222
    %v1556 = vunpack.c.h.b16 %v1222
    %v1557 = vunpack.c.l.b16 %v1223
    %v1558 = vunpack.c.h.b16 %v1223
    %v1559 = vunpack.c.l.b16 %v1224
    %v1560 = vunpack.c.h.b16 %v1224
    %v1561 = vunpack.c.l.b16 %v1225
    %v1562 = vunpack.c.h.b16 %v1225
    %v1563 = vunpack.c.l.b16 %v1226
    %v1564 = vunpack.c.h.b16 %v1226
    %v1565 = vunpack.c.l.b16 %v1227
    %v1566 = vunpack.c.h.b16 %v1227
    %v1567 = vunpack.c.l.b16 %v1228
    %v1568 = vunpack.c.h.b16 %v1228
    %v1569 = vunpack.c.l.b16 %v1229
    %v1570 = vunpack.c.h.b16 %v1229
    %v1571 = vunpack.c.l.b16 %v1230
    %v1572 = vunpack.c.h.b16 %v1230
    %v1573 = vunpack.c.l.b16 %v1231
    %v1574 = vunpack.c.h.b16 %v1231
    %v1575 = vunpack.c.l.b16 %v1232
    %v1576 = vunpack.c.h.b16 %v1232
    %v1577 = vunpack.c.l.b16 %v1233
    %v1578 = vunpack.c.h.b16 %v1233
    %v1579 = vunpack.c.l.b16 %v1234
    %v1580 = vunpack.c.h.b16 %v1234
    %v1581 = vunpack.c.l.b16 %v1235
    %v1582 = vunpack.c.h.b16 %v1235
    %v1583 = vunpack.c.l.b16 %v1236
    %v1584 = vunpack.c.h.b16 %v1236
    %v1585 = vunpack.c.l.b16 %v1237
    %v1586 = vunpack.c.h.b16 %v1237
    %v1587 = vunpack.c.l.b16 %v1238
    %v1588 = vunpack.c.h.b16 %v1238
    %v1589 = vunpack.c.l.b16 %v1239
    %v1590 = vunpack.c.h.b16 %v1239
    %v1591 = vunpack.c.l.b16 %v1240
    %v1592 = vunpack.c.h.b16 %v1240
    %v1593 = vunpack.c.l.b16 %v1241
    %v1594 = vunpack.c.h.b16 %v1241
    %v1595 = vunpack.c.l.b16 %v1242
    %v1596 = vunpack.c.h.b16 %v1242
    %v1597 = vunpack.c.l.b16 %v1243
    %v1598 = vunpack.c.h.b16 %v1243
    %v1599 = vunpack.c.l.b16 %v1244
    %v1600 = vunpack.c.h.b16 %v1244
    %v1601 = vunpack.c.l.b16 %v1245
    %v1602 = vunpack.c.h.b16 %v1245
    %v1603 = vunpack.c.l.b16 %v1246
    %v1604 = vunpack.c.h.b16 %v1246
    %v1605 = vunpack.c.l.b16 %v1247
    %v1606 = vunpack.c.h.b16 %v1247
    %v1607 = vunpack.c.l.b16 %v1248
    %v1608 = vunpack.c.h.b16 %v1248
    %v1609 = vunpack.c.l.b16 %v1249
    %v1610 = vunpack.c.h.b16 %v1249
    %v1611 = vunpack.c.l.b16 %v1250
    %v1612 = vunpack.c.h.b16 %v1250
    %v1613 = vunpack.c.l.b16 %v1251
    %v1614 = vunpack.c.h.b16 %v1251
    %v1615 = vunpack.c.l.b16 %v1252
    %v1616 = vunpack.c.h.b16 %v1252
    %v1617 = vunpack.c.l.b16 %v1253
    %v1618 = vunpack.c.h.b16 %v1253
    %v1619 = vunpack.c.l.b16 %v1254
    %v1620 = vunpack.c.h.b16 %v1254
    %v1621 = vunpack.c.l.b16 %v1255
    %v1622 = vunpack.c.h.b16 %v1255
    %v1623 = vunpack.c.l.b16 %v1256
    %v1624 = vunpack.c.h.b16 %v1256
    %v1625 = vunpack.c.l.b16 %v1257
    %v1626 = vunpack.c.h.b16 %v1257
    %v1627 = vunpack.c.l.b16 %v1258
    %v1628 = vunpack.c.h.b16 %v1258
    %v1629 = vunpack.c.l.b16 %v1259
    %v1630 = vunpack.c.h.b16 %v1259
    %v1631 = vunpack.c.l.b16 %v1260
    %v1632 = vunpack.c.h.b16 %v1260
    %v1633 = vunpack.c.l.b16 %v1261
    %v1634 = vunpack.c.h.b16 %v1261
    %v1635 = vunpack.c.l.b16 %v1262
    %v1636 = vunpack.c.h.b16 %v1262
    %v1637 = vunpack.c.l.b16 %v1263
    %v1638 = vunpack.c.h.b16 %v1263
    %v1639 = vunpack.c.l.b16 %v1264
    %v1640 = vunpack.c.h.b16 %v1264
    %v1641 = vunpack.c.l.b16 %v1265
    %v1642 = vunpack.c.h.b16 %v1265
    %v1643 = vunpack.c.l.b16 %v1266
    %v1644 = vunpack.c.h.b16 %v1266
    %v1645 = vunpack.c.l.b16 %v1267
    %v1646 = vunpack.c.h.b16 %v1267
    %v1647 = vunpack.c.l.b16 %v1268
    %v1648 = vunpack.c.h.b16 %v1268
    %v1649 = vunpack.c.l.b16 %v1269
    %v1650 = vunpack.c.h.b16 %v1269
    %v1651 = vunpack.c.l.b16 %v1270
    %v1652 = vunpack.c.h.b16 %v1270
    %v1653 = vunpack.c.l.b16 %v1271
    %v1654 = vunpack.c.h.b16 %v1271
    %v1655 = vunpack.c.l.b16 %v1272
    %v1656 = vunpack.c.h.b16 %v1272
    %v1657 = vunpack.c.l.b16 %v1273
    %v1658 = vunpack.c.h.b16 %v1273
    %v1659 = vunpack.c.l.b16 %v1274
    %v1660 = vunpack.c.h.b16 %v1274
    %v1661 = vunpack.c.l.b16 %v1275
    %v1662 = vunpack.c.h.b16 %v1275
    %v1663 = vunpack.c.l.b16 %v1276
    %v1664 = vunpack.c.h.b16 %v1276
    %v1665 = vunpack.c.l.b16 %v1277
    %v1666 = vunpack.c.h.b16 %v1277
    %v1667 = vunpack.c.l.b16 %v1278
    %v1668 = vunpack.c.h.b16 %v1278
    %v1669 = vunpack.c.l.b16 %v1279
    %v1670 = vunpack.c.h.b16 %v1279
    %v1671 = vunpack.c.l.b16 %v1280
    %v1672 = vunpack.c.h.b16 %v1280
    %v1673 = vunpack.c.l.b16 %v1281
    %v1674 = vunpack.c.h.b16 %v1281
    %v1675 = vunpack.c.l.b16 %v1282
    %v1676 = vunpack.c.h.b16 %v1282
    %v1677 = vunpack.c.l.b16 %v1283
    %v1678 = vunpack.c.h.b16 %v1283
    %v1679 = vunpack.c.l.b16 %v1284
    %v1680 = vunpack.c.h.b16 %v1284
    %v1681 = vpack.c.b16 %v1429, %v1425
    %v1682 = vpack.c.b16 %v1430, %v1426
    %v1683 = vpack.c.b16 %v1431, %v1427
    %v1684 = vpack.c.b16 %v1432, %v1428
    %v1685 = vpack.c.b16 %v1437, %v1433
    %v1686 = vpack.c.b16 %v1438, %v1434
    %v1687 = vpack.c.b16 %v1439, %v1435
    %v1688 = vpack.c.b16 %v1440, %v1436
    %v1689 = vpack.c.b16 %v1445, %v1441
    %v1690 = vpack.c.b16 %v1446, %v1442
    %v1691 = vpack.c.b16 %v1447, %v1443
    %v1692 = vpack.c.b16 %v1448, %v1444
    %v1693 = vpack.c.b16 %v1453, %v1449
    %v1694 = vpack.c.b16 %v1454, %v1450
    %v1695 = vpack.c.b16 %v1455, %v1451
    %v1696 = vpack.c.b16 %v1456, %v1452
    %v1697 = vpack.c.b16 %v1461, %v1457
    %v1698 = vpack.c.b16 %v1462, %v1458
    %v1699 = vpack.c.b16 %v1463, %v1459
    %v1700 = vpack.c.b16 %v1464, %v1460
    %v1701 = vpack.c.b16 %v1469, %v1465
    %v1702 = vpack.c.b16 %v1470, %v1466
    %v1703 = vpack.c.b16 %v1471, %v1467
    %v1704 = vpack.c.b16 %v1472, %v1468
    %v1705 = vpack.c.b16 %v1477, %v1473
    %v1706 = vpack.c.b16 %v1478, %v1474
    %v1707 = vpack.c.b16 %v1479, %v1475
    %v1708 = vpack.c.b16 %v1480, %v1476
    %v1709 = vpack.c.b16 %v1485, %v1481
    %v1710 = vpack.c.b16 %v1486, %v1482
    %v1711 = vpack.c.b16 %v1487, %v1483
    %v1712 = vpack.c.b16 %v1488, %v1484
    %v1713 = vpack.c.b16 %v1493, %v1489
    %v1714 = vpack.c.b16 %v1494, %v1490
    %v1715 = vpack.c.b16 %v1495, %v1491
    %v1716 = vpack.c.b16 %v1496, %v1492
    %v1717 = vpack.c.b16 %v1501, %v1497
    %v1718 = vpack.c.b16 %v1502, %v1498
    %v1719 = vpack.c.b16 %v1503, %v1499
    %v1720 = vpack.c.b16 %v1504, %v1500
    %v1721 = vpack.c.b16 %v1509, %v1505
    %v1722 = vpack.c.b16 %v1510, %v1506
    %v1723 = vpack.c.b16 %v1511, %v1507
    %v1724 = vpack.c.b16 %v1512, %v1508
    %v1725 = vpack.c.b16 %v1517, %v1513
    %v1726 = vpack.c.b16 %v1518, %v1514
    %v1727 = vpack.c.b16 %v1519, %v1515
    %v1728 = vpack.c.b16 %v1520, %v1516
    %v1729 = vpack.c.b16 %v1525, %v1521
    %v1730 = vpack.c.b16 %v1526, %v1522
    %v1731 = vpack.c.b16 %v1527, %v1523
    %v1732 = vpack.c.b16 %v1528, %v1524
    %v1733 = vpack.c.b16 %v1533, %v1529
    %v1734 = vpack.c.b16 %v1534, %v1530
    %v1735 = vpack.c.b16 %v1535, %v1531
    %v1736 = vpack.c.b16 %v1536, %v1532
    %v1737 = vpack.c.b16 %v1541, %v1537
    %v1738 = vpack.c.b16 %v1542, %v1538
    %v1739 = vpack.c.b16 %v1543, %v1539
    %v1740 = vpack.c.b16 %v1544, %v1540
    %v1741 = vpack.c.b16 %v1549, %v1545
    %v1742 = vpack.c.b16 %v1550, %v1546
    %v1743 = vpack.c.b16 %v1551, %v1547
    %v1744 = vpack.c.b16 %v1552, %v1548
    %v1745 = vpack.c.b16 %v1557, %v1553
    %v1746 = vpack.c.b16 %v1558, %v1554
    %v1747 = vpack.c.b16 %v1559, %v1555
    %v1748 = vpack.c.b16 %v1560, %v1556
    %v1749 = vpack.c.b16 %v1565, %v1561
    %v1750 = vpack.c.b16 %v1566, %v1562
    %v1751 = vpack.c.b16 %v1567, %v1563
    %v1752 = vpack.c.b16 %v1568, %v1564
    %v1753 = vpack.c.b16 %v1573, %v1569
    %v1754 = vpack.c.b16 %v1574, %v1570
    %v1755 = vpack.c.b16 %v1575, %v1571
    %v1756 = vpack.c.b16 %v1576, %v1572
    %v1757 = vpack.c.b16 %v1581, %v1577
    %v1758 = vpack.c.b16 %v1582, %v1578
    %v1759 = vpack.c.b16 %v1583, %v1579
    %v1760 = vpack.c.b16 %v1584, %v1580
    %v1761 = vpack.c.b16 %v1589, %v1585
    %v1762 = vpack.c.b16 %v1590, %v1586
    %v1763 = vpack.c.b16 %v1591, %v1587
    %v1764 = vpack.c.b16 %v1592, %v1588
    %v1765 = vpack.c.b16 %v1597, %v1593
    %v1766 = vpack.c.b16 %v1598, %v1594
    %v1767 = vpack.c.b16 %v1599, %v1595
    %v1768 = vpack.c.b16 %v1600, %v1596
    %v1769 = vpack.c.b16 %v1605, %v1601
    %v1770 = vpack.c.b16 %v1606, %v1602
    %v1771 = vpack.c.b16 %v1607, %v1603
    %v1772 = vpack.c.b16 %v1608, %v1604
    %v1773 = vpack.c.b16 %v1613, %v1609
    %v1774 = vpack.c.b16 %v1614, %v1610
    %v1775 = vpack.c.b16 %v1615, %v1611
    %v1776 = vpack.c.b16 %v1616, %v1612
    %v1777 = vpack.c.b16 %v1621, %v1617
    %v1778 = vpack.c.b16 %v1622, %v1618
    %v1779 = vpack.c.b16 %v1623, %v1619
    %v1780 = vpack.c.b16 %v1624, %v1620
    %v1781 = vpack.c.b16 %v1629, %v1625
    %v1782 = vpack.c.b16 %v1630, %v1626
    %v1783 = vpack.c.b16 %v1631, %v1627
    %v1784 = vpack.c.b16 %v1632, %v1628
    %v1785 = vpack.c.b16 %v1637, %v1633
    %v1786 = vpack.c.b16 %v1638, %v1634
    %v1787 = vpack.c.b16 %v1639, %v1635
    %v1788 = vpack.c.b16 %v1640, %v1636
    %v1789 = vpack.c.b16 %v1645, %v1641
    %v1790 = vpack.c.b16 %v1646, %v1642
    %v1791 = vpack.c.b16 %v1647, %v1643
    %v1792 = vpack.c.b16 %v1648, %v1644
    %v1793 = vpack.c.b16 %v1653, %v1649
    %v1794 = vpack.c.b16 %v1654, %v1650
    %v1795 = vpack.c.b16 %v1655, %v1651
    %v1796 = vpack.c.b16 %v1656, %v1652
    %v1797 = vpack.c.b16 %v1661, %v1657
    %v1798 = vpack.c.b16 %v1662, %v1658
    %v1799 = vpack.c.b16 %v1663, %v1659
    %v1800 = vpack.c.b16 %v1664, %v1660
    %v1801 = vpack.c.b16 %v1669, %v1665
    %v1802 = vpack.c.b16 %v1670, %v1666
    %v1803 = vpack.c.b16 %v1671, %v1667
    %v1804 = vpack.c.b16 %v1672, %v1668
    %v1805 = vpack.c.b16 %v1677, %v1673
    %v1806 = vpack.c.b16 %v1678, %v1674
    %v1807 = vpack.c.b16 %v1679, %v1675
    %v1808 = vpack.c.b16 %v1680, %v1676
    %1937 = vmatpush.bf16.msra.mxu0 %v1709
    %1938 = vmatpush.bf16.msra.mxu0 %v1705
    %1939 = vmatpush.bf16.msra.mxu0 %v1701
    %1940 = vmatpush.bf16.msra.mxu0 %v1697
    %1941 = vmatpush.bf16.msra.mxu0 %v1693
    %1942 = vmatpush.bf16.msra.mxu0 %v1689
    %1943 = vmatpush.bf16.msra.mxu0 %v1685
    %1944 = vmatpush.bf16.msra.mxu0 %v1681
    %1945 = vmatmul.bf16.gmra.mxu0 %v1153
    %v1946 = vpop.f32.mrf.mxu0
    %v1947 = vadd.f32 %v1293, %v1946
    %v1948 = vpop.f32.mrf.mxu0
    %1949 = vdwg.mxu0
    %1950 = vmatpush.bf16.msra.mxu0 %v1741
    %1951 = vmatpush.bf16.msra.mxu0 %v1737
    %1952 = vmatpush.bf16.msra.mxu0 %v1733
    %1953 = vmatpush.bf16.msra.mxu0 %v1729
    %1954 = vmatpush.bf16.msra.mxu0 %v1725
    %1955 = vmatpush.bf16.msra.mxu0 %v1721
    %1956 = vmatpush.bf16.msra.mxu0 %v1717
    %1957 = vmatpush.bf16.msra.mxu0 %v1713
    %1958 = vmatmul.bf16.gmra.mxu0 %v1154
    %v1959 = vpop.f32.mrf.mxu0
    %v1960 = vadd.f32 %v1947, %v1959
    %v1961 = vpop.f32.mrf.mxu0
    %1962 = vdwg.mxu0
    %1963 = vmatpush.bf16.msra.mxu0 %v1773
    %1964 = vmatpush.bf16.msra.mxu0 %v1769
    %1965 = vmatpush.bf16.msra.mxu0 %v1765
    %1966 = vmatpush.bf16.msra.mxu0 %v1761
    %1967 = vmatpush.bf16.msra.mxu0 %v1757
    %1968 = vmatpush.bf16.msra.mxu0 %v1753
    %1969 = vmatpush.bf16.msra.mxu0 %v1749
    %1970 = vmatpush.bf16.msra.mxu0 %v1745
    %1971 = vmatmul.bf16.gmra.mxu0 %v1155
    %v1972 = vpop.f32.mrf.mxu0
    %v1973 = vadd.f32 %v1960, %v1972
    %v1974 = vpop.f32.mrf.mxu0
    %1975 = vdwg.mxu0
    %1976 = vmatpush.bf16.msra.mxu0 %v1805
    %1977 = vmatpush.bf16.msra.mxu0 %v1801
    %1978 = vmatpush.bf16.msra.mxu0 %v1797
    %1979 = vmatpush.bf16.msra.mxu0 %v1793
    %1980 = vmatpush.bf16.msra.mxu0 %v1789
    %1981 = vmatpush.bf16.msra.mxu0 %v1785
    %1982 = vmatpush.bf16.msra.mxu0 %v1781
    %1983 = vmatpush.bf16.msra.mxu0 %v1777
    %1984 = vmatmul.bf16.gmra.mxu0 %v1156
    %v1985 = vpop.f32.mrf.mxu0
    %v1986 = vadd.f32 %v1973, %v1985
    %v1987 = vpop.f32.mrf.mxu0
    %1988 = vdwg.mxu0
    %1989 = vmatpush.bf16.msra.mxu0 %v1710
    %1990 = vmatpush.bf16.msra.mxu0 %v1706
    %1991 = vmatpush.bf16.msra.mxu0 %v1702
    %1992 = vmatpush.bf16.msra.mxu0 %v1698
    %1993 = vmatpush.bf16.msra.mxu0 %v1694
    %1994 = vmatpush.bf16.msra.mxu0 %v1690
    %1995 = vmatpush.bf16.msra.mxu0 %v1686
    %1996 = vmatpush.bf16.msra.mxu0 %v1682
    %1997 = vmatmul.bf16.gmra.mxu0 %v1153
    %v1998 = vpop.f32.mrf.mxu0
    %v1999 = vadd.f32 %v1294, %v1998
    %v2000 = vpop.f32.mrf.mxu0
    %2001 = vdwg.mxu0
    %2002 = vmatpush.bf16.msra.mxu0 %v1742
    %2003 = vmatpush.bf16.msra.mxu0 %v1738
    %2004 = vmatpush.bf16.msra.mxu0 %v1734
    %2005 = vmatpush.bf16.msra.mxu0 %v1730
    %2006 = vmatpush.bf16.msra.mxu0 %v1726
    %2007 = vmatpush.bf16.msra.mxu0 %v1722
    %2008 = vmatpush.bf16.msra.mxu0 %v1718
    %2009 = vmatpush.bf16.msra.mxu0 %v1714
    %2010 = vmatmul.bf16.gmra.mxu0 %v1154
    %v2011 = vpop.f32.mrf.mxu0
    %v2012 = vadd.f32 %v1999, %v2011
    %v2013 = vpop.f32.mrf.mxu0
    %2014 = vdwg.mxu0
    %2015 = vmatpush.bf16.msra.mxu0 %v1774
    %2016 = vmatpush.bf16.msra.mxu0 %v1770
    %2017 = vmatpush.bf16.msra.mxu0 %v1766
    %2018 = vmatpush.bf16.msra.mxu0 %v1762
    %2019 = vmatpush.bf16.msra.mxu0 %v1758
    %2020 = vmatpush.bf16.msra.mxu0 %v1754
    %2021 = vmatpush.bf16.msra.mxu0 %v1750
    %2022 = vmatpush.bf16.msra.mxu0 %v1746
    %2023 = vmatmul.bf16.gmra.mxu0 %v1155
    %v2024 = vpop.f32.mrf.mxu0
    %v2025 = vadd.f32 %v2012, %v2024
    %v2026 = vpop.f32.mrf.mxu0
    %2027 = vdwg.mxu0
    %2028 = vmatpush.bf16.msra.mxu0 %v1806
    %2029 = vmatpush.bf16.msra.mxu0 %v1802
    %2030 = vmatpush.bf16.msra.mxu0 %v1798
    %2031 = vmatpush.bf16.msra.mxu0 %v1794
    %2032 = vmatpush.bf16.msra.mxu0 %v1790
    %2033 = vmatpush.bf16.msra.mxu0 %v1786
    %2034 = vmatpush.bf16.msra.mxu0 %v1782
    %2035 = vmatpush.bf16.msra.mxu0 %v1778
    %2036 = vmatmul.bf16.gmra.mxu0 %v1156
    %v2037 = vpop.f32.mrf.mxu0
    %v2038 = vadd.f32 %v2025, %v2037
    %v2039 = vpop.f32.mrf.mxu0
    %2040 = vdwg.mxu0
    %2041 = vmatpush.bf16.msra.mxu0 %v1711
    %2042 = vmatpush.bf16.msra.mxu0 %v1707
    %2043 = vmatpush.bf16.msra.mxu0 %v1703
    %2044 = vmatpush.bf16.msra.mxu0 %v1699
    %2045 = vmatpush.bf16.msra.mxu0 %v1695
    %2046 = vmatpush.bf16.msra.mxu0 %v1691
    %2047 = vmatpush.bf16.msra.mxu0 %v1687
    %2048 = vmatpush.bf16.msra.mxu0 %v1683
    %2049 = vmatmul.bf16.gmra.mxu0 %v1153
    %v2050 = vpop.f32.mrf.mxu0
    %v2051 = vadd.f32 %v1295, %v2050
    %v2052 = vpop.f32.mrf.mxu0
    %2053 = vdwg.mxu0
    %2054 = vmatpush.bf16.msra.mxu0 %v1743
    %2055 = vmatpush.bf16.msra.mxu0 %v1739
    %2056 = vmatpush.bf16.msra.mxu0 %v1735
    %2057 = vmatpush.bf16.msra.mxu0 %v1731
    %2058 = vmatpush.bf16.msra.mxu0 %v1727
    %2059 = vmatpush.bf16.msra.mxu0 %v1723
    %2060 = vmatpush.bf16.msra.mxu0 %v1719
    %2061 = vmatpush.bf16.msra.mxu0 %v1715
    %2062 = vmatmul.bf16.gmra.mxu0 %v1154
    %v2063 = vpop.f32.mrf.mxu0
    %v2064 = vadd.f32 %v2051, %v2063
    %v2065 = vpop.f32.mrf.mxu0
    %2066 = vdwg.mxu0
    %2067 = vmatpush.bf16.msra.mxu0 %v1775
    %2068 = vmatpush.bf16.msra.mxu0 %v1771
    %2069 = vmatpush.bf16.msra.mxu0 %v1767
    %2070 = vmatpush.bf16.msra.mxu0 %v1763
    %2071 = vmatpush.bf16.msra.mxu0 %v1759
    %2072 = vmatpush.bf16.msra.mxu0 %v1755
    %2073 = vmatpush.bf16.msra.mxu0 %v1751
    %2074 = vmatpush.bf16.msra.mxu0 %v1747
    %2075 = vmatmul.bf16.gmra.mxu0 %v1155
    %v2076 = vpop.f32.mrf.mxu0
    %v2077 = vadd.f32 %v2064, %v2076
    %v2078 = vpop.f32.mrf.mxu0
    %2079 = vdwg.mxu0
    %2080 = vmatpush.bf16.msra.mxu0 %v1807
    %2081 = vmatpush.bf16.msra.mxu0 %v1803
    %2082 = vmatpush.bf16.msra.mxu0 %v1799
    %2083 = vmatpush.bf16.msra.mxu0 %v1795
    %2084 = vmatpush.bf16.msra.mxu0 %v1791
    %2085 = vmatpush.bf16.msra.mxu0 %v1787
    %2086 = vmatpush.bf16.msra.mxu0 %v1783
    %2087 = vmatpush.bf16.msra.mxu0 %v1779
    %2088 = vmatmul.bf16.gmra.mxu0 %v1156
    %v2089 = vpop.f32.mrf.mxu0
    %v2090 = vadd.f32 %v2077, %v2089
    %v2091 = vpop.f32.mrf.mxu0
    %2092 = vdwg.mxu0
    %2093 = vmatpush.bf16.msra.mxu0 %v1712
    %2094 = vmatpush.bf16.msra.mxu0 %v1708
    %2095 = vmatpush.bf16.msra.mxu0 %v1704
    %2096 = vmatpush.bf16.msra.mxu0 %v1700
    %2097 = vmatpush.bf16.msra.mxu0 %v1696
    %2098 = vmatpush.bf16.msra.mxu0 %v1692
    %2099 = vmatpush.bf16.msra.mxu0 %v1688
    %2100 = vmatpush.bf16.msra.mxu0 %v1684
    %2101 = vmatmul.bf16.gmra.mxu0 %v1153
    %v2102 = vpop.f32.mrf.mxu0
    %v2103 = vadd.f32 %v1296, %v2102
    %v2104 = vpop.f32.mrf.mxu0
    %2105 = vdwg.mxu0
    %2106 = vmatpush.bf16.msra.mxu0 %v1744
    %2107 = vmatpush.bf16.msra.mxu0 %v1740
    %2108 = vmatpush.bf16.msra.mxu0 %v1736
    %2109 = vmatpush.bf16.msra.mxu0 %v1732
    %2110 = vmatpush.bf16.msra.mxu0 %v1728
    %2111 = vmatpush.bf16.msra.mxu0 %v1724
    %2112 = vmatpush.bf16.msra.mxu0 %v1720
    %2113 = vmatpush.bf16.msra.mxu0 %v1716
    %2114 = vmatmul.bf16.gmra.mxu0 %v1154
    %v2115 = vpop.f32.mrf.mxu0
    %v2116 = vadd.f32 %v2103, %v2115
    %v2117 = vpop.f32.mrf.mxu0
    %2118 = vdwg.mxu0
    %2119 = vmatpush.bf16.msra.mxu0 %v1776
    %2120 = vmatpush.bf16.msra.mxu0 %v1772
    %2121 = vmatpush.bf16.msra.mxu0 %v1768
    %2122 = vmatpush.bf16.msra.mxu0 %v1764
    %2123 = vmatpush.bf16.msra.mxu0 %v1760
    %2124 = vmatpush.bf16.msra.mxu0 %v1756
    %2125 = vmatpush.bf16.msra.mxu0 %v1752
    %2126 = vmatpush.bf16.msra.mxu0 %v1748
    %2127 = vmatmul.bf16.gmra.mxu0 %v1155
    %v2128 = vpop.f32.mrf.mxu0
    %v2129 = vadd.f32 %v2116, %v2128
    %v2130 = vpop.f32.mrf.mxu0
    %2131 = vdwg.mxu0
    %2132 = vmatpush.bf16.msra.mxu0 %v1808
    %2133 = vmatpush.bf16.msra.mxu0 %v1804
    %2134 = vmatpush.bf16.msra.mxu0 %v1800
    %2135 = vmatpush.bf16.msra.mxu0 %v1796
    %2136 = vmatpush.bf16.msra.mxu0 %v1792
    %2137 = vmatpush.bf16.msra.mxu0 %v1788
    %2138 = vmatpush.bf16.msra.mxu0 %v1784
    %2139 = vmatpush.bf16.msra.mxu0 %v1780
    %2140 = vmatmul.bf16.gmra.mxu0 %v1156
    %v2141 = vpop.f32.mrf.mxu0
    %v2142 = vadd.f32 %v2129, %v2141
    %v2143 = vpop.f32.mrf.mxu0
    %2144 = vdwg.mxu0
    %v2145 = vmax.f32 %v1986, 0.0
    %v2146 = vmax.f32 %v2038, 0.0
    %v2147 = vmax.f32 %v2090, 0.0
    %v2148 = vmax.f32 %v2142, 0.0
    %v2149 = vpack.c.bf16 %v2145, %v2145
    %v2150 = vpack.c.bf16 %v2146, %v2146
    %v2151 = vpack.c.bf16 %v2147, %v2147
    %v2152 = vpack.c.bf16 %v2148, %v2148
    %v2153 = vld [vmem:[#allocation7] sm:$0xf]
    %v2154 = vld [vmem:[#allocation7 + $0x4] sm:$0xf]
    %v2155 = vld [vmem:[#allocation7 + $0x8] sm:$0xf]
    %v2156 = vld [vmem:[#allocation7 + $0xc] sm:$0xf]
    %v2157 = vld [vmem:[#allocation7 + $0x10] sm:$0xf]
    %v2158 = vld [vmem:[#allocation7 + $0x14] sm:$0xf]
    %v2159 = vld [vmem:[#allocation7 + $0x18] sm:$0xf]
    %v2160 = vld [vmem:[#allocation7 + $0x1c] sm:$0xf]
    %v2161 = vld [vmem:[#allocation7 + $0x20] sm:$0xf]
    %v2162 = vld [vmem:[#allocation7 + $0x24] sm:$0xf]
    %v2163 = vld [vmem:[#allocation7 + $0x28] sm:$0xf]
    %v2164 = vld [vmem:[#allocation7 + $0x2c] sm:$0xf]
    %v2165 = vld [vmem:[#allocation7 + $0x30] sm:$0xf]
    %v2166 = vld [vmem:[#allocation7 + $0x34] sm:$0xf]
    %v2167 = vld [vmem:[#allocation7 + $0x38] sm:$0xf]
    %v2168 = vld [vmem:[#allocation7 + $0x3c] sm:$0xf]
    %v2169 = vld [vmem:[#allocation7 + $0x40] sm:$0xf]
    %v2170 = vld [vmem:[#allocation7 + $0x44] sm:$0xf]
    %v2171 = vld [vmem:[#allocation7 + $0x48] sm:$0xf]
    %v2172 = vld [vmem:[#allocation7 + $0x4c] sm:$0xf]
    %v2173 = vld [vmem:[#allocation7 + $0x50] sm:$0xf]
    %v2174 = vld [vmem:[#allocation7 + $0x54] sm:$0xf]
    %v2175 = vld [vmem:[#allocation7 + $0x58] sm:$0xf]
    %v2176 = vld [vmem:[#allocation7 + $0x5c] sm:$0xf]
    %v2177 = vld [vmem:[#allocation7 + $0x60] sm:$0xf]
    %v2178 = vld [vmem:[#allocation7 + $0x64] sm:$0xf]
    %v2179 = vld [vmem:[#allocation7 + $0x68] sm:$0xf]
    %v2180 = vld [vmem:[#allocation7 + $0x6c] sm:$0xf]
    %v2181 = vld [vmem:[#allocation7 + $0x70] sm:$0xf]
    %v2182 = vld [vmem:[#allocation7 + $0x74] sm:$0xf]
    %v2183 = vld [vmem:[#allocation7 + $0x78] sm:$0xf]
    %v2184 = vld [vmem:[#allocation7 + $0x7c] sm:$0xf]
    %v2185 = vld [vmem:[#allocation7 + $0x80] sm:$0xf]
    %v2186 = vld [vmem:[#allocation7 + $0x84] sm:$0xf]
    %v2187 = vld [vmem:[#allocation7 + $0x88] sm:$0xf]
    %v2188 = vld [vmem:[#allocation7 + $0x8c] sm:$0xf]
    %v2189 = vld [vmem:[#allocation7 + $0x90] sm:$0xf]
    %v2190 = vld [vmem:[#allocation7 + $0x94] sm:$0xf]
    %v2191 = vld [vmem:[#allocation7 + $0x98] sm:$0xf]
    %v2192 = vld [vmem:[#allocation7 + $0x9c] sm:$0xf]
    %v2193 = vld [vmem:[#allocation7 + $0xa0] sm:$0xf]
    %v2194 = vld [vmem:[#allocation7 + $0xa4] sm:$0xf]
    %v2195 = vld [vmem:[#allocation7 + $0xa8] sm:$0xf]
    %v2196 = vld [vmem:[#allocation7 + $0xac] sm:$0xf]
    %v2197 = vld [vmem:[#allocation7 + $0xb0] sm:$0xf]
    %v2198 = vld [vmem:[#allocation7 + $0xb4] sm:$0xf]
    %v2199 = vld [vmem:[#allocation7 + $0xb8] sm:$0xf]
    %v2200 = vld [vmem:[#allocation7 + $0xbc] sm:$0xf]
    %v2201 = vld [vmem:[#allocation7 + $0xc0] sm:$0xf]
    %v2202 = vld [vmem:[#allocation7 + $0xc4] sm:$0xf]
    %v2203 = vld [vmem:[#allocation7 + $0xc8] sm:$0xf]
    %v2204 = vld [vmem:[#allocation7 + $0xcc] sm:$0xf]
    %v2205 = vld [vmem:[#allocation7 + $0xd0] sm:$0xf]
    %v2206 = vld [vmem:[#allocation7 + $0xd4] sm:$0xf]
    %v2207 = vld [vmem:[#allocation7 + $0xd8] sm:$0xf]
    %v2208 = vld [vmem:[#allocation7 + $0xdc] sm:$0xf]
    %v2209 = vld [vmem:[#allocation7 + $0xe0] sm:$0xf]
    %v2210 = vld [vmem:[#allocation7 + $0xe4] sm:$0xf]
    %v2211 = vld [vmem:[#allocation7 + $0xe8] sm:$0xf]
    %v2212 = vld [vmem:[#allocation7 + $0xec] sm:$0xf]
    %v2213 = vld [vmem:[#allocation7 + $0xf0] sm:$0xf]
    %v2214 = vld [vmem:[#allocation7 + $0xf4] sm:$0xf]
    %v2215 = vld [vmem:[#allocation7 + $0xf8] sm:$0xf]
    %v2216 = vld [vmem:[#allocation7 + $0xfc] sm:$0xf]
    %v2217 = vperm.slane %v87, 3
    %v2282 = vunpack.c.l.b16 %v2153
    %v2283 = vunpack.c.l.b16 %v2154
    %v2284 = vunpack.c.l.b16 %v2155
    %v2285 = vunpack.c.l.b16 %v2156
    %v2286 = vunpack.c.l.b16 %v2157
    %v2287 = vunpack.c.l.b16 %v2158
    %v2288 = vunpack.c.l.b16 %v2159
    %v2289 = vunpack.c.l.b16 %v2160
    %v2290 = vunpack.c.l.b16 %v2161
    %v2291 = vunpack.c.l.b16 %v2162
    %v2292 = vunpack.c.l.b16 %v2163
    %v2293 = vunpack.c.l.b16 %v2164
    %v2294 = vunpack.c.l.b16 %v2165
    %v2295 = vunpack.c.l.b16 %v2166
    %v2296 = vunpack.c.l.b16 %v2167
    %v2297 = vunpack.c.l.b16 %v2168
    %v2298 = vunpack.c.l.b16 %v2169
    %v2299 = vunpack.c.l.b16 %v2170
    %v2300 = vunpack.c.l.b16 %v2171
    %v2301 = vunpack.c.l.b16 %v2172
    %v2302 = vunpack.c.l.b16 %v2173
    %v2303 = vunpack.c.l.b16 %v2174
    %v2304 = vunpack.c.l.b16 %v2175
    %v2305 = vunpack.c.l.b16 %v2176
    %v2306 = vunpack.c.l.b16 %v2177
    %v2307 = vunpack.c.l.b16 %v2178
    %v2308 = vunpack.c.l.b16 %v2179
    %v2309 = vunpack.c.l.b16 %v2180
    %v2310 = vunpack.c.l.b16 %v2181
    %v2311 = vunpack.c.l.b16 %v2182
    %v2312 = vunpack.c.l.b16 %v2183
    %v2313 = vunpack.c.l.b16 %v2184
    %v2314 = vunpack.c.l.b16 %v2185
    %v2315 = vunpack.c.l.b16 %v2186
    %v2316 = vunpack.c.l.b16 %v2187
    %v2317 = vunpack.c.l.b16 %v2188
    %v2318 = vunpack.c.l.b16 %v2189
    %v2319 = vunpack.c.l.b16 %v2190
    %v2320 = vunpack.c.l.b16 %v2191
    %v2321 = vunpack.c.l.b16 %v2192
    %v2322 = vunpack.c.l.b16 %v2193
    %v2323 = vunpack.c.l.b16 %v2194
    %v2324 = vunpack.c.l.b16 %v2195
    %v2325 = vunpack.c.l.b16 %v2196
    %v2326 = vunpack.c.l.b16 %v2197
    %v2327 = vunpack.c.l.b16 %v2198
    %v2328 = vunpack.c.l.b16 %v2199
    %v2329 = vunpack.c.l.b16 %v2200
    %v2330 = vunpack.c.l.b16 %v2201
    %v2331 = vunpack.c.l.b16 %v2202
    %v2332 = vunpack.c.l.b16 %v2203
    %v2333 = vunpack.c.l.b16 %v2204
    %v2334 = vunpack.c.l.b16 %v2205
    %v2335 = vunpack.c.l.b16 %v2206
    %v2336 = vunpack.c.l.b16 %v2207
    %v2337 = vunpack.c.l.b16 %v2208
    %v2338 = vunpack.c.l.b16 %v2209
    %v2339 = vunpack.c.l.b16 %v2210
    %v2340 = vunpack.c.l.b16 %v2211
    %v2341 = vunpack.c.l.b16 %v2212
    %v2342 = vunpack.c.l.b16 %v2213
    %v2343 = vunpack.c.l.b16 %v2214
    %v2344 = vunpack.c.l.b16 %v2215
    %v2345 = vunpack.c.l.b16 %v2216
    %v2346 = vpack.c.b16 %v2283, %v2282
    %v2347 = vpack.c.b16 %v2285, %v2284
    %v2348 = vpack.c.b16 %v2287, %v2286
    %v2349 = vpack.c.b16 %v2289, %v2288
    %v2350 = vpack.c.b16 %v2291, %v2290
    %v2351 = vpack.c.b16 %v2293, %v2292
    %v2352 = vpack.c.b16 %v2295, %v2294
    %v2353 = vpack.c.b16 %v2297, %v2296
    %v2354 = vpack.c.b16 %v2299, %v2298
    %v2355 = vpack.c.b16 %v2301, %v2300
    %v2356 = vpack.c.b16 %v2303, %v2302
    %v2357 = vpack.c.b16 %v2305, %v2304
    %v2358 = vpack.c.b16 %v2307, %v2306
    %v2359 = vpack.c.b16 %v2309, %v2308
    %v2360 = vpack.c.b16 %v2311, %v2310
    %v2361 = vpack.c.b16 %v2313, %v2312
    %v2362 = vpack.c.b16 %v2315, %v2314
    %v2363 = vpack.c.b16 %v2317, %v2316
    %v2364 = vpack.c.b16 %v2319, %v2318
    %v2365 = vpack.c.b16 %v2321, %v2320
    %v2366 = vpack.c.b16 %v2323, %v2322
    %v2367 = vpack.c.b16 %v2325, %v2324
    %v2368 = vpack.c.b16 %v2327, %v2326
    %v2369 = vpack.c.b16 %v2329, %v2328
    %v2370 = vpack.c.b16 %v2331, %v2330
    %v2371 = vpack.c.b16 %v2333, %v2332
    %v2372 = vpack.c.b16 %v2335, %v2334
    %v2373 = vpack.c.b16 %v2337, %v2336
    %v2374 = vpack.c.b16 %v2339, %v2338
    %v2375 = vpack.c.b16 %v2341, %v2340
    %v2376 = vpack.c.b16 %v2343, %v2342
    %v2377 = vpack.c.b16 %v2345, %v2344
    %2410 = vmatpush.bf16.msra.mxu0 %v2353
    %2411 = vmatpush.bf16.msra.mxu0 %v2352
    %2412 = vmatpush.bf16.msra.mxu0 %v2351
    %2413 = vmatpush.bf16.msra.mxu0 %v2350
    %2414 = vmatpush.bf16.msra.mxu0 %v2349
    %2415 = vmatpush.bf16.msra.mxu0 %v2348
    %2416 = vmatpush.bf16.msra.mxu0 %v2347
    %2417 = vmatpush.bf16.msra.mxu0 %v2346
    %2418 = vmatmul.bf16.gmra.mxu0 %v2149
    %v2419 = vpop.f32.mrf.mxu0
    %v2420 = vadd.f32 %v2217, %v2419
    %v2421 = vpop.f32.mrf.mxu0
    %2422 = vdwg.mxu0
    %2423 = vmatpush.bf16.msra.mxu0 %v2361
    %2424 = vmatpush.bf16.msra.mxu0 %v2360
    %2425 = vmatpush.bf16.msra.mxu0 %v2359
    %2426 = vmatpush.bf16.msra.mxu0 %v2358
    %2427 = vmatpush.bf16.msra.mxu0 %v2357
    %2428 = vmatpush.bf16.msra.mxu0 %v2356
    %2429 = vmatpush.bf16.msra.mxu0 %v2355
    %2430 = vmatpush.bf16.msra.mxu0 %v2354
    %2431 = vmatmul.bf16.gmra.mxu0 %v2150
    %v2432 = vpop.f32.mrf.mxu0
    %v2433 = vadd.f32 %v2420, %v2432
    %v2434 = vpop.f32.mrf.mxu0
    %2435 = vdwg.mxu0
    %2436 = vmatpush.bf16.msra.mxu0 %v2369
    %2437 = vmatpush.bf16.msra.mxu0 %v2368
    %2438 = vmatpush.bf16.msra.mxu0 %v2367
    %2439 = vmatpush.bf16.msra.mxu0 %v2366
    %2440 = vmatpush.bf16.msra.mxu0 %v2365
    %2441 = vmatpush.bf16.msra.mxu0 %v2364
    %2442 = vmatpush.bf16.msra.mxu0 %v2363
    %2443 = vmatpush.bf16.msra.mxu0 %v2362
    %2444 = vmatmul.bf16.gmra.mxu0 %v2151
    %v2445 = vpop.f32.mrf.mxu0
    %v2446 = vadd.f32 %v2433, %v2445
    %v2447 = vpop.f32.mrf.mxu0
    %2448 = vdwg.mxu0
    %2449 = vmatpush.bf16.msra.mxu0 %v2377
    %2450 = vmatpush.bf16.msra.mxu0 %v2376
    %2451 = vmatpush.bf16.msra.mxu0 %v2375
    %2452 = vmatpush.bf16.msra.mxu0 %v2374
    %2453 = vmatpush.bf16.msra.mxu0 %v2373
    %2454 = vmatpush.bf16.msra.mxu0 %v2372
    %2455 = vmatpush.bf16.msra.mxu0 %v2371
    %2456 = vmatpush.bf16.msra.mxu0 %v2370
    %2457 = vmatmul.bf16.gmra.mxu0 %v2152
    %v2458 = vpop.f32.mrf.mxu0
    %v2459 = vadd.f32 %v2446, %v2458
    %v2460 = vpop.f32.mrf.mxu0
    %2461 = vdwg.mxu0
    %2462 = vst [vmem:[#allocation10] sm:$0xff] %v2459
    // Predicated region
    $region42: #{tpu_custom_call.1} parent=1 // pred_check
      _
    $region43: #{tpu_custom_call.1} parent=1 // pred_check_branch
      %2464 = sbr.rel (0) target = $region45
    $region44: #{tpu_custom_call.1} parent=1 // pred_region
      %2466 = vsyncadd [#allocation4], 0
      %s2468 = sshll.u32 [#allocation10], 4
      %s2469 = int_to_ptr.vmem [resolvable:$true] %s2468
      %s2470 = sshll.u32 %s6, 4
      %s2471 = int_to_ptr.hbm [resolvable:$true] %s2470
      %2473 = dma.vmem_to_hbm [thread:$0]  %s2469, 128, %s2471, [#allocation4]
    $region45: #{tpu_custom_call.1} parent=1 // pred_fallthru
      _
    // Predicated region
    $region46: #{tpu_custom_call.1} parent=1 // pred_check
      _
    $region47: #{tpu_custom_call.1} parent=1 // pred_check_branch
      %2475 = sbr.rel (0) target = $region49
    $region48: #{tpu_custom_call.1} parent=1 // pred_region
      %2477 = dma.done [#allocation4], 128
    $region49: #{tpu_custom_call.1} parent=1 // pred_fallthru
      _
    %2478 = vsyncpa [#allocation3], 1
    %2479 = vsyncpa [#allocation6], 1
    %2480 = vsyncpa [#allocation9], 1
    %2481 = vsyncpa [#allocation4], 1

// kernel: tpu_custom_call.1
$region0: #{tpu_custom_call.1}
  #allocation0 [shape = 'u32[]', space=smem, size = 0x4, offset = 0x4, fixed_abs, tag = 'smem constant byte address 0x4 - core index']
  #allocation1 [shape = 'u32[72,128]{1,0:T(1,128)}', space=vmem, size = 0x9000, scoped, tag = 'internal scratch']
  %s0 = inlined_call_operand.vmem [shape: f32[8,2], index: 0, kind: input, shape index: {}]
  %s1 = inlined_call_operand.vmem [shape: f32[2,512], index: 1, kind: input, shape index: {}]
  %s2 = inlined_call_operand.hbm [shape: bf16[512,512], index: 2, kind: input, shape index: {}]
  %s3 = inlined_call_operand.hbm [shape: bf16[512,512], index: 3, kind: input, shape index: {}]
  %s4 = inlined_call_operand.hbm [shape: bf16[512,128], index: 4, kind: input, shape index: {}]
  %s5 = inlined_call_operand.hbm [shape: f32[4,512], index: 5, kind: input, shape index: {}]
  %s6 = inlined_call_operand.hbm [shape: f32[8,128], index: 6, kind: output, shape index: {}]
  %s7 = sld [smem:[#allocation0]]
  $region50: #{tpu_custom_call.1} parent=0
    _
  %s9 = ssub.s32 1, %s7
  %s10 = scalar_select 0, %s9, %s7
  $region1: #{tpu_custom_call.1} parent=0
    #allocation2 [shape = 'u8[524288]{0}', space=vmem, size = 0x80000, scoped, tag = 'input window, operand 2, single buffered']
    #allocation3 [shape = 's32[1]{0}', space=sflag, size = 0x4, scoped, tag = 'scoped memory for tpu_custom_call.1']
    #allocation4 [shape = 's32[1]{0}', space=sflag, size = 0x4, scoped, tag = 'scoped memory for tpu_custom_call.1']
    #allocation5 [shape = 'u8[524288]{0}', space=vmem, size = 0x80000, scoped, tag = 'input window, operand 3, single buffered']
    #allocation6 [shape = 's32[1]{0}', space=sflag, size = 0x4, scoped, tag = 'scoped memory for tpu_custom_call.1']
    #allocation7 [shape = 'u8[131072]{0}', space=vmem, size = 0x20000, scoped, tag = 'input window, operand 4, single buffered']
    #allocation8 [shape = 'u8[8192]{0}', space=vmem, size = 0x2000, scoped, tag = 'input window, operand 5, single buffered']
    #allocation9 [shape = 's32[1]{0}', space=sflag, size = 0x4, scoped, tag = 'scoped memory for tpu_custom_call.1']
    #allocation10 [shape = 'u8[4096]{0}', space=vmem, size = 0x1000, scoped, tag = 'output window, operand 0, single buffered']
    %11 = vsyncpa [#allocation3], 0
    %12 = vsyncpa [#allocation6], 0
    %13 = vsyncpa [#allocation9], 0
    %14 = vsyncpa [#allocation4], 0
    // Predicated region
    $region2: #{tpu_custom_call.1} parent=1 // pred_check
      _
    $region3: #{tpu_custom_call.1} parent=1 // pred_check_branch
      %16 = sbr.rel (0) target = $region5
    $region4: #{tpu_custom_call.1} parent=1 // pred_region
      _
    $region5: #{tpu_custom_call.1} parent=1 // pred_fallthru
      _
    // Predicated region
    $region6: #{tpu_custom_call.1} parent=1 // pred_check
      _
    $region7: #{tpu_custom_call.1} parent=1 // pred_check_branch
      %18 = sbr.rel (0) target = $region9
    $region8: #{tpu_custom_call.1} parent=1 // pred_region
      _
    $region9: #{tpu_custom_call.1} parent=1 // pred_fallthru
      _
    // Predicated region
    $region10: #{tpu_custom_call.1} parent=1 // pred_check
      _
    $region11: #{tpu_custom_call.1} parent=1 // pred_check_branch
      %20 = sbr.rel (0) target = $region13
    $region12: #{tpu_custom_call.1} parent=1 // pred_region
      %22 = vsyncadd [#allocation3], 0
      %s23 = sshll.u32 %s2, 4
      %s24 = int_to_ptr.hbm [resolvable:$true] %s23
      %s25 = sshll.u32 [#allocation2], 4
      %s26 = int_to_ptr.vmem [resolvable:$true] %s25
      %31 = dma.hbm_to_vmem [thread:$0]  %s24, 16384, %s26, [#allocation3], 256, 256, 16
    $region13: #{tpu_custom_call.1} parent=1 // pred_fallthru
      _
    // Predicated region
    $region14: #{tpu_custom_call.1} parent=1 // pred_check
      _
    $region15: #{tpu_custom_call.1} parent=1 // pred_check_branch
      %33 = sbr.rel (0) target = $region17
    $region16: #{tpu_custom_call.1} parent=1 // pred_region
      %35 = vsyncadd [#allocation6], 0
      %s36 = sshll.u32 %s3, 4
      %s37 = int_to_ptr.hbm [resolvable:$true] %s36
      %s38 = sshll.u32 [#allocation5], 4
      %s39 = int_to_ptr.vmem [resolvable:$true] %s38
      %44 = dma.hbm_to_vmem [thread:$0]  %s37, 16384, %s39, [#allocation6], 256, 256, 16
    $region17: #{tpu_custom_call.1} parent=1 // pred_fallthru
      _
    // Predicated region
    $region18: #{tpu_custom_call.1} parent=1 // pred_check
      _
    $region19: #{tpu_custom_call.1} parent=1 // pred_check_branch
      %46 = sbr.rel (0) target = $region21
    $region20: #{tpu_custom_call.1} parent=1 // pred_region
      %48 = vsyncadd [#allocation6], 0
      %s49 = sshll.u32 %s4, 4
      %s50 = int_to_ptr.hbm [resolvable:$true] %s49
      %s51 = sshll.u32 [#allocation7], 4
      %s52 = int_to_ptr.vmem [resolvable:$true] %s51
      %57 = dma.hbm_to_vmem [thread:$0]  %s50, 4096, %s52, [#allocation6], 64, 64, 4
    $region21: #{tpu_custom_call.1} parent=1 // pred_fallthru
      _
    // Predicated region
    $region22: #{tpu_custom_call.1} parent=1 // pred_check
      _
    $region23: #{tpu_custom_call.1} parent=1 // pred_check_branch
      %59 = sbr.rel (0) target = $region25
    $region24: #{tpu_custom_call.1} parent=1 // pred_region
      %61 = vsyncadd [#allocation9], 0
      %s63 = sshll.u32 %s5, 4
      %s64 = int_to_ptr.hbm [resolvable:$true] %s63
      %s65 = sshll.u32 [#allocation8], 4
      %s66 = int_to_ptr.vmem [resolvable:$true] %s65
      %68 = dma.hbm_to_vmem [thread:$0]  %s64, 256, %s66, [#allocation9]
    $region25: #{tpu_custom_call.1} parent=1 // pred_fallthru
      _
    // Predicated region
    $region26: #{tpu_custom_call.1} parent=1 // pred_check
      _
    $region27: #{tpu_custom_call.1} parent=1 // pred_check_branch
      %70 = sbr.rel (0) target = $region29
    $region28: #{tpu_custom_call.1} parent=1 // pred_region
      %72 = dma.done [#allocation3], 16384
    $region29: #{tpu_custom_call.1} parent=1 // pred_fallthru
      _
    // Predicated region
    $region30: #{tpu_custom_call.1} parent=1 // pred_check
      _
    $region31: #{tpu_custom_call.1} parent=1 // pred_check_branch
      %74 = sbr.rel (0) target = $region33
    $region32: #{tpu_custom_call.1} parent=1 // pred_region
      %76 = dma.done [#allocation6], 16384
    $region33: #{tpu_custom_call.1} parent=1 // pred_fallthru
      _
    // Predicated region
    $region34: #{tpu_custom_call.1} parent=1 // pred_check
      _
    $region35: #{tpu_custom_call.1} parent=1 // pred_check_branch
      %78 = sbr.rel (0) target = $region37
    $region36: #{tpu_custom_call.1} parent=1 // pred_region
      %80 = dma.done [#allocation6], 4096
    $region37: #{tpu_custom_call.1} parent=1 // pred_fallthru
      _
    // Predicated region
    $region38: #{tpu_custom_call.1} parent=1 // pred_check
      _
    $region39: #{tpu_custom_call.1} parent=1 // pred_check_branch
      %82 = sbr.rel (0) target = $region41
    $region40: #{tpu_custom_call.1} parent=1 // pred_region
      %84 = dma.done [#allocation9], 256
    $region41: #{tpu_custom_call.1} parent=1 // pred_fallthru
      _
    %v85 = vld [vmem:[%s0] sm:$0xff]
    %v86 = vld [vmem:[%s1] sm:$0xff]
    %v87 = vld [vmem:[#allocation8] sm:$0xff]
    %v88 = vld [vmem:[#allocation8 + $0x8] sm:$0xff]
    %90 = vset.pattern.permute.xlu0 0
    %91 = vperm.xlu0 %90, %v85
    %v92 = vpop.permute.xlu0 %91
    %v95 = vperm.slane %v86, 0
    %v96 = vperm.slane %v86, 2
    %v97 = vperm.slane %v86, 4
    %v98 = vperm.slane %v86, 6
    %v103 = vperm.slane %v95, 0
    %v104 = vperm.slane %v96, 0
    %v105 = vperm.slane %v97, 0
    %v106 = vperm.slane %v98, 0
    %v107 = vmul.f32 %v92, %v103
    %v108 = vmul.f32 %v92, %v104
    %v109 = vmul.f32 %v92, %v105
    %v110 = vmul.f32 %v92, %v106
    %111 = vset.pattern.permute.xlu0 1
    %112 = vperm.xlu0 %111, %v85
    %v113 = vpop.permute.xlu0 %112
    %v115 = vperm.slane %v86, 1
    %v116 = vperm.slane %v86, 3
    %v117 = vperm.slane %v86, 5
    %v118 = vperm.slane %v86, 7
    %v123 = vperm.slane %v115, 1
    %v124 = vperm.slane %v116, 1
    %v125 = vperm.slane %v117, 1
    %v126 = vperm.slane %v118, 1
    %v127 = vmul.f32 %v113, %v123
    %v128 = vmul.f32 %v113, %v124
    %v129 = vmul.f32 %v113, %v125
    %v130 = vmul.f32 %v113, %v126
    %v131 = vadd.f32 %v107, %v127
    %v132 = vadd.f32 %v108, %v128
    %v133 = vadd.f32 %v109, %v129
    %v134 = vadd.f32 %v110, %v130
    %v137 = vperm.slane %v87, 0
    %v138 = vperm.slane %v87, 4
    %v139 = vperm.slane %v88, 0
    %v140 = vperm.slane %v88, 4
    %v145 = vperm.slane %v137, 0
    %v146 = vperm.slane %v138, 0
    %v147 = vperm.slane %v139, 0
    %v148 = vperm.slane %v140, 0
    %v149 = vadd.f32 %v131, %v145
    %v150 = vadd.f32 %v132, %v146
    %v151 = vadd.f32 %v133, %v147
    %v152 = vadd.f32 %v134, %v148
    %v153 = vmax.f32 %v149, 0.0
    %v154 = vmax.f32 %v150, 0.0
    %v155 = vmax.f32 %v151, 0.0
    %v156 = vmax.f32 %v152, 0.0
    %v157 = vpack.c.bf16 %v153, %v153
    %v158 = vpack.c.bf16 %v154, %v154
    %v159 = vpack.c.bf16 %v155, %v155
    %v160 = vpack.c.bf16 %v156, %v156
    %v161 = vld [vmem:[#allocation2] sm:$0xff]
    %v162 = vld [vmem:[#allocation2 + $0x8] sm:$0xff]
    %v163 = vld [vmem:[#allocation2 + $0x10] sm:$0xff]
    %v164 = vld [vmem:[#allocation2 + $0x18] sm:$0xff]
    %v165 = vld [vmem:[#allocation2 + $0x20] sm:$0xff]
    %v166 = vld [vmem:[#allocation2 + $0x28] sm:$0xff]
    %v167 = vld [vmem:[#allocation2 + $0x30] sm:$0xff]
    %v168 = vld [vmem:[#allocation2 + $0x38] sm:$0xff]
    %v169 = vld [vmem:[#allocation2 + $0x40] sm:$0xff]
    %v170 = vld [vmem:[#allocation2 + $0x48] sm:$0xff]
    %v171 = vld [vmem:[#allocation2 + $0x50] sm:$0xff]
    %v172 = vld [vmem:[#allocation2 + $0x58] sm:$0xff]
    %v173 = vld [vmem:[#allocation2 + $0x60] sm:$0xff]
    %v174 = vld [vmem:[#allocation2 + $0x68] sm:$0xff]
    %v175 = vld [vmem:[#allocation2 + $0x70] sm:$0xff]
    %v176 = vld [vmem:[#allocation2 + $0x78] sm:$0xff]
    %v177 = vld [vmem:[#allocation2 + $0x80] sm:$0xff]
    %v178 = vld [vmem:[#allocation2 + $0x88] sm:$0xff]
    %v179 = vld [vmem:[#allocation2 + $0x90] sm:$0xff]
    %v180 = vld [vmem:[#allocation2 + $0x98] sm:$0xff]
    %v181 = vld [vmem:[#allocation2 + $0xa0] sm:$0xff]
    %v182 = vld [vmem:[#allocation2 + $0xa8] sm:$0xff]
    %v183 = vld [vmem:[#allocation2 + $0xb0] sm:$0xff]
    %v184 = vld [vmem:[#allocation2 + $0xb8] sm:$0xff]
    %v185 = vld [vmem:[#allocation2 + $0xc0] sm:$0xff]
    %v186 = vld [vmem:[#allocation2 + $0xc8] sm:$0xff]
    %v187 = vld [vmem:[#allocation2 + $0xd0] sm:$0xff]
    %v188 = vld [vmem:[#allocation2 + $0xd8] sm:$0xff]
    %v189 = vld [vmem:[#allocation2 + $0xe0] sm:$0xff]
    %v190 = vld [vmem:[#allocation2 + $0xe8] sm:$0xff]
    %v191 = vld [vmem:[#allocation2 + $0xf0] sm:$0xff]
    %v192 = vld [vmem:[#allocation2 + $0xf8] sm:$0xff]
    %v193 = vld [vmem:[#allocation2 + $0x100] sm:$0xff]
    %v194 = vld [vmem:[#allocation2 + $0x108] sm:$0xff]
    %v195 = vld [vmem:[#allocation2 + $0x110] sm:$0xff]
    %v196 = vld [vmem:[#allocation2 + $0x118] sm:$0xff]
    %v197 = vld [vmem:[#allocation2 + $0x120] sm:$0xff]
    %v198 = vld [vmem:[#allocation2 + $0x128] sm:$0xff]
    %v199 = vld [vmem:[#allocation2 + $0x130] sm:$0xff]
    %v200 = vld [vmem:[#allocation2 + $0x138] sm:$0xff]
    %v201 = vld [vmem:[#allocation2 + $0x140] sm:$0xff]
    %v202 = vld [vmem:[#allocation2 + $0x148] sm:$0xff]
    %v203 = vld [vmem:[#allocation2 + $0x150] sm:$0xff]
    %v204 = vld [vmem:[#allocation2 + $0x158] sm:$0xff]
    %v205 = vld [vmem:[#allocation2 + $0x160] sm:$0xff]
    %v206 = vld [vmem:[#allocation2 + $0x168] sm:$0xff]
    %v207 = vld [vmem:[#allocation2 + $0x170] sm:$0xff]
    %v208 = vld [vmem:[#allocation2 + $0x178] sm:$0xff]
    %v209 = vld [vmem:[#allocation2 + $0x180] sm:$0xff]
    %v210 = vld [vmem:[#allocation2 + $0x188] sm:$0xff]
    %v211 = vld [vmem:[#allocation2 + $0x190] sm:$0xff]
    %v212 = vld [vmem:[#allocation2 + $0x198] sm:$0xff]
    %v213 = vld [vmem:[#allocation2 + $0x1a0] sm:$0xff]
    %v214 = vld [vmem:[#allocation2 + $0x1a8] sm:$0xff]
    %v215 = vld [vmem:[#allocation2 + $0x1b0] sm:$0xff]
    %v216 = vld [vmem:[#allocation2 + $0x1b8] sm:$0xff]
    %v217 = vld [vmem:[#allocation2 + $0x1c0] sm:$0xff]
    %v218 = vld [vmem:[#allocation2 + $0x1c8] sm:$0xff]
    %v219 = vld [vmem:[#allocation2 + $0x1d0] sm:$0xff]
    %v220 = vld [vmem:[#allocation2 + $0x1d8] sm:$0xff]
    %v221 = vld [vmem:[#allocation2 + $0x1e0] sm:$0xff]
    %v222 = vld [vmem:[#allocation2 + $0x1e8] sm:$0xff]
    %v223 = vld [vmem:[#allocation2 + $0x1f0] sm:$0xff]
    %v224 = vld [vmem:[#allocation2 + $0x1f8] sm:$0xff]
    %v225 = vld [vmem:[#allocation2 + $0x200] sm:$0xff]
    %v226 = vld [vmem:[#allocation2 + $0x208] sm:$0xff]
    %v227 = vld [vmem:[#allocation2 + $0x210] sm:$0xff]
    %v228 = vld [vmem:[#allocation2 + $0x218] sm:$0xff]
    %v229 = vld [vmem:[#allocation2 + $0x220] sm:$0xff]
    %v230 = vld [vmem:[#allocation2 + $0x228] sm:$0xff]
    %v231 = vld [vmem:[#allocation2 + $0x230] sm:$0xff]
    %v232 = vld [vmem:[#allocation2 + $0x238] sm:$0xff]
    %v233 = vld [vmem:[#allocation2 + $0x240] sm:$0xff]
    %v234 = vld [vmem:[#allocation2 + $0x248] sm:$0xff]
    %v235 = vld [vmem:[#allocation2 + $0x250] sm:$0xff]
    %v236 = vld [vmem:[#allocation2 + $0x258] sm:$0xff]
    %v237 = vld [vmem:[#allocation2 + $0x260] sm:$0xff]
    %v238 = vld [vmem:[#allocation2 + $0x268] sm:$0xff]
    %v239 = vld [vmem:[#allocation2 + $0x270] sm:$0xff]
    %v240 = vld [vmem:[#allocation2 + $0x278] sm:$0xff]
    %v241 = vld [vmem:[#allocation2 + $0x280] sm:$0xff]
    %v242 = vld [vmem:[#allocation2 + $0x288] sm:$0xff]
    %v243 = vld [vmem:[#allocation2 + $0x290] sm:$0xff]
    %v244 = vld [vmem:[#allocation2 + $0x298] sm:$0xff]
    %v245 = vld [vmem:[#allocation2 + $0x2a0] sm:$0xff]
    %v246 = vld [vmem:[#allocation2 + $0x2a8] sm:$0xff]
    %v247 = vld [vmem:[#allocation2 + $0x2b0] sm:$0xff]
    %v248 = vld [vmem:[#allocation2 + $0x2b8] sm:$0xff]
    %v249 = vld [vmem:[#allocation2 + $0x2c0] sm:$0xff]
    %v250 = vld [vmem:[#allocation2 + $0x2c8] sm:$0xff]
    %v251 = vld [vmem:[#allocation2 + $0x2d0] sm:$0xff]
    %v252 = vld [vmem:[#allocation2 + $0x2d8] sm:$0xff]
    %v253 = vld [vmem:[#allocation2 + $0x2e0] sm:$0xff]
    %v254 = vld [vmem:[#allocation2 + $0x2e8] sm:$0xff]
    %v255 = vld [vmem:[#allocation2 + $0x2f0] sm:$0xff]
    %v256 = vld [vmem:[#allocation2 + $0x2f8] sm:$0xff]
    %v257 = vld [vmem:[#allocation2 + $0x300] sm:$0xff]
    %v258 = vld [vmem:[#allocation2 + $0x308] sm:$0xff]
    %v259 = vld [vmem:[#allocation2 + $0x310] sm:$0xff]
    %v260 = vld [vmem:[#allocation2 + $0x318] sm:$0xff]
    %v261 = vld [vmem:[#allocation2 + $0x320] sm:$0xff]
    %v262 = vld [vmem:[#allocation2 + $0x328] sm:$0xff]
    %v263 = vld [vmem:[#allocation2 + $0x330] sm:$0xff]
    %v264 = vld [vmem:[#allocation2 + $0x338] sm:$0xff]
    %v265 = vld [vmem:[#allocation2 + $0x340] sm:$0xff]
    %v266 = vld [vmem:[#allocation2 + $0x348] sm:$0xff]
    %v267 = vld [vmem:[#allocation2 + $0x350] sm:$0xff]
    %v268 = vld [vmem:[#allocation2 + $0x358] sm:$0xff]
    %v269 = vld [vmem:[#allocation2 + $0x360] sm:$0xff]
    %v270 = vld [vmem:[#allocation2 + $0x368] sm:$0xff]
    %v271 = vld [vmem:[#allocation2 + $0x370] sm:$0xff]
    %v272 = vld [vmem:[#allocation2 + $0x378] sm:$0xff]
    %v273 = vld [vmem:[#allocation2 + $0x380] sm:$0xff]
    %v274 = vld [vmem:[#allocation2 + $0x388] sm:$0xff]
    %v275 = vld [vmem:[#allocation2 + $0x390] sm:$0xff]
    %v276 = vld [vmem:[#allocation2 + $0x398] sm:$0xff]
    %v277 = vld [vmem:[#allocation2 + $0x3a0] sm:$0xff]
    %v278 = vld [vmem:[#allocation2 + $0x3a8] sm:$0xff]
    %v279 = vld [vmem:[#allocation2 + $0x3b0] sm:$0xff]
    %v280 = vld [vmem:[#allocation2 + $0x3b8] sm:$0xff]
    %v281 = vld [vmem:[#allocation2 + $0x3c0] sm:$0xff]
    %v282 = vld [vmem:[#allocation2 + $0x3c8] sm:$0xff]
    %v283 = vld [vmem:[#allocation2 + $0x3d0] sm:$0xff]
    %v284 = vld [vmem:[#allocation2 + $0x3d8] sm:$0xff]
    %v285 = vld [vmem:[#allocation2 + $0x3e0] sm:$0xff]
    %v286 = vld [vmem:[#allocation2 + $0x3e8] sm:$0xff]
    %v287 = vld [vmem:[#allocation2 + $0x3f0] sm:$0xff]
    %v288 = vld [vmem:[#allocation2 + $0x3f8] sm:$0xff]
    %v289 = vperm.slane %v87, 1
    %v290 = vperm.slane %v87, 5
    %v291 = vperm.slane %v88, 1
    %v292 = vperm.slane %v88, 5
    %v297 = vperm.slane %v289, 1
    %v298 = vperm.slane %v290, 1
    %v299 = vperm.slane %v291, 1
    %v300 = vperm.slane %v292, 1
    %v429 = vunpack.c.l.b16 %v161
    %v430 = vunpack.c.h.b16 %v161
    %v431 = vunpack.c.l.b16 %v162
    %v432 = vunpack.c.h.b16 %v162
    %v433 = vunpack.c.l.b16 %v163
    %v434 = vunpack.c.h.b16 %v163
    %v435 = vunpack.c.l.b16 %v164
    %v436 = vunpack.c.h.b16 %v164
    %v437 = vunpack.c.l.b16 %v165
    %v438 = vunpack.c.h.b16 %v165
    %v439 = vunpack.c.l.b16 %v166
    %v440 = vunpack.c.h.b16 %v166
    %v441 = vunpack.c.l.b16 %v167
    %v442 = vunpack.c.h.b16 %v167
    %v443 = vunpack.c.l.b16 %v168
    %v444 = vunpack.c.h.b16 %v168
    %v445 = vunpack.c.l.b16 %v169
    %v446 = vunpack.c.h.b16 %v169
    %v447 = vunpack.c.l.b16 %v170
    %v448 = vunpack.c.h.b16 %v170
    %v449 = vunpack.c.l.b16 %v171
    %v450 = vunpack.c.h.b16 %v171
    %v451 = vunpack.c.l.b16 %v172
    %v452 = vunpack.c.h.b16 %v172
    %v453 = vunpack.c.l.b16 %v173
    %v454 = vunpack.c.h.b16 %v173
    %v455 = vunpack.c.l.b16 %v174
    %v456 = vunpack.c.h.b16 %v174
    %v457 = vunpack.c.l.b16 %v175
    %v458 = vunpack.c.h.b16 %v175
    %v459 = vunpack.c.l.b16 %v176
    %v460 = vunpack.c.h.b16 %v176
    %v461 = vunpack.c.l.b16 %v177
    %v462 = vunpack.c.h.b16 %v177
    %v463 = vunpack.c.l.b16 %v178
    %v464 = vunpack.c.h.b16 %v178
    %v465 = vunpack.c.l.b16 %v179
    %v466 = vunpack.c.h.b16 %v179
    %v467 = vunpack.c.l.b16 %v180
    %v468 = vunpack.c.h.b16 %v180
    %v469 = vunpack.c.l.b16 %v181
    %v470 = vunpack.c.h.b16 %v181
    %v471 = vunpack.c.l.b16 %v182
    %v472 = vunpack.c.h.b16 %v182
    %v473 = vunpack.c.l.b16 %v183
    %v474 = vunpack.c.h.b16 %v183
    %v475 = vunpack.c.l.b16 %v184
    %v476 = vunpack.c.h.b16 %v184
    %v477 = vunpack.c.l.b16 %v185
    %v478 = vunpack.c.h.b16 %v185
    %v479 = vunpack.c.l.b16 %v186
    %v480 = vunpack.c.h.b16 %v186
    %v481 = vunpack.c.l.b16 %v187
    %v482 = vunpack.c.h.b16 %v187
    %v483 = vunpack.c.l.b16 %v188
    %v484 = vunpack.c.h.b16 %v188
    %v485 = vunpack.c.l.b16 %v189
    %v486 = vunpack.c.h.b16 %v189
    %v487 = vunpack.c.l.b16 %v190
    %v488 = vunpack.c.h.b16 %v190
    %v489 = vunpack.c.l.b16 %v191
    %v490 = vunpack.c.h.b16 %v191
    %v491 = vunpack.c.l.b16 %v192
    %v492 = vunpack.c.h.b16 %v192
    %v493 = vunpack.c.l.b16 %v193
    %v494 = vunpack.c.h.b16 %v193
    %v495 = vunpack.c.l.b16 %v194
    %v496 = vunpack.c.h.b16 %v194
    %v497 = vunpack.c.l.b16 %v195
    %v498 = vunpack.c.h.b16 %v195
    %v499 = vunpack.c.l.b16 %v196
    %v500 = vunpack.c.h.b16 %v196
    %v501 = vunpack.c.l.b16 %v197
    %v502 = vunpack.c.h.b16 %v197
    %v503 = vunpack.c.l.b16 %v198
    %v504 = vunpack.c.h.b16 %v198
    %v505 = vunpack.c.l.b16 %v199
    %v506 = vunpack.c.h.b16 %v199
    %v507 = vunpack.c.l.b16 %v200
    %v508 = vunpack.c.h.b16 %v200
    %v509 = vunpack.c.l.b16 %v201
    %v510 = vunpack.c.h.b16 %v201
    %v511 = vunpack.c.l.b16 %v202
    %v512 = vunpack.c.h.b16 %v202
    %v513 = vunpack.c.l.b16 %v203
    %v514 = vunpack.c.h.b16 %v203
    %v515 = vunpack.c.l.b16 %v204
    %v516 = vunpack.c.h.b16 %v204
    %v517 = vunpack.c.l.b16 %v205
    %v518 = vunpack.c.h.b16 %v205
    %v519 = vunpack.c.l.b16 %v206
    %v520 = vunpack.c.h.b16 %v206
    %v521 = vunpack.c.l.b16 %v207
    %v522 = vunpack.c.h.b16 %v207
    %v523 = vunpack.c.l.b16 %v208
    %v524 = vunpack.c.h.b16 %v208
    %v525 = vunpack.c.l.b16 %v209
    %v526 = vunpack.c.h.b16 %v209
    %v527 = vunpack.c.l.b16 %v210
    %v528 = vunpack.c.h.b16 %v210
    %v529 = vunpack.c.l.b16 %v211
    %v530 = vunpack.c.h.b16 %v211
    %v531 = vunpack.c.l.b16 %v212
    %v532 = vunpack.c.h.b16 %v212
    %v533 = vunpack.c.l.b16 %v213
    %v534 = vunpack.c.h.b16 %v213
    %v535 = vunpack.c.l.b16 %v214
    %v536 = vunpack.c.h.b16 %v214
    %v537 = vunpack.c.l.b16 %v215
    %v538 = vunpack.c.h.b16 %v215
    %v539 = vunpack.c.l.b16 %v216
    %v540 = vunpack.c.h.b16 %v216
    %v541 = vunpack.c.l.b16 %v217
    %v542 = vunpack.c.h.b16 %v217
    %v543 = vunpack.c.l.b16 %v218
    %v544 = vunpack.c.h.b16 %v218
    %v545 = vunpack.c.l.b16 %v219
    %v546 = vunpack.c.h.b16 %v219
    %v547 = vunpack.c.l.b16 %v220
    %v548 = vunpack.c.h.b16 %v220
    %v549 = vunpack.c.l.b16 %v221
    %v550 = vunpack.c.h.b16 %v221
    %v551 = vunpack.c.l.b16 %v222
    %v552 = vunpack.c.h.b16 %v222
    %v553 = vunpack.c.l.b16 %v223
    %v554 = vunpack.c.h.b16 %v223
    %v555 = vunpack.c.l.b16 %v224
    %v556 = vunpack.c.h.b16 %v224
    %v557 = vunpack.c.l.b16 %v225
    %v558 = vunpack.c.h.b16 %v225
    %v559 = vunpack.c.l.b16 %v226
    %v560 = vunpack.c.h.b16 %v226
    %v561 = vunpack.c.l.b16 %v227
    %v562 = vunpack.c.h.b16 %v227
    %v563 = vunpack.c.l.b16 %v228
    %v564 = vunpack.c.h.b16 %v228
    %v565 = vunpack.c.l.b16 %v229
    %v566 = vunpack.c.h.b16 %v229
    %v567 = vunpack.c.l.b16 %v230
    %v568 = vunpack.c.h.b16 %v230
    %v569 = vunpack.c.l.b16 %v231
    %v570 = vunpack.c.h.b16 %v231
    %v571 = vunpack.c.l.b16 %v232
    %v572 = vunpack.c.h.b16 %v232
    %v573 = vunpack.c.l.b16 %v233
    %v574 = vunpack.c.h.b16 %v233
    %v575 = vunpack.c.l.b16 %v234
    %v576 = vunpack.c.h.b16 %v234
    %v577 = vunpack.c.l.b16 %v235
    %v578 = vunpack.c.h.b16 %v235
    %v579 = vunpack.c.l.b16 %v236
    %v580 = vunpack.c.h.b16 %v236
    %v581 = vunpack.c.l.b16 %v237
    %v582 = vunpack.c.h.b16 %v237
    %v583 = vunpack.c.l.b16 %v238
    %v584 = vunpack.c.h.b16 %v238
    %v585 = vunpack.c.l.b16 %v239
    %v586 = vunpack.c.h.b16 %v239
    %v587 = vunpack.c.l.b16 %v240
    %v588 = vunpack.c.h.b16 %v240
    %v589 = vunpack.c.l.b16 %v241
    %v590 = vunpack.c.h.b16 %v241
    %v591 = vunpack.c.l.b16 %v242
    %v592 = vunpack.c.h.b16 %v242
    %v593 = vunpack.c.l.b16 %v243
    %v594 = vunpack.c.h.b16 %v243
    %v595 = vunpack.c.l.b16 %v244
    %v596 = vunpack.c.h.b16 %v244
    %v597 = vunpack.c.l.b16 %v245
    %v598 = vunpack.c.h.b16 %v245
    %v599 = vunpack.c.l.b16 %v246
    %v600 = vunpack.c.h.b16 %v246
    %v601 = vunpack.c.l.b16 %v247
    %v602 = vunpack.c.h.b16 %v247
    %v603 = vunpack.c.l.b16 %v248
    %v604 = vunpack.c.h.b16 %v248
    %v605 = vunpack.c.l.b16 %v249
    %v606 = vunpack.c.h.b16 %v249
    %v607 = vunpack.c.l.b16 %v250
    %v608 = vunpack.c.h.b16 %v250
    %v609 = vunpack.c.l.b16 %v251
    %v610 = vunpack.c.h.b16 %v251
    %v611 = vunpack.c.l.b16 %v252
    %v612 = vunpack.c.h.b16 %v252
    %v613 = vunpack.c.l.b16 %v253
    %v614 = vunpack.c.h.b16 %v253
    %v615 = vunpack.c.l.b16 %v254
    %v616 = vunpack.c.h.b16 %v254
    %v617 = vunpack.c.l.b16 %v255
    %v618 = vunpack.c.h.b16 %v255
    %v619 = vunpack.c.l.b16 %v256
    %v620 = vunpack.c.h.b16 %v256
    %v621 = vunpack.c.l.b16 %v257
    %v622 = vunpack.c.h.b16 %v257
    %v623 = vunpack.c.l.b16 %v258
    %v624 = vunpack.c.h.b16 %v258
    %v625 = vunpack.c.l.b16 %v259
    %v626 = vunpack.c.h.b16 %v259
    %v627 = vunpack.c.l.b16 %v260
    %v628 = vunpack.c.h.b16 %v260
    %v629 = vunpack.c.l.b16 %v261
    %v630 = vunpack.c.h.b16 %v261
    %v631 = vunpack.c.l.b16 %v262
    %v632 = vunpack.c.h.b16 %v262
    %v633 = vunpack.c.l.b16 %v263
    %v634 = vunpack.c.h.b16 %v263
    %v635 = vunpack.c.l.b16 %v264
    %v636 = vunpack.c.h.b16 %v264
    %v637 = vunpack.c.l.b16 %v265
    %v638 = vunpack.c.h.b16 %v265
    %v639 = vunpack.c.l.b16 %v266
    %v640 = vunpack.c.h.b16 %v266
    %v641 = vunpack.c.l.b16 %v267
    %v642 = vunpack.c.h.b16 %v267
    %v643 = vunpack.c.l.b16 %v268
    %v644 = vunpack.c.h.b16 %v268
    %v645 = vunpack.c.l.b16 %v269
    %v646 = vunpack.c.h.b16 %v269
    %v647 = vunpack.c.l.b16 %v270
    %v648 = vunpack.c.h.b16 %v270
    %v649 = vunpack.c.l.b16 %v271
    %v650 = vunpack.c.h.b16 %v271
    %v651 = vunpack.c.l.b16 %v272
    %v652 = vunpack.c.h.b16 %v272
    %v653 = vunpack.c.l.b16 %v273
    %v654 = vunpack.c.h.b16 %v273
    %v655 = vunpack.c.l.b16 %v274
    %v656 = vunpack.c.h.b16 %v274
    %v657 = vunpack.c.l.b16 %v275
    %v658 = vunpack.c.h.b16 %v275
    %v659 = vunpack.c.l.b16 %v276
    %v660 = vunpack.c.h.b16 %v276
    %v661 = vunpack.c.l.b16 %v277
    %v662 = vunpack.c.h.b16 %v277
    %v663 = vunpack.c.l.b16 %v278
    %v664 = vunpack.c.h.b16 %v278
    %v665 = vunpack.c.l.b16 %v279
    %v666 = vunpack.c.h.b16 %v279
    %v667 = vunpack.c.l.b16 %v280
    %v668 = vunpack.c.h.b16 %v280
    %v669 = vunpack.c.l.b16 %v281
    %v670 = vunpack.c.h.b16 %v281
    %v671 = vunpack.c.l.b16 %v282
    %v672 = vunpack.c.h.b16 %v282
    %v673 = vunpack.c.l.b16 %v283
    %v674 = vunpack.c.h.b16 %v283
    %v675 = vunpack.c.l.b16 %v284
    %v676 = vunpack.c.h.b16 %v284
    %v677 = vunpack.c.l.b16 %v285
    %v678 = vunpack.c.h.b16 %v285
    %v679 = vunpack.c.l.b16 %v286
    %v680 = vunpack.c.h.b16 %v286
    %v681 = vunpack.c.l.b16 %v287
    %v682 = vunpack.c.h.b16 %v287
    %v683 = vunpack.c.l.b16 %v288
    %v684 = vunpack.c.h.b16 %v288
    %v685 = vpack.c.b16 %v433, %v429
    %v686 = vpack.c.b16 %v434, %v430
    %v687 = vpack.c.b16 %v435, %v431
    %v688 = vpack.c.b16 %v436, %v432
    %v689 = vpack.c.b16 %v441, %v437
    %v690 = vpack.c.b16 %v442, %v438
    %v691 = vpack.c.b16 %v443, %v439
    %v692 = vpack.c.b16 %v444, %v440
    %v693 = vpack.c.b16 %v449, %v445
    %v694 = vpack.c.b16 %v450, %v446
    %v695 = vpack.c.b16 %v451, %v447
    %v696 = vpack.c.b16 %v452, %v448
    %v697 = vpack.c.b16 %v457, %v453
    %v698 = vpack.c.b16 %v458, %v454
    %v699 = vpack.c.b16 %v459, %v455
    %v700 = vpack.c.b16 %v460, %v456
    %v701 = vpack.c.b16 %v465, %v461
    %v702 = vpack.c.b16 %v466, %v462
    %v703 = vpack.c.b16 %v467, %v463
    %v704 = vpack.c.b16 %v468, %v464
    %v705 = vpack.c.b16 %v473, %v469
    %v706 = vpack.c.b16 %v474, %v470
    %v707 = vpack.c.b16 %v475, %v471
    %v708 = vpack.c.b16 %v476, %v472
    %v709 = vpack.c.b16 %v481, %v477
    %v710 = vpack.c.b16 %v482, %v478
    %v711 = vpack.c.b16 %v483, %v479
    %v712 = vpack.c.b16 %v484, %v480
    %v713 = vpack.c.b16 %v489, %v485
    %v714 = vpack.c.b16 %v490, %v486
    %v715 = vpack.c.b16 %v491, %v487
    %v716 = vpack.c.b16 %v492, %v488
    %v717 = vpack.c.b16 %v497, %v493
    %v718 = vpack.c.b16 %v498, %v494
    %v719 = vpack.c.b16 %v499, %v495
    %v720 = vpack.c.b16 %v500, %v496
    %v721 = vpack.c.b16 %v505, %v501
    %v722 = vpack.c.b16 %v506, %v502
    %v723 = vpack.c.b16 %v507, %v503
    %v724 = vpack.c.b16 %v508, %v504
    %v725 = vpack.c.b16 %v513, %v509
    %v726 = vpack.c.b16 %v514, %v510
    %v727 = vpack.c.b16 %v515, %v511
    %v728 = vpack.c.b16 %v516, %v512
    %v729 = vpack.c.b16 %v521, %v517
    %v730 = vpack.c.b16 %v522, %v518
    %v731 = vpack.c.b16 %v523, %v519
    %v732 = vpack.c.b16 %v524, %v520
    %v733 = vpack.c.b16 %v529, %v525
    %v734 = vpack.c.b16 %v530, %v526
    %v735 = vpack.c.b16 %v531, %v527
    %v736 = vpack.c.b16 %v532, %v528
    %v737 = vpack.c.b16 %v537, %v533
    %v738 = vpack.c.b16 %v538, %v534
    %v739 = vpack.c.b16 %v539, %v535
    %v740 = vpack.c.b16 %v540, %v536
    %v741 = vpack.c.b16 %v545, %v541
    %v742 = vpack.c.b16 %v546, %v542
    %v743 = vpack.c.b16 %v547, %v543
    %v744 = vpack.c.b16 %v548, %v544
    %v745 = vpack.c.b16 %v553, %v549
    %v746 = vpack.c.b16 %v554, %v550
    %v747 = vpack.c.b16 %v555, %v551
    %v748 = vpack.c.b16 %v556, %v552
    %v749 = vpack.c.b16 %v561, %v557
    %v750 = vpack.c.b16 %v562, %v558
    %v751 = vpack.c.b16 %v563, %v559
    %v752 = vpack.c.b16 %v564, %v560
    %v753 = vpack.c.b16 %v569, %v565
    %v754 = vpack.c.b16 %v570, %v566
    %v755 = vpack.c.b16 %v571, %v567
    %v756 = vpack.c.b16 %v572, %v568
    %v757 = vpack.c.b16 %v577, %v573
    %v758 = vpack.c.b16 %v578, %v574
    %v759 = vpack.c.b16 %v579, %v575
    %v760 = vpack.c.b16 %v580, %v576
    %v761 = vpack.c.b16 %v585, %v581
    %v762 = vpack.c.b16 %v586, %v582
    %v763 = vpack.c.b16 %v587, %v583
    %v764 = vpack.c.b16 %v588, %v584
    %v765 = vpack.c.b16 %v593, %v589
    %v766 = vpack.c.b16 %v594, %v590
    %v767 = vpack.c.b16 %v595, %v591
    %v768 = vpack.c.b16 %v596, %v592
    %v769 = vpack.c.b16 %v601, %v597
    %v770 = vpack.c.b16 %v602, %v598
    %v771 = vpack.c.b16 %v603, %v599
    %v772 = vpack.c.b16 %v604, %v600
    %v773 = vpack.c.b16 %v609, %v605
    %v774 = vpack.c.b16 %v610, %v606
    %v775 = vpack.c.b16 %v611, %v607
    %v776 = vpack.c.b16 %v612, %v608
    %v777 = vpack.c.b16 %v617, %v613
    %v778 = vpack.c.b16 %v618, %v614
    %v779 = vpack.c.b16 %v619, %v615
    %v780 = vpack.c.b16 %v620, %v616
    %v781 = vpack.c.b16 %v625, %v621
    %v782 = vpack.c.b16 %v626, %v622
    %v783 = vpack.c.b16 %v627, %v623
    %v784 = vpack.c.b16 %v628, %v624
    %v785 = vpack.c.b16 %v633, %v629
    %v786 = vpack.c.b16 %v634, %v630
    %v787 = vpack.c.b16 %v635, %v631
    %v788 = vpack.c.b16 %v636, %v632
    %v789 = vpack.c.b16 %v641, %v637
    %v790 = vpack.c.b16 %v642, %v638
    %v791 = vpack.c.b16 %v643, %v639
    %v792 = vpack.c.b16 %v644, %v640
    %v793 = vpack.c.b16 %v649, %v645
    %v794 = vpack.c.b16 %v650, %v646
    %v795 = vpack.c.b16 %v651, %v647
    %v796 = vpack.c.b16 %v652, %v648
    %v797 = vpack.c.b16 %v657, %v653
    %v798 = vpack.c.b16 %v658, %v654
    %v799 = vpack.c.b16 %v659, %v655
    %v800 = vpack.c.b16 %v660, %v656
    %v801 = vpack.c.b16 %v665, %v661
    %v802 = vpack.c.b16 %v666, %v662
    %v803 = vpack.c.b16 %v667, %v663
    %v804 = vpack.c.b16 %v668, %v664
    %v805 = vpack.c.b16 %v673, %v669
    %v806 = vpack.c.b16 %v674, %v670
    %v807 = vpack.c.b16 %v675, %v671
    %v808 = vpack.c.b16 %v676, %v672
    %v809 = vpack.c.b16 %v681, %v677
    %v810 = vpack.c.b16 %v682, %v678
    %v811 = vpack.c.b16 %v683, %v679
    %v812 = vpack.c.b16 %v684, %v680
    %941 = vmatpush.bf16.msra.mxu0 %v713
    %942 = vmatpush.bf16.msra.mxu0 %v709
    %943 = vmatpush.bf16.msra.mxu0 %v705
    %944 = vmatpush.bf16.msra.mxu0 %v701
    %945 = vmatpush.bf16.msra.mxu0 %v697
    %946 = vmatpush.bf16.msra.mxu0 %v693
    %947 = vmatpush.bf16.msra.mxu0 %v689
    %948 = vmatpush.bf16.msra.mxu0 %v685
    %949 = vmatmul.bf16.gmra.mxu0 %v157
    %v950 = vpop.f32.mrf.mxu0
    %v951 = vadd.f32 %v297, %v950
    %v952 = vpop.f32.mrf.mxu0
    %953 = vdwg.mxu0
    %954 = vmatpush.bf16.msra.mxu0 %v745
    %955 = vmatpush.bf16.msra.mxu0 %v741
    %956 = vmatpush.bf16.msra.mxu0 %v737
    %957 = vmatpush.bf16.msra.mxu0 %v733
    %958 = vmatpush.bf16.msra.mxu0 %v729
    %959 = vmatpush.bf16.msra.mxu0 %v725
    %960 = vmatpush.bf16.msra.mxu0 %v721
    %961 = vmatpush.bf16.msra.mxu0 %v717
    %962 = vmatmul.bf16.gmra.mxu0 %v158
    %v963 = vpop.f32.mrf.mxu0
    %v964 = vadd.f32 %v951, %v963
    %v965 = vpop.f32.mrf.mxu0
    %966 = vdwg.mxu0
    %967 = vmatpush.bf16.msra.mxu0 %v777
    %968 = vmatpush.bf16.msra.mxu0 %v773
    %969 = vmatpush.bf16.msra.mxu0 %v769
    %970 = vmatpush.bf16.msra.mxu0 %v765
    %971 = vmatpush.bf16.msra.mxu0 %v761
    %972 = vmatpush.bf16.msra.mxu0 %v757
    %973 = vmatpush.bf16.msra.mxu0 %v753
    %974 = vmatpush.bf16.msra.mxu0 %v749
    %975 = vmatmul.bf16.gmra.mxu0 %v159
    %v976 = vpop.f32.mrf.mxu0
    %v977 = vadd.f32 %v964, %v976
    %v978 = vpop.f32.mrf.mxu0
    %979 = vdwg.mxu0
    %980 = vmatpush.bf16.msra.mxu0 %v809
    %981 = vmatpush.bf16.msra.mxu0 %v805
    %982 = vmatpush.bf16.msra.mxu0 %v801
    %983 = vmatpush.bf16.msra.mxu0 %v797
    %984 = vmatpush.bf16.msra.mxu0 %v793
    %985 = vmatpush.bf16.msra.mxu0 %v789
    %986 = vmatpush.bf16.msra.mxu0 %v785
    %987 = vmatpush.bf16.msra.mxu0 %v781
    %988 = vmatmul.bf16.gmra.mxu0 %v160
    %v989 = vpop.f32.mrf.mxu0
    %v990 = vadd.f32 %v977, %v989
    %v991 = vpop.f32.mrf.mxu0
    %992 = vdwg.mxu0
    %993 = vmatpush.bf16.msra.mxu0 %v714
    %994 = vmatpush.bf16.msra.mxu0 %v710
    %995 = vmatpush.bf16.msra.mxu0 %v706
    %996 = vmatpush.bf16.msra.mxu0 %v702
    %997 = vmatpush.bf16.msra.mxu0 %v698
    %998 = vmatpush.bf16.msra.mxu0 %v694
    %999 = vmatpush.bf16.msra.mxu0 %v690
    %1000 = vmatpush.bf16.msra.mxu0 %v686
    %1001 = vmatmul.bf16.gmra.mxu0 %v157
    %v1002 = vpop.f32.mrf.mxu0
    %v1003 = vadd.f32 %v298, %v1002
    %v1004 = vpop.f32.mrf.mxu0
    %1005 = vdwg.mxu0
    %1006 = vmatpush.bf16.msra.mxu0 %v746
    %1007 = vmatpush.bf16.msra.mxu0 %v742
    %1008 = vmatpush.bf16.msra.mxu0 %v738
    %1009 = vmatpush.bf16.msra.mxu0 %v734
    %1010 = vmatpush.bf16.msra.mxu0 %v730
    %1011 = vmatpush.bf16.msra.mxu0 %v726
    %1012 = vmatpush.bf16.msra.mxu0 %v722
    %1013 = vmatpush.bf16.msra.mxu0 %v718
    %1014 = vmatmul.bf16.gmra.mxu0 %v158
    %v1015 = vpop.f32.mrf.mxu0
    %v1016 = vadd.f32 %v1003, %v1015
    %v1017 = vpop.f32.mrf.mxu0
    %1018 = vdwg.mxu0
    %1019 = vmatpush.bf16.msra.mxu0 %v778
    %1020 = vmatpush.bf16.msra.mxu0 %v774
    %1021 = vmatpush.bf16.msra.mxu0 %v770
    %1022 = vmatpush.bf16.msra.mxu0 %v766
    %1023 = vmatpush.bf16.msra.mxu0 %v762
    %1024 = vmatpush.bf16.msra.mxu0 %v758
    %1025 = vmatpush.bf16.msra.mxu0 %v754
    %1026 = vmatpush.bf16.msra.mxu0 %v750
    %1027 = vmatmul.bf16.gmra.mxu0 %v159
    %v1028 = vpop.f32.mrf.mxu0
    %v1029 = vadd.f32 %v1016, %v1028
    %v1030 = vpop.f32.mrf.mxu0
    %1031 = vdwg.mxu0
    %1032 = vmatpush.bf16.msra.mxu0 %v810
    %1033 = vmatpush.bf16.msra.mxu0 %v806
    %1034 = vmatpush.bf16.msra.mxu0 %v802
    %1035 = vmatpush.bf16.msra.mxu0 %v798
    %1036 = vmatpush.bf16.msra.mxu0 %v794
    %1037 = vmatpush.bf16.msra.mxu0 %v790
    %1038 = vmatpush.bf16.msra.mxu0 %v786
    %1039 = vmatpush.bf16.msra.mxu0 %v782
    %1040 = vmatmul.bf16.gmra.mxu0 %v160
    %v1041 = vpop.f32.mrf.mxu0
    %v1042 = vadd.f32 %v1029, %v1041
    %v1043 = vpop.f32.mrf.mxu0
    %1044 = vdwg.mxu0
    %1045 = vmatpush.bf16.msra.mxu0 %v715
    %1046 = vmatpush.bf16.msra.mxu0 %v711
    %1047 = vmatpush.bf16.msra.mxu0 %v707
    %1048 = vmatpush.bf16.msra.mxu0 %v703
    %1049 = vmatpush.bf16.msra.mxu0 %v699
    %1050 = vmatpush.bf16.msra.mxu0 %v695
    %1051 = vmatpush.bf16.msra.mxu0 %v691
    %1052 = vmatpush.bf16.msra.mxu0 %v687
    %1053 = vmatmul.bf16.gmra.mxu0 %v157
    %v1054 = vpop.f32.mrf.mxu0
    %v1055 = vadd.f32 %v299, %v1054
    %v1056 = vpop.f32.mrf.mxu0
    %1057 = vdwg.mxu0
    %1058 = vmatpush.bf16.msra.mxu0 %v747
    %1059 = vmatpush.bf16.msra.mxu0 %v743
    %1060 = vmatpush.bf16.msra.mxu0 %v739
    %1061 = vmatpush.bf16.msra.mxu0 %v735
    %1062 = vmatpush.bf16.msra.mxu0 %v731
    %1063 = vmatpush.bf16.msra.mxu0 %v727
    %1064 = vmatpush.bf16.msra.mxu0 %v723
    %1065 = vmatpush.bf16.msra.mxu0 %v719
    %1066 = vmatmul.bf16.gmra.mxu0 %v158
    %v1067 = vpop.f32.mrf.mxu0
    %v1068 = vadd.f32 %v1055, %v1067
    %v1069 = vpop.f32.mrf.mxu0
    %1070 = vdwg.mxu0
    %1071 = vmatpush.bf16.msra.mxu0 %v779
    %1072 = vmatpush.bf16.msra.mxu0 %v775
    %1073 = vmatpush.bf16.msra.mxu0 %v771
    %1074 = vmatpush.bf16.msra.mxu0 %v767
    %1075 = vmatpush.bf16.msra.mxu0 %v763
    %1076 = vmatpush.bf16.msra.mxu0 %v759
    %1077 = vmatpush.bf16.msra.mxu0 %v755
    %1078 = vmatpush.bf16.msra.mxu0 %v751
    %1079 = vmatmul.bf16.gmra.mxu0 %v159
    %v1080 = vpop.f32.mrf.mxu0
    %v1081 = vadd.f32 %v1068, %v1080
    %v1082 = vpop.f32.mrf.mxu0
    %1083 = vdwg.mxu0
    %1084 = vmatpush.bf16.msra.mxu0 %v811
    %1085 = vmatpush.bf16.msra.mxu0 %v807
    %1086 = vmatpush.bf16.msra.mxu0 %v803
    %1087 = vmatpush.bf16.msra.mxu0 %v799
    %1088 = vmatpush.bf16.msra.mxu0 %v795
    %1089 = vmatpush.bf16.msra.mxu0 %v791
    %1090 = vmatpush.bf16.msra.mxu0 %v787
    %1091 = vmatpush.bf16.msra.mxu0 %v783
    %1092 = vmatmul.bf16.gmra.mxu0 %v160
    %v1093 = vpop.f32.mrf.mxu0
    %v1094 = vadd.f32 %v1081, %v1093
    %v1095 = vpop.f32.mrf.mxu0
    %1096 = vdwg.mxu0
    %1097 = vmatpush.bf16.msra.mxu0 %v716
    %1098 = vmatpush.bf16.msra.mxu0 %v712
    %1099 = vmatpush.bf16.msra.mxu0 %v708
    %1100 = vmatpush.bf16.msra.mxu0 %v704
    %1101 = vmatpush.bf16.msra.mxu0 %v700
    %1102 = vmatpush.bf16.msra.mxu0 %v696
    %1103 = vmatpush.bf16.msra.mxu0 %v692
    %1104 = vmatpush.bf16.msra.mxu0 %v688
    %1105 = vmatmul.bf16.gmra.mxu0 %v157
    %v1106 = vpop.f32.mrf.mxu0
    %v1107 = vadd.f32 %v300, %v1106
    %v1108 = vpop.f32.mrf.mxu0
    %1109 = vdwg.mxu0
    %1110 = vmatpush.bf16.msra.mxu0 %v748
    %1111 = vmatpush.bf16.msra.mxu0 %v744
    %1112 = vmatpush.bf16.msra.mxu0 %v740
    %1113 = vmatpush.bf16.msra.mxu0 %v736
    %1114 = vmatpush.bf16.msra.mxu0 %v732
    %1115 = vmatpush.bf16.msra.mxu0 %v728
    %1116 = vmatpush.bf16.msra.mxu0 %v724
    %1117 = vmatpush.bf16.msra.mxu0 %v720
    %1118 = vmatmul.bf16.gmra.mxu0 %v158
    %v1119 = vpop.f32.mrf.mxu0
    %v1120 = vadd.f32 %v1107, %v1119
    %v1121 = vpop.f32.mrf.mxu0
    %1122 = vdwg.mxu0
    %1123 = vmatpush.bf16.msra.mxu0 %v780
    %1124 = vmatpush.bf16.msra.mxu0 %v776
    %1125 = vmatpush.bf16.msra.mxu0 %v772
    %1126 = vmatpush.bf16.msra.mxu0 %v768
    %1127 = vmatpush.bf16.msra.mxu0 %v764
    %1128 = vmatpush.bf16.msra.mxu0 %v760
    %1129 = vmatpush.bf16.msra.mxu0 %v756
    %1130 = vmatpush.bf16.msra.mxu0 %v752
    %1131 = vmatmul.bf16.gmra.mxu0 %v159
    %v1132 = vpop.f32.mrf.mxu0
    %v1133 = vadd.f32 %v1120, %v1132
    %v1134 = vpop.f32.mrf.mxu0
    %1135 = vdwg.mxu0
    %1136 = vmatpush.bf16.msra.mxu0 %v812
    %1137 = vmatpush.bf16.msra.mxu0 %v808
    %1138 = vmatpush.bf16.msra.mxu0 %v804
    %1139 = vmatpush.bf16.msra.mxu0 %v800
    %1140 = vmatpush.bf16.msra.mxu0 %v796
    %1141 = vmatpush.bf16.msra.mxu0 %v792
    %1142 = vmatpush.bf16.msra.mxu0 %v788
    %1143 = vmatpush.bf16.msra.mxu0 %v784
    %1144 = vmatmul.bf16.gmra.mxu0 %v160
    %v1145 = vpop.f32.mrf.mxu0
    %v1146 = vadd.f32 %v1133, %v1145
    %v1147 = vpop.f32.mrf.mxu0
    %1148 = vdwg.mxu0
    %v1149 = vmax.f32 %v990, 0.0
    %v1150 = vmax.f32 %v1042, 0.0
    %v1151 = vmax.f32 %v1094, 0.0
    %v1152 = vmax.f32 %v1146, 0.0
    %v1153 = vpack.c.bf16 %v1149, %v1149
    %v1154 = vpack.c.bf16 %v1150, %v1150
    %v1155 = vpack.c.bf16 %v1151, %v1151
    %v1156 = vpack.c.bf16 %v1152, %v1152
    %v1157 = vld [vmem:[#allocation5] sm:$0xff]
    %v1158 = vld [vmem:[#allocation5 + $0x8] sm:$0xff]
    %v1159 = vld [vmem:[#allocation5 + $0x10] sm:$0xff]
    %v1160 = vld [vmem:[#allocation5 + $0x18] sm:$0xff]
    %v1161 = vld [vmem:[#allocation5 + $0x20] sm:$0xff]
    %v1162 = vld [vmem:[#allocation5 + $0x28] sm:$0xff]
    %v1163 = vld [vmem:[#allocation5 + $0x30] sm:$0xff]
    %v1164 = vld [vmem:[#allocation5 + $0x38] sm:$0xff]
    %v1165 = vld [vmem:[#allocation5 + $0x40] sm:$0xff]
    %v1166 = vld [vmem:[#allocation5 + $0x48] sm:$0xff]
    %v1167 = vld [vmem:[#allocation5 + $0x50] sm:$0xff]
    %v1168 = vld [vmem:[#allocation5 + $0x58] sm:$0xff]
    %v1169 = vld [vmem:[#allocation5 + $0x60] sm:$0xff]
    %v1170 = vld [vmem:[#allocation5 + $0x68] sm:$0xff]
    %v1171 = vld [vmem:[#allocation5 + $0x70] sm:$0xff]
    %v1172 = vld [vmem:[#allocation5 + $0x78] sm:$0xff]
    %v1173 = vld [vmem:[#allocation5 + $0x80] sm:$0xff]
    %v1174 = vld [vmem:[#allocation5 + $0x88] sm:$0xff]
    %v1175 = vld [vmem:[#allocation5 + $0x90] sm:$0xff]
    %v1176 = vld [vmem:[#allocation5 + $0x98] sm:$0xff]
    %v1177 = vld [vmem:[#allocation5 + $0xa0] sm:$0xff]
    %v1178 = vld [vmem:[#allocation5 + $0xa8] sm:$0xff]
    %v1179 = vld [vmem:[#allocation5 + $0xb0] sm:$0xff]
    %v1180 = vld [vmem:[#allocation5 + $0xb8] sm:$0xff]
    %v1181 = vld [vmem:[#allocation5 + $0xc0] sm:$0xff]
    %v1182 = vld [vmem:[#allocation5 + $0xc8] sm:$0xff]
    %v1183 = vld [vmem:[#allocation5 + $0xd0] sm:$0xff]
    %v1184 = vld [vmem:[#allocation5 + $0xd8] sm:$0xff]
    %v1185 = vld [vmem:[#allocation5 + $0xe0] sm:$0xff]
    %v1186 = vld [vmem:[#allocation5 + $0xe8] sm:$0xff]
    %v1187 = vld [vmem:[#allocation5 + $0xf0] sm:$0xff]
    %v1188 = vld [vmem:[#allocation5 + $0xf8] sm:$0xff]
    %v1189 = vld [vmem:[#allocation5 + $0x100] sm:$0xff]
    %v1190 = vld [vmem:[#allocation5 + $0x108] sm:$0xff]
    %v1191 = vld [vmem:[#allocation5 + $0x110] sm:$0xff]
    %v1192 = vld [vmem:[#allocation5 + $0x118] sm:$0xff]
    %v1193 = vld [vmem:[#allocation5 + $0x120] sm:$0xff]
    %v1194 = vld [vmem:[#allocation5 + $0x128] sm:$0xff]
    %v1195 = vld [vmem:[#allocation5 + $0x130] sm:$0xff]
    %v1196 = vld [vmem:[#allocation5 + $0x138] sm:$0xff]
    %v1197 = vld [vmem:[#allocation5 + $0x140] sm:$0xff]
    %v1198 = vld [vmem:[#allocation5 + $0x148] sm:$0xff]
    %v1199 = vld [vmem:[#allocation5 + $0x150] sm:$0xff]
    %v1200 = vld [vmem:[#allocation5 + $0x158] sm:$0xff]
    %v1201 = vld [vmem:[#allocation5 + $0x160] sm:$0xff]
    %v1202 = vld [vmem:[#allocation5 + $0x168] sm:$0xff]
    %v1203 = vld [vmem:[#allocation5 + $0x170] sm:$0xff]
    %v1204 = vld [vmem:[#allocation5 + $0x178] sm:$0xff]
    %v1205 = vld [vmem:[#allocation5 + $0x180] sm:$0xff]
    %v1206 = vld [vmem:[#allocation5 + $0x188] sm:$0xff]
    %v1207 = vld [vmem:[#allocation5 + $0x190] sm:$0xff]
    %v1208 = vld [vmem:[#allocation5 + $0x198] sm:$0xff]
    %v1209 = vld [vmem:[#allocation5 + $0x1a0] sm:$0xff]
    %v1210 = vld [vmem:[#allocation5 + $0x1a8] sm:$0xff]
    %v1211 = vld [vmem:[#allocation5 + $0x1b0] sm:$0xff]
    %v1212 = vld [vmem:[#allocation5 + $0x1b8] sm:$0xff]
    %v1213 = vld [vmem:[#allocation5 + $0x1c0] sm:$0xff]
    %v1214 = vld [vmem:[#allocation5 + $0x1c8] sm:$0xff]
    %v1215 = vld [vmem:[#allocation5 + $0x1d0] sm:$0xff]
    %v1216 = vld [vmem:[#allocation5 + $0x1d8] sm:$0xff]
    %v1217 = vld [vmem:[#allocation5 + $0x1e0] sm:$0xff]
    %v1218 = vld [vmem:[#allocation5 + $0x1e8] sm:$0xff]
    %v1219 = vld [vmem:[#allocation5 + $0x1f0] sm:$0xff]
    %v1220 = vld [vmem:[#allocation5 + $0x1f8] sm:$0xff]
    %v1221 = vld [vmem:[#allocation5 + $0x200] sm:$0xff]
    %v1222 = vld [vmem:[#allocation5 + $0x208] sm:$0xff]
    %v1223 = vld [vmem:[#allocation5 + $0x210] sm:$0xff]
    %v1224 = vld [vmem:[#allocation5 + $0x218] sm:$0xff]
    %v1225 = vld [vmem:[#allocation5 + $0x220] sm:$0xff]
    %v1226 = vld [vmem:[#allocation5 + $0x228] sm:$0xff]
    %v1227 = vld [vmem:[#allocation5 + $0x230] sm:$0xff]
    %v1228 = vld [vmem:[#allocation5 + $0x238] sm:$0xff]
    %v1229 = vld [vmem:[#allocation5 + $0x240] sm:$0xff]
    %v1230 = vld [vmem:[#allocation5 + $0x248] sm:$0xff]
    %v1231 = vld [vmem:[#allocation5 + $0x250] sm:$0xff]
    %v1232 = vld [vmem:[#allocation5 + $0x258] sm:$0xff]
    %v1233 = vld [vmem:[#allocation5 + $0x260] sm:$0xff]
    %v1234 = vld [vmem:[#allocation5 + $0x268] sm:$0xff]
    %v1235 = vld [vmem:[#allocation5 + $0x270] sm:$0xff]
    %v1236 = vld [vmem:[#allocation5 + $0x278] sm:$0xff]
    %v1237 = vld [vmem:[#allocation5 + $0x280] sm:$0xff]
    %v1238 = vld [vmem:[#allocation5 + $0x288] sm:$0xff]
    %v1239 = vld [vmem:[#allocation5 + $0x290] sm:$0xff]
    %v1240 = vld [vmem:[#allocation5 + $0x298] sm:$0xff]
    %v1241 = vld [vmem:[#allocation5 + $0x2a0] sm:$0xff]
    %v1242 = vld [vmem:[#allocation5 + $0x2a8] sm:$0xff]
    %v1243 = vld [vmem:[#allocation5 + $0x2b0] sm:$0xff]
    %v1244 = vld [vmem:[#allocation5 + $0x2b8] sm:$0xff]
    %v1245 = vld [vmem:[#allocation5 + $0x2c0] sm:$0xff]
    %v1246 = vld [vmem:[#allocation5 + $0x2c8] sm:$0xff]
    %v1247 = vld [vmem:[#allocation5 + $0x2d0] sm:$0xff]
    %v1248 = vld [vmem:[#allocation5 + $0x2d8] sm:$0xff]
    %v1249 = vld [vmem:[#allocation5 + $0x2e0] sm:$0xff]
    %v1250 = vld [vmem:[#allocation5 + $0x2e8] sm:$0xff]
    %v1251 = vld [vmem:[#allocation5 + $0x2f0] sm:$0xff]
    %v1252 = vld [vmem:[#allocation5 + $0x2f8] sm:$0xff]
    %v1253 = vld [vmem:[#allocation5 + $0x300] sm:$0xff]
    %v1254 = vld [vmem:[#allocation5 + $0x308] sm:$0xff]
    %v1255 = vld [vmem:[#allocation5 + $0x310] sm:$0xff]
    %v1256 = vld [vmem:[#allocation5 + $0x318] sm:$0xff]
    %v1257 = vld [vmem:[#allocation5 + $0x320] sm:$0xff]
    %v1258 = vld [vmem:[#allocation5 + $0x328] sm:$0xff]
    %v1259 = vld [vmem:[#allocation5 + $0x330] sm:$0xff]
    %v1260 = vld [vmem:[#allocation5 + $0x338] sm:$0xff]
    %v1261 = vld [vmem:[#allocation5 + $0x340] sm:$0xff]
    %v1262 = vld [vmem:[#allocation5 + $0x348] sm:$0xff]
    %v1263 = vld [vmem:[#allocation5 + $0x350] sm:$0xff]
    %v1264 = vld [vmem:[#allocation5 + $0x358] sm:$0xff]
    %v1265 = vld [vmem:[#allocation5 + $0x360] sm:$0xff]
    %v1266 = vld [vmem:[#allocation5 + $0x368] sm:$0xff]
    %v1267 = vld [vmem:[#allocation5 + $0x370] sm:$0xff]
    %v1268 = vld [vmem:[#allocation5 + $0x378] sm:$0xff]
    %v1269 = vld [vmem:[#allocation5 + $0x380] sm:$0xff]
    %v1270 = vld [vmem:[#allocation5 + $0x388] sm:$0xff]
    %v1271 = vld [vmem:[#allocation5 + $0x390] sm:$0xff]
    %v1272 = vld [vmem:[#allocation5 + $0x398] sm:$0xff]
    %v1273 = vld [vmem:[#allocation5 + $0x3a0] sm:$0xff]
    %v1274 = vld [vmem:[#allocation5 + $0x3a8] sm:$0xff]
    %v1275 = vld [vmem:[#allocation5 + $0x3b0] sm:$0xff]
    %v1276 = vld [vmem:[#allocation5 + $0x3b8] sm:$0xff]
    %v1277 = vld [vmem:[#allocation5 + $0x3c0] sm:$0xff]
    %v1278 = vld [vmem:[#allocation5 + $0x3c8] sm:$0xff]
    %v1279 = vld [vmem:[#allocation5 + $0x3d0] sm:$0xff]
    %v1280 = vld [vmem:[#allocation5 + $0x3d8] sm:$0xff]
    %v1281 = vld [vmem:[#allocation5 + $0x3e0] sm:$0xff]
    %v1282 = vld [vmem:[#allocation5 + $0x3e8] sm:$0xff]
    %v1283 = vld [vmem:[#allocation5 + $0x3f0] sm:$0xff]
    %v1284 = vld [vmem:[#allocation5 + $0x3f8] sm:$0xff]
    %v1285 = vperm.slane %v87, 2
    %v1286 = vperm.slane %v87, 6
    %v1287 = vperm.slane %v88, 2
    %v1288 = vperm.slane %v88, 6
    %v1293 = vperm.slane %v1285, 2
    %v1294 = vperm.slane %v1286, 2
    %v1295 = vperm.slane %v1287, 2
    %v1296 = vperm.slane %v1288, 2
    %v1425 = vunpack.c.l.b16 %v1157
    %v1426 = vunpack.c.h.b16 %v1157
    %v1427 = vunpack.c.l.b16 %v1158
    %v1428 = vunpack.c.h.b16 %v1158
    %v1429 = vunpack.c.l.b16 %v1159
    %v1430 = vunpack.c.h.b16 %v1159
    %v1431 = vunpack.c.l.b16 %v1160
    %v1432 = vunpack.c.h.b16 %v1160
    %v1433 = vunpack.c.l.b16 %v1161
    %v1434 = vunpack.c.h.b16 %v1161
    %v1435 = vunpack.c.l.b16 %v1162
    %v1436 = vunpack.c.h.b16 %v1162
    %v1437 = vunpack.c.l.b16 %v1163
    %v1438 = vunpack.c.h.b16 %v1163
    %v1439 = vunpack.c.l.b16 %v1164
    %v1440 = vunpack.c.h.b16 %v1164
    %v1441 = vunpack.c.l.b16 %v1165
    %v1442 = vunpack.c.h.b16 %v1165
    %v1443 = vunpack.c.l.b16 %v1166
    %v1444 = vunpack.c.h.b16 %v1166
    %v1445 = vunpack.c.l.b16 %v1167
    %v1446 = vunpack.c.h.b16 %v1167
    %v1447 = vunpack.c.l.b16 %v1168
    %v1448 = vunpack.c.h.b16 %v1168
    %v1449 = vunpack.c.l.b16 %v1169
    %v1450 = vunpack.c.h.b16 %v1169
    %v1451 = vunpack.c.l.b16 %v1170
    %v1452 = vunpack.c.h.b16 %v1170
    %v1453 = vunpack.c.l.b16 %v1171
    %v1454 = vunpack.c.h.b16 %v1171
    %v1455 = vunpack.c.l.b16 %v1172
    %v1456 = vunpack.c.h.b16 %v1172
    %v1457 = vunpack.c.l.b16 %v1173
    %v1458 = vunpack.c.h.b16 %v1173
    %v1459 = vunpack.c.l.b16 %v1174
    %v1460 = vunpack.c.h.b16 %v1174
    %v1461 = vunpack.c.l.b16 %v1175
    %v1462 = vunpack.c.h.b16 %v1175
    %v1463 = vunpack.c.l.b16 %v1176
    %v1464 = vunpack.c.h.b16 %v1176
    %v1465 = vunpack.c.l.b16 %v1177
    %v1466 = vunpack.c.h.b16 %v1177
    %v1467 = vunpack.c.l.b16 %v1178
    %v1468 = vunpack.c.h.b16 %v1178
    %v1469 = vunpack.c.l.b16 %v1179
    %v1470 = vunpack.c.h.b16 %v1179
    %v1471 = vunpack.c.l.b16 %v1180
    %v1472 = vunpack.c.h.b16 %v1180
    %v1473 = vunpack.c.l.b16 %v1181
    %v1474 = vunpack.c.h.b16 %v1181
    %v1475 = vunpack.c.l.b16 %v1182
    %v1476 = vunpack.c.h.b16 %v1182
    %v1477 = vunpack.c.l.b16 %v1183
    %v1478 = vunpack.c.h.b16 %v1183
    %v1479 = vunpack.c.l.b16 %v1184
    %v1480 = vunpack.c.h.b16 %v1184
    %v1481 = vunpack.c.l.b16 %v1185
    %v1482 = vunpack.c.h.b16 %v1185
    %v1483 = vunpack.c.l.b16 %v1186
    %v1484 = vunpack.c.h.b16 %v1186
    %v1485 = vunpack.c.l.b16 %v1187
    %v1486 = vunpack.c.h.b16 %v1187
    %v1487 = vunpack.c.l.b16 %v1188
    %v1488 = vunpack.c.h.b16 %v1188
    %v1489 = vunpack.c.l.b16 %v1189
    %v1490 = vunpack.c.h.b16 %v1189
    %v1491 = vunpack.c.l.b16 %v1190
    %v1492 = vunpack.c.h.b16 %v1190
    %v1493 = vunpack.c.l.b16 %v1191
    %v1494 = vunpack.c.h.b16 %v1191
    %v1495 = vunpack.c.l.b16 %v1192
    %v1496 = vunpack.c.h.b16 %v1192
    %v1497 = vunpack.c.l.b16 %v1193
    %v1498 = vunpack.c.h.b16 %v1193
    %v1499 = vunpack.c.l.b16 %v1194
    %v1500 = vunpack.c.h.b16 %v1194
    %v1501 = vunpack.c.l.b16 %v1195
    %v1502 = vunpack.c.h.b16 %v1195
    %v1503 = vunpack.c.l.b16 %v1196
    %v1504 = vunpack.c.h.b16 %v1196
    %v1505 = vunpack.c.l.b16 %v1197
    %v1506 = vunpack.c.h.b16 %v1197
    %v1507 = vunpack.c.l.b16 %v1198
    %v1508 = vunpack.c.h.b16 %v1198
    %v1509 = vunpack.c.l.b16 %v1199
    %v1510 = vunpack.c.h.b16 %v1199
    %v1511 = vunpack.c.l.b16 %v1200
    %v1512 = vunpack.c.h.b16 %v1200
    %v1513 = vunpack.c.l.b16 %v1201
    %v1514 = vunpack.c.h.b16 %v1201
    %v1515 = vunpack.c.l.b16 %v1202
    %v1516 = vunpack.c.h.b16 %v1202
    %v1517 = vunpack.c.l.b16 %v1203
    %v1518 = vunpack.c.h.b16 %v1203
    %v1519 = vunpack.c.l.b16 %v1204
    %v1520 = vunpack.c.h.b16 %v1204
    %v1521 = vunpack.c.l.b16 %v1205
    %v1522 = vunpack.c.h.b16 %v1205
    %v1523 = vunpack.c.l.b16 %v1206
    %v1524 = vunpack.c.h.b16 %v1206
    %v1525 = vunpack.c.l.b16 %v1207
    %v1526 = vunpack.c.h.b16 %v1207
    %v1527 = vunpack.c.l.b16 %v1208
    %v1528 = vunpack.c.h.b16 %v1208
    %v1529 = vunpack.c.l.b16 %v1209
    %v1530 = vunpack.c.h.b16 %v1209
    %v1531 = vunpack.c.l.b16 %v1210
    %v1532 = vunpack.c.h.b16 %v1210
    %v1533 = vunpack.c.l.b16 %v1211
    %v1534 = vunpack.c.h.b16 %v1211
    %v1535 = vunpack.c.l.b16 %v1212
    %v1536 = vunpack.c.h.b16 %v1212
    %v1537 = vunpack.c.l.b16 %v1213
    %v1538 = vunpack.c.h.b16 %v1213
    %v1539 = vunpack.c.l.b16 %v1214
    %v1540 = vunpack.c.h.b16 %v1214
    %v1541 = vunpack.c.l.b16 %v1215
    %v1542 = vunpack.c.h.b16 %v1215
    %v1543 = vunpack.c.l.b16 %v1216
    %v1544 = vunpack.c.h.b16 %v1216
    %v1545 = vunpack.c.l.b16 %v1217
    %v1546 = vunpack.c.h.b16 %v1217
    %v1547 = vunpack.c.l.b16 %v1218
    %v1548 = vunpack.c.h.b16 %v1218
    %v1549 = vunpack.c.l.b16 %v1219
    %v1550 = vunpack.c.h.b16 %v1219
    %v1551 = vunpack.c.l.b16 %v1220
    %v1552 = vunpack.c.h.b16 %v1220
    %v1553 = vunpack.c.l.b16 %v1221
    %v1554 = vunpack.c.h.b16 %v1221
    %v1555 = vunpack.c.l.b16 %v1222
    %v1556 = vunpack.c.h.b16 %v1222
    %v1557 = vunpack.c.l.b16 %v1223
    %v1558 = vunpack.c.h.b16 %v1223
    %v1559 = vunpack.c.l.b16 %v1224
    %v1560 = vunpack.c.h.b16 %v1224
    %v1561 = vunpack.c.l.b16 %v1225
    %v1562 = vunpack.c.h.b16 %v1225
    %v1563 = vunpack.c.l.b16 %v1226
    %v1564 = vunpack.c.h.b16 %v1226
    %v1565 = vunpack.c.l.b16 %v1227
    %v1566 = vunpack.c.h.b16 %v1227
    %v1567 = vunpack.c.l.b16 %v1228
    %v1568 = vunpack.c.h.b16 %v1228
    %v1569 = vunpack.c.l.b16 %v1229
    %v1570 = vunpack.c.h.b16 %v1229
    %v1571 = vunpack.c.l.b16 %v1230
    %v1572 = vunpack.c.h.b16 %v1230
    %v1573 = vunpack.c.l.b16 %v1231
    %v1574 = vunpack.c.h.b16 %v1231
    %v1575 = vunpack.c.l.b16 %v1232
    %v1576 = vunpack.c.h.b16 %v1232
    %v1577 = vunpack.c.l.b16 %v1233
    %v1578 = vunpack.c.h.b16 %v1233
    %v1579 = vunpack.c.l.b16 %v1234
    %v1580 = vunpack.c.h.b16 %v1234
    %v1581 = vunpack.c.l.b16 %v1235
    %v1582 = vunpack.c.h.b16 %v1235
    %v1583 = vunpack.c.l.b16 %v1236
    %v1584 = vunpack.c.h.b16 %v1236
    %v1585 = vunpack.c.l.b16 %v1237
    %v1586 = vunpack.c.h.b16 %v1237
    %v1587 = vunpack.c.l.b16 %v1238
    %v1588 = vunpack.c.h.b16 %v1238
    %v1589 = vunpack.c.l.b16 %v1239
    %v1590 = vunpack.c.h.b16 %v1239
    %v1591 = vunpack.c.l.b16 %v1240
    %v1592 = vunpack.c.h.b16 %v1240
    %v1593 = vunpack.c.l.b16 %v1241
    %v1594 = vunpack.c.h.b16 %v1241
    %v1595 = vunpack.c.l.b16 %v1242
    %v1596 = vunpack.c.h.b16 %v1242
    %v1597 = vunpack.c.l.b16 %v1243
    %v1598 = vunpack.c.h.b16 %v1243
    %v1599 = vunpack.c.l.b16 %v1244
    %v1600 = vunpack.c.h.b16 %v1244
    %v1601 = vunpack.c.l.b16 %v1245
    %v1602 = vunpack.c.h.b16 %v1245
    %v1603 = vunpack.c.l.b16 %v1246
    %v1604 = vunpack.c.h.b16 %v1246
    %v1605 = vunpack.c.l.b16 %v1247
    %v1606 = vunpack.c.h.b16 %v1247
    %v1607 = vunpack.c.l.b16 %v1248
    %v1608 = vunpack.c.h.b16 %v1248
    %v1609 = vunpack.c.l.b16 %v1249
    %v1610 = vunpack.c.h.b16 %v1249
    %v1611 = vunpack.c.l.b16 %v1250
    %v1612 = vunpack.c.h.b16 %v1250
    %v1613 = vunpack.c.l.b16 %v1251
    %v1614 = vunpack.c.h.b16 %v1251
    %v1615 = vunpack.c.l.b16 %v1252
    %v1616 = vunpack.c.h.b16 %v1252
    %v1617 = vunpack.c.l.b16 %v1253
    %v1618 = vunpack.c.h.b16 %v1253
    %v1619 = vunpack.c.l.b16 %v1254
    %v1620 = vunpack.c.h.b16 %v1254
    %v1621 = vunpack.c.l.b16 %v1255
    %v1622 = vunpack.c.h.b16 %v1255
    %v1623 = vunpack.c.l.b16 %v1256
    %v1624 = vunpack.c.h.b16 %v1256
    %v1625 = vunpack.c.l.b16 %v1257
    %v1626 = vunpack.c.h.b16 %v1257
    %v1627 = vunpack.c.l.b16 %v1258
    %v1628 = vunpack.c.h.b16 %v1258
    %v1629 = vunpack.c.l.b16 %v1259
    %v1630 = vunpack.c.h.b16 %v1259
    %v1631 = vunpack.c.l.b16 %v1260
    %v1632 = vunpack.c.h.b16 %v1260
    %v1633 = vunpack.c.l.b16 %v1261
    %v1634 = vunpack.c.h.b16 %v1261
    %v1635 = vunpack.c.l.b16 %v1262
    %v1636 = vunpack.c.h.b16 %v1262
    %v1637 = vunpack.c.l.b16 %v1263
    %v1638 = vunpack.c.h.b16 %v1263
    %v1639 = vunpack.c.l.b16 %v1264
    %v1640 = vunpack.c.h.b16 %v1264
    %v1641 = vunpack.c.l.b16 %v1265
    %v1642 = vunpack.c.h.b16 %v1265
    %v1643 = vunpack.c.l.b16 %v1266
    %v1644 = vunpack.c.h.b16 %v1266
    %v1645 = vunpack.c.l.b16 %v1267
    %v1646 = vunpack.c.h.b16 %v1267
    %v1647 = vunpack.c.l.b16 %v1268
    %v1648 = vunpack.c.h.b16 %v1268
    %v1649 = vunpack.c.l.b16 %v1269
    %v1650 = vunpack.c.h.b16 %v1269
    %v1651 = vunpack.c.l.b16 %v1270
    %v1652 = vunpack.c.h.b16 %v1270
    %v1653 = vunpack.c.l.b16 %v1271
    %v1654 = vunpack.c.h.b16 %v1271
    %v1655 = vunpack.c.l.b16 %v1272
    %v1656 = vunpack.c.h.b16 %v1272
    %v1657 = vunpack.c.l.b16 %v1273
    %v1658 = vunpack.c.h.b16 %v1273
    %v1659 = vunpack.c.l.b16 %v1274
    %v1660 = vunpack.c.h.b16 %v1274
    %v1661 = vunpack.c.l.b16 %v1275
    %v1662 = vunpack.c.h.b16 %v1275
    %v1663 = vunpack.c.l.b16 %v1276
    %v1664 = vunpack.c.h.b16 %v1276
    %v1665 = vunpack.c.l.b16 %v1277
    %v1666 = vunpack.c.h.b16 %v1277
    %v1667 = vunpack.c.l.b16 %v1278
    %v1668 = vunpack.c.h.b16 %v1278
    %v1669 = vunpack.c.l.b16 %v1279
    %v1670 = vunpack.c.h.b16 %v1279
    %v1671 = vunpack.c.l.b16 %v1280
    %v1672 = vunpack.c.h.b16 %v1280
    %v1673 = vunpack.c.l.b16 %v1281
    %v1674 = vunpack.c.h.b16 %v1281
    %v1675 = vunpack.c.l.b16 %v1282
    %v1676 = vunpack.c.h.b16 %v1282
    %v1677 = vunpack.c.l.b16 %v1283
    %v1678 = vunpack.c.h.b16 %v1283
    %v1679 = vunpack.c.l.b16 %v1284
    %v1680 = vunpack.c.h.b16 %v1284
    %v1681 = vpack.c.b16 %v1429, %v1425
    %v1682 = vpack.c.b16 %v1430, %v1426
    %v1683 = vpack.c.b16 %v1431, %v1427
    %v1684 = vpack.c.b16 %v1432, %v1428
    %v1685 = vpack.c.b16 %v1437, %v1433
    %v1686 = vpack.c.b16 %v1438, %v1434
    %v1687 = vpack.c.b16 %v1439, %v1435
    %v1688 = vpack.c.b16 %v1440, %v1436
    %v1689 = vpack.c.b16 %v1445, %v1441
    %v1690 = vpack.c.b16 %v1446, %v1442
    %v1691 = vpack.c.b16 %v1447, %v1443
    %v1692 = vpack.c.b16 %v1448, %v1444
    %v1693 = vpack.c.b16 %v1453, %v1449
    %v1694 = vpack.c.b16 %v1454, %v1450
    %v1695 = vpack.c.b16 %v1455, %v1451
    %v1696 = vpack.c.b16 %v1456, %v1452
    %v1697 = vpack.c.b16 %v1461, %v1457
    %v1698 = vpack.c.b16 %v1462, %v1458
    %v1699 = vpack.c.b16 %v1463, %v1459
    %v1700 = vpack.c.b16 %v1464, %v1460
    %v1701 = vpack.c.b16 %v1469, %v1465
    %v1702 = vpack.c.b16 %v1470, %v1466
    %v1703 = vpack.c.b16 %v1471, %v1467
    %v1704 = vpack.c.b16 %v1472, %v1468
    %v1705 = vpack.c.b16 %v1477, %v1473
    %v1706 = vpack.c.b16 %v1478, %v1474
    %v1707 = vpack.c.b16 %v1479, %v1475
    %v1708 = vpack.c.b16 %v1480, %v1476
    %v1709 = vpack.c.b16 %v1485, %v1481
    %v1710 = vpack.c.b16 %v1486, %v1482
    %v1711 = vpack.c.b16 %v1487, %v1483
    %v1712 = vpack.c.b16 %v1488, %v1484
    %v1713 = vpack.c.b16 %v1493, %v1489
    %v1714 = vpack.c.b16 %v1494, %v1490
    %v1715 = vpack.c.b16 %v1495, %v1491
    %v1716 = vpack.c.b16 %v1496, %v1492
    %v1717 = vpack.c.b16 %v1501, %v1497
    %v1718 = vpack.c.b16 %v1502, %v1498
    %v1719 = vpack.c.b16 %v1503, %v1499
    %v1720 = vpack.c.b16 %v1504, %v1500
    %v1721 = vpack.c.b16 %v1509, %v1505
    %v1722 = vpack.c.b16 %v1510, %v1506
    %v1723 = vpack.c.b16 %v1511, %v1507
    %v1724 = vpack.c.b16 %v1512, %v1508
    %v1725 = vpack.c.b16 %v1517, %v1513
    %v1726 = vpack.c.b16 %v1518, %v1514
    %v1727 = vpack.c.b16 %v1519, %v1515
    %v1728 = vpack.c.b16 %v1520, %v1516
    %v1729 = vpack.c.b16 %v1525, %v1521
    %v1730 = vpack.c.b16 %v1526, %v1522
    %v1731 = vpack.c.b16 %v1527, %v1523
    %v1732 = vpack.c.b16 %v1528, %v1524
    %v1733 = vpack.c.b16 %v1533, %v1529
    %v1734 = vpack.c.b16 %v1534, %v1530
    %v1735 = vpack.c.b16 %v1535, %v1531
    %v1736 = vpack.c.b16 %v1536, %v1532
    %v1737 = vpack.c.b16 %v1541, %v1537
    %v1738 = vpack.c.b16 %v1542, %v1538
    %v1739 = vpack.c.b16 %v1543, %v1539
    %v1740 = vpack.c.b16 %v1544, %v1540
    %v1741 = vpack.c.b16 %v1549, %v1545
    %v1742 = vpack.c.b16 %v1550, %v1546
    %v1743 = vpack.c.b16 %v1551, %v1547
    %v1744 = vpack.c.b16 %v1552, %v1548
    %v1745 = vpack.c.b16 %v1557, %v1553
    %v1746 = vpack.c.b16 %v1558, %v1554
    %v1747 = vpack.c.b16 %v1559, %v1555
    %v1748 = vpack.c.b16 %v1560, %v1556
    %v1749 = vpack.c.b16 %v1565, %v1561
    %v1750 = vpack.c.b16 %v1566, %v1562
    %v1751 = vpack.c.b16 %v1567, %v1563
    %v1752 = vpack.c.b16 %v1568, %v1564
    %v1753 = vpack.c.b16 %v1573, %v1569
    %v1754 = vpack.c.b16 %v1574, %v1570
    %v1755 = vpack.c.b16 %v1575, %v1571
    %v1756 = vpack.c.b16 %v1576, %v1572
    %v1757 = vpack.c.b16 %v1581, %v1577
    %v1758 = vpack.c.b16 %v1582, %v1578
    %v1759 = vpack.c.b16 %v1583, %v1579
    %v1760 = vpack.c.b16 %v1584, %v1580
    %v1761 = vpack.c.b16 %v1589, %v1585
    %v1762 = vpack.c.b16 %v1590, %v1586
    %v1763 = vpack.c.b16 %v1591, %v1587
    %v1764 = vpack.c.b16 %v1592, %v1588
    %v1765 = vpack.c.b16 %v1597, %v1593
    %v1766 = vpack.c.b16 %v1598, %v1594
    %v1767 = vpack.c.b16 %v1599, %v1595
    %v1768 = vpack.c.b16 %v1600, %v1596
    %v1769 = vpack.c.b16 %v1605, %v1601
    %v1770 = vpack.c.b16 %v1606, %v1602
    %v1771 = vpack.c.b16 %v1607, %v1603
    %v1772 = vpack.c.b16 %v1608, %v1604
    %v1773 = vpack.c.b16 %v1613, %v1609
    %v1774 = vpack.c.b16 %v1614, %v1610
    %v1775 = vpack.c.b16 %v1615, %v1611
    %v1776 = vpack.c.b16 %v1616, %v1612
    %v1777 = vpack.c.b16 %v1621, %v1617
    %v1778 = vpack.c.b16 %v1622, %v1618
    %v1779 = vpack.c.b16 %v1623, %v1619
    %v1780 = vpack.c.b16 %v1624, %v1620
    %v1781 = vpack.c.b16 %v1629, %v1625
    %v1782 = vpack.c.b16 %v1630, %v1626
    %v1783 = vpack.c.b16 %v1631, %v1627
    %v1784 = vpack.c.b16 %v1632, %v1628
    %v1785 = vpack.c.b16 %v1637, %v1633
    %v1786 = vpack.c.b16 %v1638, %v1634
    %v1787 = vpack.c.b16 %v1639, %v1635
    %v1788 = vpack.c.b16 %v1640, %v1636
    %v1789 = vpack.c.b16 %v1645, %v1641
    %v1790 = vpack.c.b16 %v1646, %v1642
    %v1791 = vpack.c.b16 %v1647, %v1643
    %v1792 = vpack.c.b16 %v1648, %v1644
    %v1793 = vpack.c.b16 %v1653, %v1649
    %v1794 = vpack.c.b16 %v1654, %v1650
    %v1795 = vpack.c.b16 %v1655, %v1651
    %v1796 = vpack.c.b16 %v1656, %v1652
    %v1797 = vpack.c.b16 %v1661, %v1657
    %v1798 = vpack.c.b16 %v1662, %v1658
    %v1799 = vpack.c.b16 %v1663, %v1659
    %v1800 = vpack.c.b16 %v1664, %v1660
    %v1801 = vpack.c.b16 %v1669, %v1665
    %v1802 = vpack.c.b16 %v1670, %v1666
    %v1803 = vpack.c.b16 %v1671, %v1667
    %v1804 = vpack.c.b16 %v1672, %v1668
    %v1805 = vpack.c.b16 %v1677, %v1673
    %v1806 = vpack.c.b16 %v1678, %v1674
    %v1807 = vpack.c.b16 %v1679, %v1675
    %v1808 = vpack.c.b16 %v1680, %v1676
    %1937 = vmatpush.bf16.msra.mxu0 %v1709
    %1938 = vmatpush.bf16.msra.mxu0 %v1705
    %1939 = vmatpush.bf16.msra.mxu0 %v1701
    %1940 = vmatpush.bf16.msra.mxu0 %v1697
    %1941 = vmatpush.bf16.msra.mxu0 %v1693
    %1942 = vmatpush.bf16.msra.mxu0 %v1689
    %1943 = vmatpush.bf16.msra.mxu0 %v1685
    %1944 = vmatpush.bf16.msra.mxu0 %v1681
    %1945 = vmatmul.bf16.gmra.mxu0 %v1153
    %v1946 = vpop.f32.mrf.mxu0
    %v1947 = vadd.f32 %v1293, %v1946
    %v1948 = vpop.f32.mrf.mxu0
    %1949 = vdwg.mxu0
    %1950 = vmatpush.bf16.msra.mxu0 %v1741
    %1951 = vmatpush.bf16.msra.mxu0 %v1737
    %1952 = vmatpush.bf16.msra.mxu0 %v1733
    %1953 = vmatpush.bf16.msra.mxu0 %v1729
    %1954 = vmatpush.bf16.msra.mxu0 %v1725
    %1955 = vmatpush.bf16.msra.mxu0 %v1721
    %1956 = vmatpush.bf16.msra.mxu0 %v1717
    %1957 = vmatpush.bf16.msra.mxu0 %v1713
    %1958 = vmatmul.bf16.gmra.mxu0 %v1154
    %v1959 = vpop.f32.mrf.mxu0
    %v1960 = vadd.f32 %v1947, %v1959
    %v1961 = vpop.f32.mrf.mxu0
    %1962 = vdwg.mxu0
    %1963 = vmatpush.bf16.msra.mxu0 %v1773
    %1964 = vmatpush.bf16.msra.mxu0 %v1769
    %1965 = vmatpush.bf16.msra.mxu0 %v1765
    %1966 = vmatpush.bf16.msra.mxu0 %v1761
    %1967 = vmatpush.bf16.msra.mxu0 %v1757
    %1968 = vmatpush.bf16.msra.mxu0 %v1753
    %1969 = vmatpush.bf16.msra.mxu0 %v1749
    %1970 = vmatpush.bf16.msra.mxu0 %v1745
    %1971 = vmatmul.bf16.gmra.mxu0 %v1155
    %v1972 = vpop.f32.mrf.mxu0
    %v1973 = vadd.f32 %v1960, %v1972
    %v1974 = vpop.f32.mrf.mxu0
    %1975 = vdwg.mxu0
    %1976 = vmatpush.bf16.msra.mxu0 %v1805
    %1977 = vmatpush.bf16.msra.mxu0 %v1801
    %1978 = vmatpush.bf16.msra.mxu0 %v1797
    %1979 = vmatpush.bf16.msra.mxu0 %v1793
    %1980 = vmatpush.bf16.msra.mxu0 %v1789
    %1981 = vmatpush.bf16.msra.mxu0 %v1785
    %1982 = vmatpush.bf16.msra.mxu0 %v1781
    %1983 = vmatpush.bf16.msra.mxu0 %v1777
    %1984 = vmatmul.bf16.gmra.mxu0 %v1156
    %v1985 = vpop.f32.mrf.mxu0
    %v1986 = vadd.f32 %v1973, %v1985
    %v1987 = vpop.f32.mrf.mxu0
    %1988 = vdwg.mxu0
    %1989 = vmatpush.bf16.msra.mxu0 %v1710
    %1990 = vmatpush.bf16.msra.mxu0 %v1706
    %1991 = vmatpush.bf16.msra.mxu0 %v1702
    %1992 = vmatpush.bf16.msra.mxu0 %v1698
    %1993 = vmatpush.bf16.msra.mxu0 %v1694
    %1994 = vmatpush.bf16.msra.mxu0 %v1690
    %1995 = vmatpush.bf16.msra.mxu0 %v1686
    %1996 = vmatpush.bf16.msra.mxu0 %v1682
    %1997 = vmatmul.bf16.gmra.mxu0 %v1153
    %v1998 = vpop.f32.mrf.mxu0
    %v1999 = vadd.f32 %v1294, %v1998
    %v2000 = vpop.f32.mrf.mxu0
    %2001 = vdwg.mxu0
    %2002 = vmatpush.bf16.msra.mxu0 %v1742
    %2003 = vmatpush.bf16.msra.mxu0 %v1738
    %2004 = vmatpush.bf16.msra.mxu0 %v1734
    %2005 = vmatpush.bf16.msra.mxu0 %v1730
    %2006 = vmatpush.bf16.msra.mxu0 %v1726
    %2007 = vmatpush.bf16.msra.mxu0 %v1722
    %2008 = vmatpush.bf16.msra.mxu0 %v1718
    %2009 = vmatpush.bf16.msra.mxu0 %v1714
    %2010 = vmatmul.bf16.gmra.mxu0 %v1154
    %v2011 = vpop.f32.mrf.mxu0
    %v2012 = vadd.f32 %v1999, %v2011
    %v2013 = vpop.f32.mrf.mxu0
    %2014 = vdwg.mxu0
    %2015 = vmatpush.bf16.msra.mxu0 %v1774
    %2016 = vmatpush.bf16.msra.mxu0 %v1770
    %2017 = vmatpush.bf16.msra.mxu0 %v1766
    %2018 = vmatpush.bf16.msra.mxu0 %v1762
    %2019 = vmatpush.bf16.msra.mxu0 %v1758
    %2020 = vmatpush.bf16.msra.mxu0 %v1754
    %2021 = vmatpush.bf16.msra.mxu0 %v1750
    %2022 = vmatpush.bf16.msra.mxu0 %v1746
    %2023 = vmatmul.bf16.gmra.mxu0 %v1155
    %v2024 = vpop.f32.mrf.mxu0
    %v2025 = vadd.f32 %v2012, %v2024
    %v2026 = vpop.f32.mrf.mxu0
    %2027 = vdwg.mxu0
    %2028 = vmatpush.bf16.msra.mxu0 %v1806
    %2029 = vmatpush.bf16.msra.mxu0 %v1802
    %2030 = vmatpush.bf16.msra.mxu0 %v1798
    %2031 = vmatpush.bf16.msra.mxu0 %v1794
    %2032 = vmatpush.bf16.msra.mxu0 %v1790
    %2033 = vmatpush.bf16.msra.mxu0 %v1786
    %2034 = vmatpush.bf16.msra.mxu0 %v1782
    %2035 = vmatpush.bf16.msra.mxu0 %v1778
    %2036 = vmatmul.bf16.gmra.mxu0 %v1156
    %v2037 = vpop.f32.mrf.mxu0
    %v2038 = vadd.f32 %v2025, %v2037
    %v2039 = vpop.f32.mrf.mxu0
    %2040 = vdwg.mxu0
    %2041 = vmatpush.bf16.msra.mxu0 %v1711
    %2042 = vmatpush.bf16.msra.mxu0 %v1707
    %2043 = vmatpush.bf16.msra.mxu0 %v1703
    %2044 = vmatpush.bf16.msra.mxu0 %v1699
    %2045 = vmatpush.bf16.msra.mxu0 %v1695
    %2046 = vmatpush.bf16.msra.mxu0 %v1691
    %2047 = vmatpush.bf16.msra.mxu0 %v1687
    %2048 = vmatpush.bf16.msra.mxu0 %v1683
    %2049 = vmatmul.bf16.gmra.mxu0 %v1153
    %v2050 = vpop.f32.mrf.mxu0
    %v2051 = vadd.f32 %v1295, %v2050
    %v2052 = vpop.f32.mrf.mxu0
    %2053 = vdwg.mxu0
    %2054 = vmatpush.bf16.msra.mxu0 %v1743
    %2055 = vmatpush.bf16.msra.mxu0 %v1739
    %2056 = vmatpush.bf16.msra.mxu0 %v1735
    %2057 = vmatpush.bf16.msra.mxu0 %v1731
    %2058 = vmatpush.bf16.msra.mxu0 %v1727
    %2059 = vmatpush.bf16.msra.mxu0 %v1723
    %2060 = vmatpush.bf16.msra.mxu0 %v1719
    %2061 = vmatpush.bf16.msra.mxu0 %v1715
    %2062 = vmatmul.bf16.gmra.mxu0 %v1154
    %v2063 = vpop.f32.mrf.mxu0
    %v2064 = vadd.f32 %v2051, %v2063
    %v2065 = vpop.f32.mrf.mxu0
    %2066 = vdwg.mxu0
    %2067 = vmatpush.bf16.msra.mxu0 %v1775
    %2068 = vmatpush.bf16.msra.mxu0 %v1771
    %2069 = vmatpush.bf16.msra.mxu0 %v1767
    %2070 = vmatpush.bf16.msra.mxu0 %v1763
    %2071 = vmatpush.bf16.msra.mxu0 %v1759
    %2072 = vmatpush.bf16.msra.mxu0 %v1755
    %2073 = vmatpush.bf16.msra.mxu0 %v1751
    %2074 = vmatpush.bf16.msra.mxu0 %v1747
    %2075 = vmatmul.bf16.gmra.mxu0 %v1155
    %v2076 = vpop.f32.mrf.mxu0
    %v2077 = vadd.f32 %v2064, %v2076
    %v2078 = vpop.f32.mrf.mxu0
    %2079 = vdwg.mxu0
    %2080 = vmatpush.bf16.msra.mxu0 %v1807
    %2081 = vmatpush.bf16.msra.mxu0 %v1803
    %2082 = vmatpush.bf16.msra.mxu0 %v1799
    %2083 = vmatpush.bf16.msra.mxu0 %v1795
    %2084 = vmatpush.bf16.msra.mxu0 %v1791
    %2085 = vmatpush.bf16.msra.mxu0 %v1787
    %2086 = vmatpush.bf16.msra.mxu0 %v1783
    %2087 = vmatpush.bf16.msra.mxu0 %v1779
    %2088 = vmatmul.bf16.gmra.mxu0 %v1156
    %v2089 = vpop.f32.mrf.mxu0
    %v2090 = vadd.f32 %v2077, %v2089
    %v2091 = vpop.f32.mrf.mxu0
    %2092 = vdwg.mxu0
    %2093 = vmatpush.bf16.msra.mxu0 %v1712
    %2094 = vmatpush.bf16.msra.mxu0 %v1708
    %2095 = vmatpush.bf16.msra.mxu0 %v1704
    %2096 = vmatpush.bf16.msra.mxu0 %v1700
    %2097 = vmatpush.bf16.msra.mxu0 %v1696
    %2098 = vmatpush.bf16.msra.mxu0 %v1692
    %2099 = vmatpush.bf16.msra.mxu0 %v1688
    %2100 = vmatpush.bf16.msra.mxu0 %v1684
    %2101 = vmatmul.bf16.gmra.mxu0 %v1153
    %v2102 = vpop.f32.mrf.mxu0
    %v2103 = vadd.f32 %v1296, %v2102
    %v2104 = vpop.f32.mrf.mxu0
    %2105 = vdwg.mxu0
    %2106 = vmatpush.bf16.msra.mxu0 %v1744
    %2107 = vmatpush.bf16.msra.mxu0 %v1740
    %2108 = vmatpush.bf16.msra.mxu0 %v1736
    %2109 = vmatpush.bf16.msra.mxu0 %v1732
    %2110 = vmatpush.bf16.msra.mxu0 %v1728
    %2111 = vmatpush.bf16.msra.mxu0 %v1724
    %2112 = vmatpush.bf16.msra.mxu0 %v1720
    %2113 = vmatpush.bf16.msra.mxu0 %v1716
    %2114 = vmatmul.bf16.gmra.mxu0 %v1154
    %v2115 = vpop.f32.mrf.mxu0
    %v2116 = vadd.f32 %v2103, %v2115
    %v2117 = vpop.f32.mrf.mxu0
    %2118 = vdwg.mxu0
    %2119 = vmatpush.bf16.msra.mxu0 %v1776
    %2120 = vmatpush.bf16.msra.mxu0 %v1772
    %2121 = vmatpush.bf16.msra.mxu0 %v1768
    %2122 = vmatpush.bf16.msra.mxu0 %v1764
    %2123 = vmatpush.bf16.msra.mxu0 %v1760
    %2124 = vmatpush.bf16.msra.mxu0 %v1756
    %2125 = vmatpush.bf16.msra.mxu0 %v1752
    %2126 = vmatpush.bf16.msra.mxu0 %v1748
    %2127 = vmatmul.bf16.gmra.mxu0 %v1155
    %v2128 = vpop.f32.mrf.mxu0
    %v2129 = vadd.f32 %v2116, %v2128
    %v2130 = vpop.f32.mrf.mxu0
    %2131 = vdwg.mxu0
    %2132 = vmatpush.bf16.msra.mxu0 %v1808
    %2133 = vmatpush.bf16.msra.mxu0 %v1804
    %2134 = vmatpush.bf16.msra.mxu0 %v1800
    %2135 = vmatpush.bf16.msra.mxu0 %v1796
    %2136 = vmatpush.bf16.msra.mxu0 %v1792
    %2137 = vmatpush.bf16.msra.mxu0 %v1788
    %2138 = vmatpush.bf16.msra.mxu0 %v1784
    %2139 = vmatpush.bf16.msra.mxu0 %v1780
    %2140 = vmatmul.bf16.gmra.mxu0 %v1156
    %v2141 = vpop.f32.mrf.mxu0
    %v2142 = vadd.f32 %v2129, %v2141
    %v2143 = vpop.f32.mrf.mxu0
    %2144 = vdwg.mxu0
    %v2145 = vmax.f32 %v1986, 0.0
    %v2146 = vmax.f32 %v2038, 0.0
    %v2147 = vmax.f32 %v2090, 0.0
    %v2148 = vmax.f32 %v2142, 0.0
    %v2149 = vpack.c.bf16 %v2145, %v2145
    %v2150 = vpack.c.bf16 %v2146, %v2146
    %v2151 = vpack.c.bf16 %v2147, %v2147
    %v2152 = vpack.c.bf16 %v2148, %v2148
    %v2153 = vld [vmem:[#allocation7] sm:$0xf]
    %v2154 = vld [vmem:[#allocation7 + $0x4] sm:$0xf]
    %v2155 = vld [vmem:[#allocation7 + $0x8] sm:$0xf]
    %v2156 = vld [vmem:[#allocation7 + $0xc] sm:$0xf]
    %v2157 = vld [vmem:[#allocation7 + $0x10] sm:$0xf]
    %v2158 = vld [vmem:[#allocation7 + $0x14] sm:$0xf]
    %v2159 = vld [vmem:[#allocation7 + $0x18] sm:$0xf]
    %v2160 = vld [vmem:[#allocation7 + $0x1c] sm:$0xf]
    %v2161 = vld [vmem:[#allocation7 + $0x20] sm:$0xf]
    %v2162 = vld [vmem:[#allocation7 + $0x24] sm:$0xf]
    %v2163 = vld [vmem:[#allocation7 + $0x28] sm:$0xf]
    %v2164 = vld [vmem:[#allocation7 + $0x2c] sm:$0xf]
    %v2165 = vld [vmem:[#allocation7 + $0x30] sm:$0xf]
    %v2166 = vld [vmem:[#allocation7 + $0x34] sm:$0xf]
    %v2167 = vld [vmem:[#allocation7 + $0x38] sm:$0xf]
    %v2168 = vld [vmem:[#allocation7 + $0x3c] sm:$0xf]
    %v2169 = vld [vmem:[#allocation7 + $0x40] sm:$0xf]
    %v2170 = vld [vmem:[#allocation7 + $0x44] sm:$0xf]
    %v2171 = vld [vmem:[#allocation7 + $0x48] sm:$0xf]
    %v2172 = vld [vmem:[#allocation7 + $0x4c] sm:$0xf]
    %v2173 = vld [vmem:[#allocation7 + $0x50] sm:$0xf]
    %v2174 = vld [vmem:[#allocation7 + $0x54] sm:$0xf]
    %v2175 = vld [vmem:[#allocation7 + $0x58] sm:$0xf]
    %v2176 = vld [vmem:[#allocation7 + $0x5c] sm:$0xf]
    %v2177 = vld [vmem:[#allocation7 + $0x60] sm:$0xf]
    %v2178 = vld [vmem:[#allocation7 + $0x64] sm:$0xf]
    %v2179 = vld [vmem:[#allocation7 + $0x68] sm:$0xf]
    %v2180 = vld [vmem:[#allocation7 + $0x6c] sm:$0xf]
    %v2181 = vld [vmem:[#allocation7 + $0x70] sm:$0xf]
    %v2182 = vld [vmem:[#allocation7 + $0x74] sm:$0xf]
    %v2183 = vld [vmem:[#allocation7 + $0x78] sm:$0xf]
    %v2184 = vld [vmem:[#allocation7 + $0x7c] sm:$0xf]
    %v2185 = vld [vmem:[#allocation7 + $0x80] sm:$0xf]
    %v2186 = vld [vmem:[#allocation7 + $0x84] sm:$0xf]
    %v2187 = vld [vmem:[#allocation7 + $0x88] sm:$0xf]
    %v2188 = vld [vmem:[#allocation7 + $0x8c] sm:$0xf]
    %v2189 = vld [vmem:[#allocation7 + $0x90] sm:$0xf]
    %v2190 = vld [vmem:[#allocation7 + $0x94] sm:$0xf]
    %v2191 = vld [vmem:[#allocation7 + $0x98] sm:$0xf]
    %v2192 = vld [vmem:[#allocation7 + $0x9c] sm:$0xf]
    %v2193 = vld [vmem:[#allocation7 + $0xa0] sm:$0xf]
    %v2194 = vld [vmem:[#allocation7 + $0xa4] sm:$0xf]
    %v2195 = vld [vmem:[#allocation7 + $0xa8] sm:$0xf]
    %v2196 = vld [vmem:[#allocation7 + $0xac] sm:$0xf]
    %v2197 = vld [vmem:[#allocation7 + $0xb0] sm:$0xf]
    %v2198 = vld [vmem:[#allocation7 + $0xb4] sm:$0xf]
    %v2199 = vld [vmem:[#allocation7 + $0xb8] sm:$0xf]
    %v2200 = vld [vmem:[#allocation7 + $0xbc] sm:$0xf]
    %v2201 = vld [vmem:[#allocation7 + $0xc0] sm:$0xf]
    %v2202 = vld [vmem:[#allocation7 + $0xc4] sm:$0xf]
    %v2203 = vld [vmem:[#allocation7 + $0xc8] sm:$0xf]
    %v2204 = vld [vmem:[#allocation7 + $0xcc] sm:$0xf]
    %v2205 = vld [vmem:[#allocation7 + $0xd0] sm:$0xf]
    %v2206 = vld [vmem:[#allocation7 + $0xd4] sm:$0xf]
    %v2207 = vld [vmem:[#allocation7 + $0xd8] sm:$0xf]
    %v2208 = vld [vmem:[#allocation7 + $0xdc] sm:$0xf]
    %v2209 = vld [vmem:[#allocation7 + $0xe0] sm:$0xf]
    %v2210 = vld [vmem:[#allocation7 + $0xe4] sm:$0xf]
    %v2211 = vld [vmem:[#allocation7 + $0xe8] sm:$0xf]
    %v2212 = vld [vmem:[#allocation7 + $0xec] sm:$0xf]
    %v2213 = vld [vmem:[#allocation7 + $0xf0] sm:$0xf]
    %v2214 = vld [vmem:[#allocation7 + $0xf4] sm:$0xf]
    %v2215 = vld [vmem:[#allocation7 + $0xf8] sm:$0xf]
    %v2216 = vld [vmem:[#allocation7 + $0xfc] sm:$0xf]
    %v2217 = vperm.slane %v87, 3
    %v2282 = vunpack.c.l.b16 %v2153
    %v2283 = vunpack.c.l.b16 %v2154
    %v2284 = vunpack.c.l.b16 %v2155
    %v2285 = vunpack.c.l.b16 %v2156
    %v2286 = vunpack.c.l.b16 %v2157
    %v2287 = vunpack.c.l.b16 %v2158
    %v2288 = vunpack.c.l.b16 %v2159
    %v2289 = vunpack.c.l.b16 %v2160
    %v2290 = vunpack.c.l.b16 %v2161
    %v2291 = vunpack.c.l.b16 %v2162
    %v2292 = vunpack.c.l.b16 %v2163
    %v2293 = vunpack.c.l.b16 %v2164
    %v2294 = vunpack.c.l.b16 %v2165
    %v2295 = vunpack.c.l.b16 %v2166
    %v2296 = vunpack.c.l.b16 %v2167
    %v2297 = vunpack.c.l.b16 %v2168
    %v2298 = vunpack.c.l.b16 %v2169
    %v2299 = vunpack.c.l.b16 %v2170
    %v2300 = vunpack.c.l.b16 %v2171
    %v2301 = vunpack.c.l.b16 %v2172
    %v2302 = vunpack.c.l.b16 %v2173
    %v2303 = vunpack.c.l.b16 %v2174
    %v2304 = vunpack.c.l.b16 %v2175
    %v2305 = vunpack.c.l.b16 %v2176
    %v2306 = vunpack.c.l.b16 %v2177
    %v2307 = vunpack.c.l.b16 %v2178
    %v2308 = vunpack.c.l.b16 %v2179
    %v2309 = vunpack.c.l.b16 %v2180
    %v2310 = vunpack.c.l.b16 %v2181
    %v2311 = vunpack.c.l.b16 %v2182
    %v2312 = vunpack.c.l.b16 %v2183
    %v2313 = vunpack.c.l.b16 %v2184
    %v2314 = vunpack.c.l.b16 %v2185
    %v2315 = vunpack.c.l.b16 %v2186
    %v2316 = vunpack.c.l.b16 %v2187
    %v2317 = vunpack.c.l.b16 %v2188
    %v2318 = vunpack.c.l.b16 %v2189
    %v2319 = vunpack.c.l.b16 %v2190
    %v2320 = vunpack.c.l.b16 %v2191
    %v2321 = vunpack.c.l.b16 %v2192
    %v2322 = vunpack.c.l.b16 %v2193
    %v2323 = vunpack.c.l.b16 %v2194
    %v2324 = vunpack.c.l.b16 %v2195
    %v2325 = vunpack.c.l.b16 %v2196
    %v2326 = vunpack.c.l.b16 %v2197
    %v2327 = vunpack.c.l.b16 %v2198
    %v2328 = vunpack.c.l.b16 %v2199
    %v2329 = vunpack.c.l.b16 %v2200
    %v2330 = vunpack.c.l.b16 %v2201
    %v2331 = vunpack.c.l.b16 %v2202
    %v2332 = vunpack.c.l.b16 %v2203
    %v2333 = vunpack.c.l.b16 %v2204
    %v2334 = vunpack.c.l.b16 %v2205
    %v2335 = vunpack.c.l.b16 %v2206
    %v2336 = vunpack.c.l.b16 %v2207
    %v2337 = vunpack.c.l.b16 %v2208
    %v2338 = vunpack.c.l.b16 %v2209
    %v2339 = vunpack.c.l.b16 %v2210
    %v2340 = vunpack.c.l.b16 %v2211
    %v2341 = vunpack.c.l.b16 %v2212
    %v2342 = vunpack.c.l.b16 %v2213
    %v2343 = vunpack.c.l.b16 %v2214
    %v2344 = vunpack.c.l.b16 %v2215
    %v2345 = vunpack.c.l.b16 %v2216
    %v2346 = vpack.c.b16 %v2283, %v2282
    %v2347 = vpack.c.b16 %v2285, %v2284
    %v2348 = vpack.c.b16 %v2287, %v2286
    %v2349 = vpack.c.b16 %v2289, %v2288
    %v2350 = vpack.c.b16 %v2291, %v2290
    %v2351 = vpack.c.b16 %v2293, %v2292
    %v2352 = vpack.c.b16 %v2295, %v2294
    %v2353 = vpack.c.b16 %v2297, %v2296
    %v2354 = vpack.c.b16 %v2299, %v2298
    %v2355 = vpack.c.b16 %v2301, %v2300
    %v2356 = vpack.c.b16 %v2303, %v2302
    %v2357 = vpack.c.b16 %v2305, %v2304
    %v2358 = vpack.c.b16 %v2307, %v2306
    %v2359 = vpack.c.b16 %v2309, %v2308
    %v2360 = vpack.c.b16 %v2311, %v2310
    %v2361 = vpack.c.b16 %v2313, %v2312
    %v2362 = vpack.c.b16 %v2315, %v2314
    %v2363 = vpack.c.b16 %v2317, %v2316
    %v2364 = vpack.c.b16 %v2319, %v2318
    %v2365 = vpack.c.b16 %v2321, %v2320
    %v2366 = vpack.c.b16 %v2323, %v2322
    %v2367 = vpack.c.b16 %v2325, %v2324
    %v2368 = vpack.c.b16 %v2327, %v2326
    %v2369 = vpack.c.b16 %v2329, %v2328
    %v2370 = vpack.c.b16 %v2331, %v2330
    %v2371 = vpack.c.b16 %v2333, %v2332
    %v2372 = vpack.c.b16 %v2335, %v2334
    %v2373 = vpack.c.b16 %v2337, %v2336
    %v2374 = vpack.c.b16 %v2339, %v2338
    %v2375 = vpack.c.b16 %v2341, %v2340
    %v2376 = vpack.c.b16 %v2343, %v2342
    %v2377 = vpack.c.b16 %v2345, %v2344
    %2410 = vmatpush.bf16.msra.mxu0 %v2353
    %2411 = vmatpush.bf16.msra.mxu0 %v2352
    %2412 = vmatpush.bf16.msra.mxu0 %v2351
    %2413 = vmatpush.bf16.msra.mxu0 %v2350
    %2414 = vmatpush.bf16.msra.mxu0 %v2349
    %2415 = vmatpush.bf16.msra.mxu0 %v2348
    %2416 = vmatpush.bf16.msra.mxu0 %v2347
    %2417 = vmatpush.bf16.msra.mxu0 %v2346
    %2418 = vmatmul.bf16.gmra.mxu0 %v2149
    %v2419 = vpop.f32.mrf.mxu0
    %v2420 = vadd.f32 %v2217, %v2419
    %v2421 = vpop.f32.mrf.mxu0
    %2422 = vdwg.mxu0
    %2423 = vmatpush.bf16.msra.mxu0 %v2361
    %2424 = vmatpush.bf16.msra.mxu0 %v2360
    %2425 = vmatpush.bf16.msra.mxu0 %v2359
    %2426 = vmatpush.bf16.msra.mxu0 %v2358
    %2427 = vmatpush.bf16.msra.mxu0 %v2357
    %2428 = vmatpush.bf16.msra.mxu0 %v2356
    %2429 = vmatpush.bf16.msra.mxu0 %v2355
    %2430 = vmatpush.bf16.msra.mxu0 %v2354
    %2431 = vmatmul.bf16.gmra.mxu0 %v2150
    %v2432 = vpop.f32.mrf.mxu0
    %v2433 = vadd.f32 %v2420, %v2432
    %v2434 = vpop.f32.mrf.mxu0
    %2435 = vdwg.mxu0
    %2436 = vmatpush.bf16.msra.mxu0 %v2369
    %2437 = vmatpush.bf16.msra.mxu0 %v2368
    %2438 = vmatpush.bf16.msra.mxu0 %v2367
    %2439 = vmatpush.bf16.msra.mxu0 %v2366
    %2440 = vmatpush.bf16.msra.mxu0 %v2365
    %2441 = vmatpush.bf16.msra.mxu0 %v2364
    %2442 = vmatpush.bf16.msra.mxu0 %v2363
    %2443 = vmatpush.bf16.msra.mxu0 %v2362
    %2444 = vmatmul.bf16.gmra.mxu0 %v2151
    %v2445 = vpop.f32.mrf.mxu0
    %v2446 = vadd.f32 %v2433, %v2445
    %v2447 = vpop.f32.mrf.mxu0
    %2448 = vdwg.mxu0
    %2449 = vmatpush.bf16.msra.mxu0 %v2377
    %2450 = vmatpush.bf16.msra.mxu0 %v2376
    %2451 = vmatpush.bf16.msra.mxu0 %v2375
    %2452 = vmatpush.bf16.msra.mxu0 %v2374
    %2453 = vmatpush.bf16.msra.mxu0 %v2373
    %2454 = vmatpush.bf16.msra.mxu0 %v2372
    %2455 = vmatpush.bf16.msra.mxu0 %v2371
    %2456 = vmatpush.bf16.msra.mxu0 %v2370
    %2457 = vmatmul.bf16.gmra.mxu0 %v2152
    %v2458 = vpop.f32.mrf.mxu0
    %v2459 = vadd.f32 %v2446, %v2458
    %v2460 = vpop.f32.mrf.mxu0
    %2461 = vdwg.mxu0
    %2462 = vst [vmem:[#allocation10] sm:$0xff] %v2459
    // Predicated region
    $region42: #{tpu_custom_call.1} parent=1 // pred_check
      _
    $region43: #{tpu_custom_call.1} parent=1 // pred_check_branch
      %2464 = sbr.rel (0) target = $region45
    $region44: #{tpu_custom_call.1} parent=1 // pred_region
      %2466 = vsyncadd [#allocation4], 0
      %s2468 = sshll.u32 [#allocation10], 4
      %s2469 = int_to_ptr.vmem [resolvable:$true] %s2468
      %s2470 = sshll.u32 %s6, 4
      %s2471 = int_to_ptr.hbm [resolvable:$true] %s2470
      %2473 = dma.vmem_to_hbm [thread:$0]  %s2469, 128, %s2471, [#allocation4]
    $region45: #{tpu_custom_call.1} parent=1 // pred_fallthru
      _
    // Predicated region
    $region46: #{tpu_custom_call.1} parent=1 // pred_check
      _
    $region47: #{tpu_custom_call.1} parent=1 // pred_check_branch
      %2475 = sbr.rel (0) target = $region49
    $region48: #{tpu_custom_call.1} parent=1 // pred_region
      %2477 = dma.done [#allocation4], 128
    $region49: #{tpu_custom_call.1} parent=1 // pred_fallthru
      _
    %2478 = vsyncpa [#allocation3], 1
    %2479 = vsyncpa [#allocation6], 1
    %2480 = vsyncpa [#allocation9], 1
    %2481 = vsyncpa [#allocation4], 1

</llo_original>
